<compile_context>
chip_gen: v6e
topology: v6e:2x2x1
jax: 0.10.0
libtpu: 0.0.40
codegen_flags: <defaults>
</compile_context>

<pallas_src>
import functools

import jax
import jax.numpy as jnp
from jax import lax
from jax.experimental import pallas as pl
from jax.experimental.pallas import tpu as pltpu


def _sum_all(x):
    """Reduce a 2-D array to shape (1, 1): lane reduce, then sublane reduce."""
    return jnp.sum(jnp.sum(x, axis=1, keepdims=True), axis=0, keepdims=True)


def _crf_kernel(T, K, Fp, bt,
                seq_ref,      # SMEM (B_pad*T*Fp,) int32  flattened feature indices
                tags_ref,     # VMEM (T, bt, 1)  int32    gold tags (time-major)
                mask_ref,     # VMEM (T, bt, 1)  f32      sequence mask
                last_ref,     # VMEM (bt, 1)     int32    tag at last unmasked step
                bvalid_ref,   # VMEM (bt, 1)     f32      1.0 for real batch rows
                emb_ref,      # VMEM (V, K)      f32      embedding table
                start_ref,    # VMEM (1, K)      f32      CRF start transitions
                end_ref,      # VMEM (1, K)      f32      CRF end transitions
                transT_ref,   # VMEM (K, K)      f32      CRF transitions, transposed
                out_ref):     # VMEM (1, 1, 1)   f32      per-tile sum of log-likelihoods
    b0 = pl.program_id(0) * bt                       # global batch offset of this tile

    start_row = start_ref[...]                       # (1, K)
    end_row = end_ref[...]                           # (1, K)
    transT = transT_ref[...]                         # (K, K); transT[k, j] = trans[j, k]
    bvalid = bvalid_ref[...]                         # (bt, 1)
    kiota = lax.broadcasted_iota(jnp.int32, (bt, K), 1)

    # ---- emissions gather: emis[t][b, :] = sum_f emb[input_seq[b0+b, t, f], :] ----
    # TODO(synk): for very large features_dim keep emb in HBM (pl.ANY) and DMA-gather rows.
    emis = []
    for t in range(T):
        rows = []
        for b in range(bt):
            base = ((b0 + b) * T + t) * Fp
            acc = emb_ref[pl.ds(seq_ref[base], 1), :]            # (1, K)
            for f in range(1, Fp):
                acc = acc + emb_ref[pl.ds(seq_ref[base + f], 1), :]
            rows.append(acc)
        emis.append(jnp.concatenate(rows, axis=0))               # (bt, K)

    # ---- gold-tag one-hots, built in kernel (no host one_hot) ----
    tags_oh = [(kiota == tags_ref[t]).astype(jnp.float32) for t in range(T)]
    masks = [mask_ref[t] for t in range(T)]                      # each (bt, 1)
    last_oh = (kiota == last_ref[...]).astype(jnp.float32)       # (bt, K)

    # ---- numerator (gold path score), hoisted out of the serial recursion ----
    per_b = (jnp.sum(tags_oh[0] * start_row, axis=1, keepdims=True)
             + jnp.sum(tags_oh[0] * emis[0], axis=1, keepdims=True)
             + jnp.sum(last_oh * end_row, axis=1, keepdims=True))        # (bt, 1)

    emis_gold = jnp.zeros((bt, 1), jnp.float32)
    for t in range(1, T):
        emis_gold = emis_gold + masks[t] * jnp.sum(
            tags_oh[t] * emis[t], axis=1, keepdims=True)

    if T > 1:
        cur_cat = jnp.concatenate(tags_oh[1:], axis=0)           # ((T-1)*bt, K)
        prev_cat = jnp.concatenate(tags_oh[:-1], axis=0)         # ((T-1)*bt, K)
        mask_cat = jnp.concatenate(masks[1:], axis=0)            # ((T-1)*bt, 1)
        # (cur_cat @ transT)[r, j] = trans[j, cur_r]; * prev_oh, sum_j = trans[prev, cur]
        trans_rows = jnp.dot(cur_cat, transT,
                             preferred_element_type=jnp.float32)
        trans_gold = _sum_all(trans_rows * prev_cat * mask_cat)  # (1, 1)
    else:
        trans_gold = jnp.zeros((1, 1), jnp.float32)

    # ---- denominator: forward algorithm, exact logsumexp (VPU/EUP/XLU only) ----
    alpha = start_row + emis[0]                                  # (bt, K)
    for t in range(1, T):
        cols = []
        for k in range(K):
            v = alpha + transT[k:k + 1, :]                       # alpha[b, j] + trans[j, k]
            vmax = jnp.max(v, axis=1, keepdims=True)
            cols.append(vmax + jnp.log(
                jnp.sum(jnp.exp(v - vmax), axis=1, keepdims=True)))
        nxt = jnp.concatenate(cols, axis=1) + emis[t]            # (bt, K)
        alpha = jnp.where(masks[t] > 0.0, nxt, alpha)
    alpha = alpha + end_row
    amax = jnp.max(alpha, axis=1, keepdims=True)
    denom = amax + jnp.log(jnp.sum(jnp.exp(alpha - amax),
                                   axis=1, keepdims=True))       # (bt, 1)

    total = (_sum_all((per_b - denom) * bvalid)
             + _sum_all(emis_gold) + trans_gold)                 # (1, 1)
    out_ref[...] = total.reshape(1, 1, 1)


def ner_tagger_forward(params, input_seq, tags, mask, *, batch_tile=8):
    """NERTagger.forward: mean CRF log-likelihood over the batch (scalar f32)."""
    emb, start, end, trans = params
    B, T, Fp = input_seq.shape
    V, K = emb.shape

    # Batch tiling: one full-batch tile when B <= 8, otherwise 8-row (sublane
    # aligned) tiles over a "parallel" grid axis (pads + validity-masks the tail).
    if B <= batch_tile:
        bt, B_pad = B, B
    else:
        bt = batch_tile
        B_pad = ((B + bt - 1) // bt) * bt
    nbt = B_pad // bt
    pad = B_pad - B

    maskf = mask.astype(jnp.float32)                                   # (B, T)
    seq_p = jnp.pad(input_seq.astype(jnp.int32), ((0, pad), (0, 0), (0, 0)))
    tags_p = jnp.pad(tags.astype(jnp.int32), ((0, pad), (0, 0)))
    mask_p = jnp.pad(maskf, ((0, pad), (0, 0)))

    seq_flat = seq_p.reshape(B_pad * T * Fp)                           # SMEM prefetch
    tags_tb = jnp.transpose(tags_p, (1, 0))[:, :, None]                # (T, B_pad, 1)
    mask_tb = jnp.transpose(mask_p, (1, 0))[:, :, None]                # (T, B_pad, 1)

    seq_ends = jnp.sum(maskf, axis=1).astype(jnp.int32) - 1            # (B,)
    last_tags = tags[jnp.arange(B), seq_ends].astype(jnp.int32)
    last_p = jnp.pad(last_tags, (0, pad))[:, None]                     # (B_pad, 1)
    bvalid = (jnp.arange(B_pad) < B).astype(jnp.float32)[:, None]      # (B_pad, 1)

    start2 = start.reshape(1, K).astype(jnp.float32)
    end2 = end.reshape(1, K).astype(jnp.float32)
    transT = jnp.transpose(trans).astype(jnp.float32)                  # (K, K)
    emb_f = emb.astype(jnp.float32)

    kernel = functools.partial(_crf_kernel, T, K, Fp, bt)

    grid_spec = pltpu.PrefetchScalarGridSpec(
        num_scalar_prefetch=1,
        grid=(nbt,),
        in_specs=[
            pl.BlockSpec((T, bt, 1), lambda i, seq: (0, i, 0)),   # gold tags
            pl.BlockSpec((T, bt, 1), lambda i, seq: (0, i, 0)),   # mask
            pl.BlockSpec((bt, 1),    lambda i, seq: (i, 0)),      # last unmasked tag
            pl.BlockSpec((bt, 1),    lambda i, seq: (i, 0)),      # batch-valid flags
            pl.BlockSpec((V, K),     lambda i, seq: (0, 0)),      # embedding table
            pl.BlockSpec((1, K),     lambda i, seq: (0, 0)),      # start transitions
            pl.BlockSpec((1, K),     lambda i, seq: (0, 0)),      # end transitions
            pl.BlockSpec((K, K),     lambda i, seq: (0, 0)),      # transitions^T
        ],
        out_specs=pl.BlockSpec((1, 1, 1), lambda i, seq: (i, 0, 0)),
    )

    out = pl.pallas_call(
        kernel,
        out_shape=jax.ShapeDtypeStruct((nbt, 1, 1), jnp.float32),
        grid_spec=grid_spec,
        compiler_params=pltpu.CompilerParams(
            dimension_semantics=("parallel",)),
    )(seq_flat, tags_tb, mask_tb, last_p, bvalid, emb_f, start2, end2, transT)

    return jnp.sum(out) / B                                            # mean over batch


def ner_tagger_reference(params, input_seq, tags, mask):
    """Pure-JAX mirror of NERTagger.forward (pytorch-crf semantics)."""
    emb, start, end, trans = params
    B, T, _ = input_seq.shape
    emissions = emb[input_seq].sum(axis=-2)                 # (B, T, K)
    e = jnp.transpose(emissions, (1, 0, 2))                 # (T, B, K)
    tg = tags.T                                             # (T, B)
    mk = mask.T.astype(jnp.float32)                         # (T, B)
    ar = jnp.arange(B)

    score = start[tg[0]] + e[0, ar, tg[0]]
    alpha = start[None, :] + e[0]
    for i in range(1, T):
        score = score + (trans[tg[i - 1], tg[i]] + e[i, ar, tg[i]]) * mk[i]
        nxt = jax.nn.logsumexp(alpha[:, :, None] + trans[None, :, :]
                               + e[i][:, None, :], axis=1)
        alpha = jnp.where(mk[i][:, None] > 0, nxt, alpha)
    seq_ends = jnp.sum(mask, axis=1).astype(jnp.int32) - 1
    last = tags[ar, seq_ends]
    score = score + end[last]
    denom = jax.nn.logsumexp(alpha + end[None, :], axis=1)
    return jnp.mean(score - denom)


if __name__ == "__main__":
    key = jax.random.PRNGKey(0)
    B, T, Fp = 2, 8, 4          # batch, sequence length, feature slots per token
    V, K = 32, 8                # features_dim, num_tags

    k1, k2, k3, k4, k5, k6 = jax.random.split(key, 6)
    # deterministic parameter init (nn.Embedding ~ N(0,1); CRF params ~ U(-0.1, 0.1))
    emb = jax.random.normal(k1, (V, K), dtype=jnp.float32)
    start = jax.random.uniform(k2, (K,), minval=-0.1, maxval=0.1)
    end = jax.random.uniform(k3, (K,), minval=-0.1, maxval=0.1)
    trans = jax.random.uniform(k4, (K, K), minval=-0.1, maxval=0.1)
    params = (emb, start, end, trans)

    input_seq = jax.random.randint(k5, (B, T, Fp), 0, V, dtype=jnp.int32)
    tags = jax.random.randint(k6, (B, T), 0, K, dtype=jnp.int32)
    lengths = jnp.array([T, 5], dtype=jnp.int32)
    mask = jnp.arange(T)[None, :] < lengths[:, None]        # (B, T) bool, mask[:, 0] True

    out = jax.block_until_ready(ner_tagger_forward(params, input_seq, tags, mask))
    ref = ner_tagger_reference(params, input_seq, tags, mask)
    assert jnp.allclose(out, ref, atol=2e-3, rtol=2e-3), (out, ref)
    print("KERNEL_OK")
</pallas_src>

<mosaic_0001>
module attributes {stable_mosaic.version = 11 : i64} {
  func.func @_crf_kernel(%arg0: i32, %arg1: memref<64xi32, #tpu.memory_space<smem>>, %arg2: memref<8x2x1xi32, #tpu.memory_space<vmem>>, %arg3: memref<8x2x1xf32, #tpu.memory_space<vmem>>, %arg4: memref<2x1xi32, #tpu.memory_space<vmem>>, %arg5: memref<2x1xf32, #tpu.memory_space<vmem>>, %arg6: memref<32x8xf32, #tpu.memory_space<vmem>>, %arg7: memref<1x8xf32, #tpu.memory_space<vmem>>, %arg8: memref<1x8xf32, #tpu.memory_space<vmem>>, %arg9: memref<8x8xf32, #tpu.memory_space<vmem>>, %arg10: memref<1x1x1xf32, #tpu.memory_space<vmem>>) attributes {dimension_semantics = [#tpu.dimension_semantics<parallel>], iteration_bounds = array<i64: 1>, scalar_prefetch = 1 : i64, scratch_operands = 0 : i64, tpu.core_type = #tpu.core_type<tc>, window_params = [{transform_indices = @transform_0, window_bounds = array<i64: 8, 2, 1>}, {transform_indices = @transform_1, window_bounds = array<i64: 8, 2, 1>}, {transform_indices = @transform_2, window_bounds = array<i64: 2, 1>}, {transform_indices = @transform_3, window_bounds = array<i64: 2, 1>}, {pipeline_mode = #tpu.pipeline_mode<synchronous>, transform_indices = @transform_4, window_bounds = array<i64: 32, 8>}, {pipeline_mode = #tpu.pipeline_mode<synchronous>, transform_indices = @transform_5, window_bounds = array<i64: 1, 8>}, {pipeline_mode = #tpu.pipeline_mode<synchronous>, transform_indices = @transform_6, window_bounds = array<i64: 1, 8>}, {pipeline_mode = #tpu.pipeline_mode<synchronous>, transform_indices = @transform_7, window_bounds = array<i64: 8, 8>}, {transform_indices = @transform_8, window_bounds = array<i64: 1, 1, 1>}]} {
    %c2_i32 = arith.constant 2 : i32
    %0 = arith.muli %arg0, %c2_i32 : i32
    %c0 = arith.constant 0 : index
    %c0_0 = arith.constant 0 : index
    %1 = vector.load %arg7[%c0, %c0_0] : memref<1x8xf32, #tpu.memory_space<vmem>>, vector<1x8xf32>
    %c0_1 = arith.constant 0 : index
    %c0_2 = arith.constant 0 : index
    %2 = vector.load %arg8[%c0_1, %c0_2] : memref<1x8xf32, #tpu.memory_space<vmem>>, vector<1x8xf32>
    %c0_3 = arith.constant 0 : index
    %c0_4 = arith.constant 0 : index
    %3 = vector.load %arg9[%c0_3, %c0_4] : memref<8x8xf32, #tpu.memory_space<vmem>>, vector<8x8xf32>
    %c0_5 = arith.constant 0 : index
    %c0_6 = arith.constant 0 : index
    %4 = vector.load %arg5[%c0_5, %c0_6] : memref<2x1xf32, #tpu.memory_space<vmem>>, vector<2x1xf32>
    %5 = tpu.iota {dimensions = array<i32: 1>} : vector<2x8xi32>
    %c0_i32 = arith.constant 0 : i32
    %6 = arith.addi %0, %c0_i32 : i32
    %c8_i32 = arith.constant 8 : i32
    %7 = arith.muli %6, %c8_i32 : i32
    %c0_i32_7 = arith.constant 0 : i32
    %8 = arith.addi %7, %c0_i32_7 : i32
    %c4_i32 = arith.constant 4 : i32
    %9 = arith.muli %8, %c4_i32 : i32
    %10 = arith.index_cast %9 : i32 to index
    %11 = memref.load %arg1[%10] : memref<64xi32, #tpu.memory_space<smem>>
    %12 = arith.index_cast %11 : i32 to index
    %c0_8 = arith.constant 0 : index
    %13 = vector.load %arg6[%12, %c0_8] : memref<32x8xf32, #tpu.memory_space<vmem>>, vector<1x8xf32>
    %c1_i32 = arith.constant 1 : i32
    %14 = arith.addi %9, %c1_i32 : i32
    %15 = arith.index_cast %14 : i32 to index
    %16 = memref.load %arg1[%15] : memref<64xi32, #tpu.memory_space<smem>>
    %17 = arith.index_cast %16 : i32 to index
    %c0_9 = arith.constant 0 : index
    %18 = vector.load %arg6[%17, %c0_9] : memref<32x8xf32, #tpu.memory_space<vmem>>, vector<1x8xf32>
    %19 = arith.addf %13, %18 : vector<1x8xf32>
    %c2_i32_10 = arith.constant 2 : i32
    %20 = arith.addi %9, %c2_i32_10 : i32
    %21 = arith.index_cast %20 : i32 to index
    %22 = memref.load %arg1[%21] : memref<64xi32, #tpu.memory_space<smem>>
    %23 = arith.index_cast %22 : i32 to index
    %c0_11 = arith.constant 0 : index
    %24 = vector.load %arg6[%23, %c0_11] : memref<32x8xf32, #tpu.memory_space<vmem>>, vector<1x8xf32>
    %25 = arith.addf %19, %24 : vector<1x8xf32>
    %c3_i32 = arith.constant 3 : i32
    %26 = arith.addi %9, %c3_i32 : i32
    %27 = arith.index_cast %26 : i32 to index
    %28 = memref.load %arg1[%27] : memref<64xi32, #tpu.memory_space<smem>>
    %29 = arith.index_cast %28 : i32 to index
    %c0_12 = arith.constant 0 : index
    %30 = vector.load %arg6[%29, %c0_12] : memref<32x8xf32, #tpu.memory_space<vmem>>, vector<1x8xf32>
    %31 = arith.addf %25, %30 : vector<1x8xf32>
    %c1_i32_13 = arith.constant 1 : i32
    %32 = arith.addi %0, %c1_i32_13 : i32
    %c8_i32_14 = arith.constant 8 : i32
    %33 = arith.muli %32, %c8_i32_14 : i32
    %c0_i32_15 = arith.constant 0 : i32
    %34 = arith.addi %33, %c0_i32_15 : i32
    %c4_i32_16 = arith.constant 4 : i32
    %35 = arith.muli %34, %c4_i32_16 : i32
    %36 = arith.index_cast %35 : i32 to index
    %37 = memref.load %arg1[%36] : memref<64xi32, #tpu.memory_space<smem>>
    %38 = arith.index_cast %37 : i32 to index
    %c0_17 = arith.constant 0 : index
    %39 = vector.load %arg6[%38, %c0_17] : memref<32x8xf32, #tpu.memory_space<vmem>>, vector<1x8xf32>
    %c1_i32_18 = arith.constant 1 : i32
    %40 = arith.addi %35, %c1_i32_18 : i32
    %41 = arith.index_cast %40 : i32 to index
    %42 = memref.load %arg1[%41] : memref<64xi32, #tpu.memory_space<smem>>
    %43 = arith.index_cast %42 : i32 to index
    %c0_19 = arith.constant 0 : index
    %44 = vector.load %arg6[%43, %c0_19] : memref<32x8xf32, #tpu.memory_space<vmem>>, vector<1x8xf32>
    %45 = arith.addf %39, %44 : vector<1x8xf32>
    %c2_i32_20 = arith.constant 2 : i32
    %46 = arith.addi %35, %c2_i32_20 : i32
    %47 = arith.index_cast %46 : i32 to index
    %48 = memref.load %arg1[%47] : memref<64xi32, #tpu.memory_space<smem>>
    %49 = arith.index_cast %48 : i32 to index
    %c0_21 = arith.constant 0 : index
    %50 = vector.load %arg6[%49, %c0_21] : memref<32x8xf32, #tpu.memory_space<vmem>>, vector<1x8xf32>
    %51 = arith.addf %45, %50 : vector<1x8xf32>
    %c3_i32_22 = arith.constant 3 : i32
    %52 = arith.addi %35, %c3_i32_22 : i32
    %53 = arith.index_cast %52 : i32 to index
    %54 = memref.load %arg1[%53] : memref<64xi32, #tpu.memory_space<smem>>
    %55 = arith.index_cast %54 : i32 to index
    %c0_23 = arith.constant 0 : index
    %56 = vector.load %arg6[%55, %c0_23] : memref<32x8xf32, #tpu.memory_space<vmem>>, vector<1x8xf32>
    %57 = arith.addf %51, %56 : vector<1x8xf32>
    %58 = tpu.concatenate %31, %57 in 0 : vector<1x8xf32>, vector<1x8xf32> -> vector<2x8xf32>
    %c0_i32_24 = arith.constant 0 : i32
    %59 = arith.addi %0, %c0_i32_24 : i32
    %c8_i32_25 = arith.constant 8 : i32
    %60 = arith.muli %59, %c8_i32_25 : i32
    %c1_i32_26 = arith.constant 1 : i32
    %61 = arith.addi %60, %c1_i32_26 : i32
    %c4_i32_27 = arith.constant 4 : i32
    %62 = arith.muli %61, %c4_i32_27 : i32
    %63 = arith.index_cast %62 : i32 to index
    %64 = memref.load %arg1[%63] : memref<64xi32, #tpu.memory_space<smem>>
    %65 = arith.index_cast %64 : i32 to index
    %c0_28 = arith.constant 0 : index
    %66 = vector.load %arg6[%65, %c0_28] : memref<32x8xf32, #tpu.memory_space<vmem>>, vector<1x8xf32>
    %c1_i32_29 = arith.constant 1 : i32
    %67 = arith.addi %62, %c1_i32_29 : i32
    %68 = arith.index_cast %67 : i32 to index
    %69 = memref.load %arg1[%68] : memref<64xi32, #tpu.memory_space<smem>>
    %70 = arith.index_cast %69 : i32 to index
    %c0_30 = arith.constant 0 : index
    %71 = vector.load %arg6[%70, %c0_30] : memref<32x8xf32, #tpu.memory_space<vmem>>, vector<1x8xf32>
    %72 = arith.addf %66, %71 : vector<1x8xf32>
    %c2_i32_31 = arith.constant 2 : i32
    %73 = arith.addi %62, %c2_i32_31 : i32
    %74 = arith.index_cast %73 : i32 to index
    %75 = memref.load %arg1[%74] : memref<64xi32, #tpu.memory_space<smem>>
    %76 = arith.index_cast %75 : i32 to index
    %c0_32 = arith.constant 0 : index
    %77 = vector.load %arg6[%76, %c0_32] : memref<32x8xf32, #tpu.memory_space<vmem>>, vector<1x8xf32>
    %78 = arith.addf %72, %77 : vector<1x8xf32>
    %c3_i32_33 = arith.constant 3 : i32
    %79 = arith.addi %62, %c3_i32_33 : i32
    %80 = arith.index_cast %79 : i32 to index
    %81 = memref.load %arg1[%80] : memref<64xi32, #tpu.memory_space<smem>>
    %82 = arith.index_cast %81 : i32 to index
    %c0_34 = arith.constant 0 : index
    %83 = vector.load %arg6[%82, %c0_34] : memref<32x8xf32, #tpu.memory_space<vmem>>, vector<1x8xf32>
    %84 = arith.addf %78, %83 : vector<1x8xf32>
    %c1_i32_35 = arith.constant 1 : i32
    %85 = arith.addi %0, %c1_i32_35 : i32
    %c8_i32_36 = arith.constant 8 : i32
    %86 = arith.muli %85, %c8_i32_36 : i32
    %c1_i32_37 = arith.constant 1 : i32
    %87 = arith.addi %86, %c1_i32_37 : i32
    %c4_i32_38 = arith.constant 4 : i32
    %88 = arith.muli %87, %c4_i32_38 : i32
    %89 = arith.index_cast %88 : i32 to index
    %90 = memref.load %arg1[%89] : memref<64xi32, #tpu.memory_space<smem>>
    %91 = arith.index_cast %90 : i32 to index
    %c0_39 = arith.constant 0 : index
    %92 = vector.load %arg6[%91, %c0_39] : memref<32x8xf32, #tpu.memory_space<vmem>>, vector<1x8xf32>
    %c1_i32_40 = arith.constant 1 : i32
    %93 = arith.addi %88, %c1_i32_40 : i32
    %94 = arith.index_cast %93 : i32 to index
    %95 = memref.load %arg1[%94] : memref<64xi32, #tpu.memory_space<smem>>
    %96 = arith.index_cast %95 : i32 to index
    %c0_41 = arith.constant 0 : index
    %97 = vector.load %arg6[%96, %c0_41] : memref<32x8xf32, #tpu.memory_space<vmem>>, vector<1x8xf32>
    %98 = arith.addf %92, %97 : vector<1x8xf32>
    %c2_i32_42 = arith.constant 2 : i32
    %99 = arith.addi %88, %c2_i32_42 : i32
    %100 = arith.index_cast %99 : i32 to index
    %101 = memref.load %arg1[%100] : memref<64xi32, #tpu.memory_space<smem>>
    %102 = arith.index_cast %101 : i32 to index
    %c0_43 = arith.constant 0 : index
    %103 = vector.load %arg6[%102, %c0_43] : memref<32x8xf32, #tpu.memory_space<vmem>>, vector<1x8xf32>
    %104 = arith.addf %98, %103 : vector<1x8xf32>
    %c3_i32_44 = arith.constant 3 : i32
    %105 = arith.addi %88, %c3_i32_44 : i32
    %106 = arith.index_cast %105 : i32 to index
    %107 = memref.load %arg1[%106] : memref<64xi32, #tpu.memory_space<smem>>
    %108 = arith.index_cast %107 : i32 to index
    %c0_45 = arith.constant 0 : index
    %109 = vector.load %arg6[%108, %c0_45] : memref<32x8xf32, #tpu.memory_space<vmem>>, vector<1x8xf32>
    %110 = arith.addf %104, %109 : vector<1x8xf32>
    %111 = tpu.concatenate %84, %110 in 0 : vector<1x8xf32>, vector<1x8xf32> -> vector<2x8xf32>
    %c0_i32_46 = arith.constant 0 : i32
    %112 = arith.addi %0, %c0_i32_46 : i32
    %c8_i32_47 = arith.constant 8 : i32
    %113 = arith.muli %112, %c8_i32_47 : i32
    %c2_i32_48 = arith.constant 2 : i32
    %114 = arith.addi %113, %c2_i32_48 : i32
    %c4_i32_49 = arith.constant 4 : i32
    %115 = arith.muli %114, %c4_i32_49 : i32
    %116 = arith.index_cast %115 : i32 to index
    %117 = memref.load %arg1[%116] : memref<64xi32, #tpu.memory_space<smem>>
    %118 = arith.index_cast %117 : i32 to index
    %c0_50 = arith.constant 0 : index
    %119 = vector.load %arg6[%118, %c0_50] : memref<32x8xf32, #tpu.memory_space<vmem>>, vector<1x8xf32>
    %c1_i32_51 = arith.constant 1 : i32
    %120 = arith.addi %115, %c1_i32_51 : i32
    %121 = arith.index_cast %120 : i32 to index
    %122 = memref.load %arg1[%121] : memref<64xi32, #tpu.memory_space<smem>>
    %123 = arith.index_cast %122 : i32 to index
    %c0_52 = arith.constant 0 : index
    %124 = vector.load %arg6[%123, %c0_52] : memref<32x8xf32, #tpu.memory_space<vmem>>, vector<1x8xf32>
    %125 = arith.addf %119, %124 : vector<1x8xf32>
    %c2_i32_53 = arith.constant 2 : i32
    %126 = arith.addi %115, %c2_i32_53 : i32
    %127 = arith.index_cast %126 : i32 to index
    %128 = memref.load %arg1[%127] : memref<64xi32, #tpu.memory_space<smem>>
    %129 = arith.index_cast %128 : i32 to index
    %c0_54 = arith.constant 0 : index
    %130 = vector.load %arg6[%129, %c0_54] : memref<32x8xf32, #tpu.memory_space<vmem>>, vector<1x8xf32>
    %131 = arith.addf %125, %130 : vector<1x8xf32>
    %c3_i32_55 = arith.constant 3 : i32
    %132 = arith.addi %115, %c3_i32_55 : i32
    %133 = arith.index_cast %132 : i32 to index
    %134 = memref.load %arg1[%133] : memref<64xi32, #tpu.memory_space<smem>>
    %135 = arith.index_cast %134 : i32 to index
    %c0_56 = arith.constant 0 : index
    %136 = vector.load %arg6[%135, %c0_56] : memref<32x8xf32, #tpu.memory_space<vmem>>, vector<1x8xf32>
    %137 = arith.addf %131, %136 : vector<1x8xf32>
    %c1_i32_57 = arith.constant 1 : i32
    %138 = arith.addi %0, %c1_i32_57 : i32
    %c8_i32_58 = arith.constant 8 : i32
    %139 = arith.muli %138, %c8_i32_58 : i32
    %c2_i32_59 = arith.constant 2 : i32
    %140 = arith.addi %139, %c2_i32_59 : i32
    %c4_i32_60 = arith.constant 4 : i32
    %141 = arith.muli %140, %c4_i32_60 : i32
    %142 = arith.index_cast %141 : i32 to index
    %143 = memref.load %arg1[%142] : memref<64xi32, #tpu.memory_space<smem>>
    %144 = arith.index_cast %143 : i32 to index
    %c0_61 = arith.constant 0 : index
    %145 = vector.load %arg6[%144, %c0_61] : memref<32x8xf32, #tpu.memory_space<vmem>>, vector<1x8xf32>
    %c1_i32_62 = arith.constant 1 : i32
    %146 = arith.addi %141, %c1_i32_62 : i32
    %147 = arith.index_cast %146 : i32 to index
    %148 = memref.load %arg1[%147] : memref<64xi32, #tpu.memory_space<smem>>
    %149 = arith.index_cast %148 : i32 to index
    %c0_63 = arith.constant 0 : index
    %150 = vector.load %arg6[%149, %c0_63] : memref<32x8xf32, #tpu.memory_space<vmem>>, vector<1x8xf32>
    %151 = arith.addf %145, %150 : vector<1x8xf32>
    %c2_i32_64 = arith.constant 2 : i32
    %152 = arith.addi %141, %c2_i32_64 : i32
    %153 = arith.index_cast %152 : i32 to index
    %154 = memref.load %arg1[%153] : memref<64xi32, #tpu.memory_space<smem>>
    %155 = arith.index_cast %154 : i32 to index
    %c0_65 = arith.constant 0 : index
    %156 = vector.load %arg6[%155, %c0_65] : memref<32x8xf32, #tpu.memory_space<vmem>>, vector<1x8xf32>
    %157 = arith.addf %151, %156 : vector<1x8xf32>
    %c3_i32_66 = arith.constant 3 : i32
    %158 = arith.addi %141, %c3_i32_66 : i32
    %159 = arith.index_cast %158 : i32 to index
    %160 = memref.load %arg1[%159] : memref<64xi32, #tpu.memory_space<smem>>
    %161 = arith.index_cast %160 : i32 to index
    %c0_67 = arith.constant 0 : index
    %162 = vector.load %arg6[%161, %c0_67] : memref<32x8xf32, #tpu.memory_space<vmem>>, vector<1x8xf32>
    %163 = arith.addf %157, %162 : vector<1x8xf32>
    %164 = tpu.concatenate %137, %163 in 0 : vector<1x8xf32>, vector<1x8xf32> -> vector<2x8xf32>
    %c0_i32_68 = arith.constant 0 : i32
    %165 = arith.addi %0, %c0_i32_68 : i32
    %c8_i32_69 = arith.constant 8 : i32
    %166 = arith.muli %165, %c8_i32_69 : i32
    %c3_i32_70 = arith.constant 3 : i32
    %167 = arith.addi %166, %c3_i32_70 : i32
    %c4_i32_71 = arith.constant 4 : i32
    %168 = arith.muli %167, %c4_i32_71 : i32
    %169 = arith.index_cast %168 : i32 to index
    %170 = memref.load %arg1[%169] : memref<64xi32, #tpu.memory_space<smem>>
    %171 = arith.index_cast %170 : i32 to index
    %c0_72 = arith.constant 0 : index
    %172 = vector.load %arg6[%171, %c0_72] : memref<32x8xf32, #tpu.memory_space<vmem>>, vector<1x8xf32>
    %c1_i32_73 = arith.constant 1 : i32
    %173 = arith.addi %168, %c1_i32_73 : i32
    %174 = arith.index_cast %173 : i32 to index
    %175 = memref.load %arg1[%174] : memref<64xi32, #tpu.memory_space<smem>>
    %176 = arith.index_cast %175 : i32 to index
    %c0_74 = arith.constant 0 : index
    %177 = vector.load %arg6[%176, %c0_74] : memref<32x8xf32, #tpu.memory_space<vmem>>, vector<1x8xf32>
    %178 = arith.addf %172, %177 : vector<1x8xf32>
    %c2_i32_75 = arith.constant 2 : i32
    %179 = arith.addi %168, %c2_i32_75 : i32
    %180 = arith.index_cast %179 : i32 to index
    %181 = memref.load %arg1[%180] : memref<64xi32, #tpu.memory_space<smem>>
    %182 = arith.index_cast %181 : i32 to index
    %c0_76 = arith.constant 0 : index
    %183 = vector.load %arg6[%182, %c0_76] : memref<32x8xf32, #tpu.memory_space<vmem>>, vector<1x8xf32>
    %184 = arith.addf %178, %183 : vector<1x8xf32>
    %c3_i32_77 = arith.constant 3 : i32
    %185 = arith.addi %168, %c3_i32_77 : i32
    %186 = arith.index_cast %185 : i32 to index
    %187 = memref.load %arg1[%186] : memref<64xi32, #tpu.memory_space<smem>>
    %188 = arith.index_cast %187 : i32 to index
    %c0_78 = arith.constant 0 : index
    %189 = vector.load %arg6[%188, %c0_78] : memref<32x8xf32, #tpu.memory_space<vmem>>, vector<1x8xf32>
    %190 = arith.addf %184, %189 : vector<1x8xf32>
    %c1_i32_79 = arith.constant 1 : i32
    %191 = arith.addi %0, %c1_i32_79 : i32
    %c8_i32_80 = arith.constant 8 : i32
    %192 = arith.muli %191, %c8_i32_80 : i32
    %c3_i32_81 = arith.constant 3 : i32
    %193 = arith.addi %192, %c3_i32_81 : i32
    %c4_i32_82 = arith.constant 4 : i32
    %194 = arith.muli %193, %c4_i32_82 : i32
    %195 = arith.index_cast %194 : i32 to index
    %196 = memref.load %arg1[%195] : memref<64xi32, #tpu.memory_space<smem>>
    %197 = arith.index_cast %196 : i32 to index
    %c0_83 = arith.constant 0 : index
    %198 = vector.load %arg6[%197, %c0_83] : memref<32x8xf32, #tpu.memory_space<vmem>>, vector<1x8xf32>
    %c1_i32_84 = arith.constant 1 : i32
    %199 = arith.addi %194, %c1_i32_84 : i32
    %200 = arith.index_cast %199 : i32 to index
    %201 = memref.load %arg1[%200] : memref<64xi32, #tpu.memory_space<smem>>
    %202 = arith.index_cast %201 : i32 to index
    %c0_85 = arith.constant 0 : index
    %203 = vector.load %arg6[%202, %c0_85] : memref<32x8xf32, #tpu.memory_space<vmem>>, vector<1x8xf32>
    %204 = arith.addf %198, %203 : vector<1x8xf32>
    %c2_i32_86 = arith.constant 2 : i32
    %205 = arith.addi %194, %c2_i32_86 : i32
    %206 = arith.index_cast %205 : i32 to index
    %207 = memref.load %arg1[%206] : memref<64xi32, #tpu.memory_space<smem>>
    %208 = arith.index_cast %207 : i32 to index
    %c0_87 = arith.constant 0 : index
    %209 = vector.load %arg6[%208, %c0_87] : memref<32x8xf32, #tpu.memory_space<vmem>>, vector<1x8xf32>
    %210 = arith.addf %204, %209 : vector<1x8xf32>
    %c3_i32_88 = arith.constant 3 : i32
    %211 = arith.addi %194, %c3_i32_88 : i32
    %212 = arith.index_cast %211 : i32 to index
    %213 = memref.load %arg1[%212] : memref<64xi32, #tpu.memory_space<smem>>
    %214 = arith.index_cast %213 : i32 to index
    %c0_89 = arith.constant 0 : index
    %215 = vector.load %arg6[%214, %c0_89] : memref<32x8xf32, #tpu.memory_space<vmem>>, vector<1x8xf32>
    %216 = arith.addf %210, %215 : vector<1x8xf32>
    %217 = tpu.concatenate %190, %216 in 0 : vector<1x8xf32>, vector<1x8xf32> -> vector<2x8xf32>
    %c0_i32_90 = arith.constant 0 : i32
    %218 = arith.addi %0, %c0_i32_90 : i32
    %c8_i32_91 = arith.constant 8 : i32
    %219 = arith.muli %218, %c8_i32_91 : i32
    %c4_i32_92 = arith.constant 4 : i32
    %220 = arith.addi %219, %c4_i32_92 : i32
    %c4_i32_93 = arith.constant 4 : i32
    %221 = arith.muli %220, %c4_i32_93 : i32
    %222 = arith.index_cast %221 : i32 to index
    %223 = memref.load %arg1[%222] : memref<64xi32, #tpu.memory_space<smem>>
    %224 = arith.index_cast %223 : i32 to index
    %c0_94 = arith.constant 0 : index
    %225 = vector.load %arg6[%224, %c0_94] : memref<32x8xf32, #tpu.memory_space<vmem>>, vector<1x8xf32>
    %c1_i32_95 = arith.constant 1 : i32
    %226 = arith.addi %221, %c1_i32_95 : i32
    %227 = arith.index_cast %226 : i32 to index
    %228 = memref.load %arg1[%227] : memref<64xi32, #tpu.memory_space<smem>>
    %229 = arith.index_cast %228 : i32 to index
    %c0_96 = arith.constant 0 : index
    %230 = vector.load %arg6[%229, %c0_96] : memref<32x8xf32, #tpu.memory_space<vmem>>, vector<1x8xf32>
    %231 = arith.addf %225, %230 : vector<1x8xf32>
    %c2_i32_97 = arith.constant 2 : i32
    %232 = arith.addi %221, %c2_i32_97 : i32
    %233 = arith.index_cast %232 : i32 to index
    %234 = memref.load %arg1[%233] : memref<64xi32, #tpu.memory_space<smem>>
    %235 = arith.index_cast %234 : i32 to index
    %c0_98 = arith.constant 0 : index
    %236 = vector.load %arg6[%235, %c0_98] : memref<32x8xf32, #tpu.memory_space<vmem>>, vector<1x8xf32>
    %237 = arith.addf %231, %236 : vector<1x8xf32>
    %c3_i32_99 = arith.constant 3 : i32
    %238 = arith.addi %221, %c3_i32_99 : i32
    %239 = arith.index_cast %238 : i32 to index
    %240 = memref.load %arg1[%239] : memref<64xi32, #tpu.memory_space<smem>>
    %241 = arith.index_cast %240 : i32 to index
    %c0_100 = arith.constant 0 : index
    %242 = vector.load %arg6[%241, %c0_100] : memref<32x8xf32, #tpu.memory_space<vmem>>, vector<1x8xf32>
    %243 = arith.addf %237, %242 : vector<1x8xf32>
    %c1_i32_101 = arith.constant 1 : i32
    %244 = arith.addi %0, %c1_i32_101 : i32
    %c8_i32_102 = arith.constant 8 : i32
    %245 = arith.muli %244, %c8_i32_102 : i32
    %c4_i32_103 = arith.constant 4 : i32
    %246 = arith.addi %245, %c4_i32_103 : i32
    %c4_i32_104 = arith.constant 4 : i32
    %247 = arith.muli %246, %c4_i32_104 : i32
    %248 = arith.index_cast %247 : i32 to index
    %249 = memref.load %arg1[%248] : memref<64xi32, #tpu.memory_space<smem>>
    %250 = arith.index_cast %249 : i32 to index
    %c0_105 = arith.constant 0 : index
    %251 = vector.load %arg6[%250, %c0_105] : memref<32x8xf32, #tpu.memory_space<vmem>>, vector<1x8xf32>
    %c1_i32_106 = arith.constant 1 : i32
    %252 = arith.addi %247, %c1_i32_106 : i32
    %253 = arith.index_cast %252 : i32 to index
    %254 = memref.load %arg1[%253] : memref<64xi32, #tpu.memory_space<smem>>
    %255 = arith.index_cast %254 : i32 to index
    %c0_107 = arith.constant 0 : index
    %256 = vector.load %arg6[%255, %c0_107] : memref<32x8xf32, #tpu.memory_space<vmem>>, vector<1x8xf32>
    %257 = arith.addf %251, %256 : vector<1x8xf32>
    %c2_i32_108 = arith.constant 2 : i32
    %258 = arith.addi %247, %c2_i32_108 : i32
    %259 = arith.index_cast %258 : i32 to index
    %260 = memref.load %arg1[%259] : memref<64xi32, #tpu.memory_space<smem>>
    %261 = arith.index_cast %260 : i32 to index
    %c0_109 = arith.constant 0 : index
    %262 = vector.load %arg6[%261, %c0_109] : memref<32x8xf32, #tpu.memory_space<vmem>>, vector<1x8xf32>
    %263 = arith.addf %257, %262 : vector<1x8xf32>
    %c3_i32_110 = arith.constant 3 : i32
    %264 = arith.addi %247, %c3_i32_110 : i32
    %265 = arith.index_cast %264 : i32 to index
    %266 = memref.load %arg1[%265] : memref<64xi32, #tpu.memory_space<smem>>
    %267 = arith.index_cast %266 : i32 to index
    %c0_111 = arith.constant 0 : index
    %268 = vector.load %arg6[%267, %c0_111] : memref<32x8xf32, #tpu.memory_space<vmem>>, vector<1x8xf32>
    %269 = arith.addf %263, %268 : vector<1x8xf32>
    %270 = tpu.concatenate %243, %269 in 0 : vector<1x8xf32>, vector<1x8xf32> -> vector<2x8xf32>
    %c0_i32_112 = arith.constant 0 : i32
    %271 = arith.addi %0, %c0_i32_112 : i32
    %c8_i32_113 = arith.constant 8 : i32
    %272 = arith.muli %271, %c8_i32_113 : i32
    %c5_i32 = arith.constant 5 : i32
    %273 = arith.addi %272, %c5_i32 : i32
    %c4_i32_114 = arith.constant 4 : i32
    %274 = arith.muli %273, %c4_i32_114 : i32
    %275 = arith.index_cast %274 : i32 to index
    %276 = memref.load %arg1[%275] : memref<64xi32, #tpu.memory_space<smem>>
    %277 = arith.index_cast %276 : i32 to index
    %c0_115 = arith.constant 0 : index
    %278 = vector.load %arg6[%277, %c0_115] : memref<32x8xf32, #tpu.memory_space<vmem>>, vector<1x8xf32>
    %c1_i32_116 = arith.constant 1 : i32
    %279 = arith.addi %274, %c1_i32_116 : i32
    %280 = arith.index_cast %279 : i32 to index
    %281 = memref.load %arg1[%280] : memref<64xi32, #tpu.memory_space<smem>>
    %282 = arith.index_cast %281 : i32 to index
    %c0_117 = arith.constant 0 : index
    %283 = vector.load %arg6[%282, %c0_117] : memref<32x8xf32, #tpu.memory_space<vmem>>, vector<1x8xf32>
    %284 = arith.addf %278, %283 : vector<1x8xf32>
    %c2_i32_118 = arith.constant 2 : i32
    %285 = arith.addi %274, %c2_i32_118 : i32
    %286 = arith.index_cast %285 : i32 to index
    %287 = memref.load %arg1[%286] : memref<64xi32, #tpu.memory_space<smem>>
    %288 = arith.index_cast %287 : i32 to index
    %c0_119 = arith.constant 0 : index
    %289 = vector.load %arg6[%288, %c0_119] : memref<32x8xf32, #tpu.memory_space<vmem>>, vector<1x8xf32>
    %290 = arith.addf %284, %289 : vector<1x8xf32>
    %c3_i32_120 = arith.constant 3 : i32
    %291 = arith.addi %274, %c3_i32_120 : i32
    %292 = arith.index_cast %291 : i32 to index
    %293 = memref.load %arg1[%292] : memref<64xi32, #tpu.memory_space<smem>>
    %294 = arith.index_cast %293 : i32 to index
    %c0_121 = arith.constant 0 : index
    %295 = vector.load %arg6[%294, %c0_121] : memref<32x8xf32, #tpu.memory_space<vmem>>, vector<1x8xf32>
    %296 = arith.addf %290, %295 : vector<1x8xf32>
    %c1_i32_122 = arith.constant 1 : i32
    %297 = arith.addi %0, %c1_i32_122 : i32
    %c8_i32_123 = arith.constant 8 : i32
    %298 = arith.muli %297, %c8_i32_123 : i32
    %c5_i32_124 = arith.constant 5 : i32
    %299 = arith.addi %298, %c5_i32_124 : i32
    %c4_i32_125 = arith.constant 4 : i32
    %300 = arith.muli %299, %c4_i32_125 : i32
    %301 = arith.index_cast %300 : i32 to index
    %302 = memref.load %arg1[%301] : memref<64xi32, #tpu.memory_space<smem>>
    %303 = arith.index_cast %302 : i32 to index
    %c0_126 = arith.constant 0 : index
    %304 = vector.load %arg6[%303, %c0_126] : memref<32x8xf32, #tpu.memory_space<vmem>>, vector<1x8xf32>
    %c1_i32_127 = arith.constant 1 : i32
    %305 = arith.addi %300, %c1_i32_127 : i32
    %306 = arith.index_cast %305 : i32 to index
    %307 = memref.load %arg1[%306] : memref<64xi32, #tpu.memory_space<smem>>
    %308 = arith.index_cast %307 : i32 to index
    %c0_128 = arith.constant 0 : index
    %309 = vector.load %arg6[%308, %c0_128] : memref<32x8xf32, #tpu.memory_space<vmem>>, vector<1x8xf32>
    %310 = arith.addf %304, %309 : vector<1x8xf32>
    %c2_i32_129 = arith.constant 2 : i32
    %311 = arith.addi %300, %c2_i32_129 : i32
    %312 = arith.index_cast %311 : i32 to index
    %313 = memref.load %arg1[%312] : memref<64xi32, #tpu.memory_space<smem>>
    %314 = arith.index_cast %313 : i32 to index
    %c0_130 = arith.constant 0 : index
    %315 = vector.load %arg6[%314, %c0_130] : memref<32x8xf32, #tpu.memory_space<vmem>>, vector<1x8xf32>
    %316 = arith.addf %310, %315 : vector<1x8xf32>
    %c3_i32_131 = arith.constant 3 : i32
    %317 = arith.addi %300, %c3_i32_131 : i32
    %318 = arith.index_cast %317 : i32 to index
    %319 = memref.load %arg1[%318] : memref<64xi32, #tpu.memory_space<smem>>
    %320 = arith.index_cast %319 : i32 to index
    %c0_132 = arith.constant 0 : index
    %321 = vector.load %arg6[%320, %c0_132] : memref<32x8xf32, #tpu.memory_space<vmem>>, vector<1x8xf32>
    %322 = arith.addf %316, %321 : vector<1x8xf32>
    %323 = tpu.concatenate %296, %322 in 0 : vector<1x8xf32>, vector<1x8xf32> -> vector<2x8xf32>
    %c0_i32_133 = arith.constant 0 : i32
    %324 = arith.addi %0, %c0_i32_133 : i32
    %c8_i32_134 = arith.constant 8 : i32
    %325 = arith.muli %324, %c8_i32_134 : i32
    %c6_i32 = arith.constant 6 : i32
    %326 = arith.addi %325, %c6_i32 : i32
    %c4_i32_135 = arith.constant 4 : i32
    %327 = arith.muli %326, %c4_i32_135 : i32
    %328 = arith.index_cast %327 : i32 to index
    %329 = memref.load %arg1[%328] : memref<64xi32, #tpu.memory_space<smem>>
    %330 = arith.index_cast %329 : i32 to index
    %c0_136 = arith.constant 0 : index
    %331 = vector.load %arg6[%330, %c0_136] : memref<32x8xf32, #tpu.memory_space<vmem>>, vector<1x8xf32>
    %c1_i32_137 = arith.constant 1 : i32
    %332 = arith.addi %327, %c1_i32_137 : i32
    %333 = arith.index_cast %332 : i32 to index
    %334 = memref.load %arg1[%333] : memref<64xi32, #tpu.memory_space<smem>>
    %335 = arith.index_cast %334 : i32 to index
    %c0_138 = arith.constant 0 : index
    %336 = vector.load %arg6[%335, %c0_138] : memref<32x8xf32, #tpu.memory_space<vmem>>, vector<1x8xf32>
    %337 = arith.addf %331, %336 : vector<1x8xf32>
    %c2_i32_139 = arith.constant 2 : i32
    %338 = arith.addi %327, %c2_i32_139 : i32
    %339 = arith.index_cast %338 : i32 to index
    %340 = memref.load %arg1[%339] : memref<64xi32, #tpu.memory_space<smem>>
    %341 = arith.index_cast %340 : i32 to index
    %c0_140 = arith.constant 0 : index
    %342 = vector.load %arg6[%341, %c0_140] : memref<32x8xf32, #tpu.memory_space<vmem>>, vector<1x8xf32>
    %343 = arith.addf %337, %342 : vector<1x8xf32>
    %c3_i32_141 = arith.constant 3 : i32
    %344 = arith.addi %327, %c3_i32_141 : i32
    %345 = arith.index_cast %344 : i32 to index
    %346 = memref.load %arg1[%345] : memref<64xi32, #tpu.memory_space<smem>>
    %347 = arith.index_cast %346 : i32 to index
    %c0_142 = arith.constant 0 : index
    %348 = vector.load %arg6[%347, %c0_142] : memref<32x8xf32, #tpu.memory_space<vmem>>, vector<1x8xf32>
    %349 = arith.addf %343, %348 : vector<1x8xf32>
    %c1_i32_143 = arith.constant 1 : i32
    %350 = arith.addi %0, %c1_i32_143 : i32
    %c8_i32_144 = arith.constant 8 : i32
    %351 = arith.muli %350, %c8_i32_144 : i32
    %c6_i32_145 = arith.constant 6 : i32
    %352 = arith.addi %351, %c6_i32_145 : i32
    %c4_i32_146 = arith.constant 4 : i32
    %353 = arith.muli %352, %c4_i32_146 : i32
    %354 = arith.index_cast %353 : i32 to index
    %355 = memref.load %arg1[%354] : memref<64xi32, #tpu.memory_space<smem>>
    %356 = arith.index_cast %355 : i32 to index
    %c0_147 = arith.constant 0 : index
    %357 = vector.load %arg6[%356, %c0_147] : memref<32x8xf32, #tpu.memory_space<vmem>>, vector<1x8xf32>
    %c1_i32_148 = arith.constant 1 : i32
    %358 = arith.addi %353, %c1_i32_148 : i32
    %359 = arith.index_cast %358 : i32 to index
    %360 = memref.load %arg1[%359] : memref<64xi32, #tpu.memory_space<smem>>
    %361 = arith.index_cast %360 : i32 to index
    %c0_149 = arith.constant 0 : index
    %362 = vector.load %arg6[%361, %c0_149] : memref<32x8xf32, #tpu.memory_space<vmem>>, vector<1x8xf32>
    %363 = arith.addf %357, %362 : vector<1x8xf32>
    %c2_i32_150 = arith.constant 2 : i32
    %364 = arith.addi %353, %c2_i32_150 : i32
    %365 = arith.index_cast %364 : i32 to index
    %366 = memref.load %arg1[%365] : memref<64xi32, #tpu.memory_space<smem>>
    %367 = arith.index_cast %366 : i32 to index
    %c0_151 = arith.constant 0 : index
    %368 = vector.load %arg6[%367, %c0_151] : memref<32x8xf32, #tpu.memory_space<vmem>>, vector<1x8xf32>
    %369 = arith.addf %363, %368 : vector<1x8xf32>
    %c3_i32_152 = arith.constant 3 : i32
    %370 = arith.addi %353, %c3_i32_152 : i32
    %371 = arith.index_cast %370 : i32 to index
    %372 = memref.load %arg1[%371] : memref<64xi32, #tpu.memory_space<smem>>
    %373 = arith.index_cast %372 : i32 to index
    %c0_153 = arith.constant 0 : index
    %374 = vector.load %arg6[%373, %c0_153] : memref<32x8xf32, #tpu.memory_space<vmem>>, vector<1x8xf32>
    %375 = arith.addf %369, %374 : vector<1x8xf32>
    %376 = tpu.concatenate %349, %375 in 0 : vector<1x8xf32>, vector<1x8xf32> -> vector<2x8xf32>
    %c0_i32_154 = arith.constant 0 : i32
    %377 = arith.addi %0, %c0_i32_154 : i32
    %c8_i32_155 = arith.constant 8 : i32
    %378 = arith.muli %377, %c8_i32_155 : i32
    %c7_i32 = arith.constant 7 : i32
    %379 = arith.addi %378, %c7_i32 : i32
    %c4_i32_156 = arith.constant 4 : i32
    %380 = arith.muli %379, %c4_i32_156 : i32
    %381 = arith.index_cast %380 : i32 to index
    %382 = memref.load %arg1[%381] : memref<64xi32, #tpu.memory_space<smem>>
    %383 = arith.index_cast %382 : i32 to index
    %c0_157 = arith.constant 0 : index
    %384 = vector.load %arg6[%383, %c0_157] : memref<32x8xf32, #tpu.memory_space<vmem>>, vector<1x8xf32>
    %c1_i32_158 = arith.constant 1 : i32
    %385 = arith.addi %380, %c1_i32_158 : i32
    %386 = arith.index_cast %385 : i32 to index
    %387 = memref.load %arg1[%386] : memref<64xi32, #tpu.memory_space<smem>>
    %388 = arith.index_cast %387 : i32 to index
    %c0_159 = arith.constant 0 : index
    %389 = vector.load %arg6[%388, %c0_159] : memref<32x8xf32, #tpu.memory_space<vmem>>, vector<1x8xf32>
    %390 = arith.addf %384, %389 : vector<1x8xf32>
    %c2_i32_160 = arith.constant 2 : i32
    %391 = arith.addi %380, %c2_i32_160 : i32
    %392 = arith.index_cast %391 : i32 to index
    %393 = memref.load %arg1[%392] : memref<64xi32, #tpu.memory_space<smem>>
    %394 = arith.index_cast %393 : i32 to index
    %c0_161 = arith.constant 0 : index
    %395 = vector.load %arg6[%394, %c0_161] : memref<32x8xf32, #tpu.memory_space<vmem>>, vector<1x8xf32>
    %396 = arith.addf %390, %395 : vector<1x8xf32>
    %c3_i32_162 = arith.constant 3 : i32
    %397 = arith.addi %380, %c3_i32_162 : i32
    %398 = arith.index_cast %397 : i32 to index
    %399 = memref.load %arg1[%398] : memref<64xi32, #tpu.memory_space<smem>>
    %400 = arith.index_cast %399 : i32 to index
    %c0_163 = arith.constant 0 : index
    %401 = vector.load %arg6[%400, %c0_163] : memref<32x8xf32, #tpu.memory_space<vmem>>, vector<1x8xf32>
    %402 = arith.addf %396, %401 : vector<1x8xf32>
    %c1_i32_164 = arith.constant 1 : i32
    %403 = arith.addi %0, %c1_i32_164 : i32
    %c8_i32_165 = arith.constant 8 : i32
    %404 = arith.muli %403, %c8_i32_165 : i32
    %c7_i32_166 = arith.constant 7 : i32
    %405 = arith.addi %404, %c7_i32_166 : i32
    %c4_i32_167 = arith.constant 4 : i32
    %406 = arith.muli %405, %c4_i32_167 : i32
    %407 = arith.index_cast %406 : i32 to index
    %408 = memref.load %arg1[%407] : memref<64xi32, #tpu.memory_space<smem>>
    %409 = arith.index_cast %408 : i32 to index
    %c0_168 = arith.constant 0 : index
    %410 = vector.load %arg6[%409, %c0_168] : memref<32x8xf32, #tpu.memory_space<vmem>>, vector<1x8xf32>
    %c1_i32_169 = arith.constant 1 : i32
    %411 = arith.addi %406, %c1_i32_169 : i32
    %412 = arith.index_cast %411 : i32 to index
    %413 = memref.load %arg1[%412] : memref<64xi32, #tpu.memory_space<smem>>
    %414 = arith.index_cast %413 : i32 to index
    %c0_170 = arith.constant 0 : index
    %415 = vector.load %arg6[%414, %c0_170] : memref<32x8xf32, #tpu.memory_space<vmem>>, vector<1x8xf32>
    %416 = arith.addf %410, %415 : vector<1x8xf32>
    %c2_i32_171 = arith.constant 2 : i32
    %417 = arith.addi %406, %c2_i32_171 : i32
    %418 = arith.index_cast %417 : i32 to index
    %419 = memref.load %arg1[%418] : memref<64xi32, #tpu.memory_space<smem>>
    %420 = arith.index_cast %419 : i32 to index
    %c0_172 = arith.constant 0 : index
    %421 = vector.load %arg6[%420, %c0_172] : memref<32x8xf32, #tpu.memory_space<vmem>>, vector<1x8xf32>
    %422 = arith.addf %416, %421 : vector<1x8xf32>
    %c3_i32_173 = arith.constant 3 : i32
    %423 = arith.addi %406, %c3_i32_173 : i32
    %424 = arith.index_cast %423 : i32 to index
    %425 = memref.load %arg1[%424] : memref<64xi32, #tpu.memory_space<smem>>
    %426 = arith.index_cast %425 : i32 to index
    %c0_174 = arith.constant 0 : index
    %427 = vector.load %arg6[%426, %c0_174] : memref<32x8xf32, #tpu.memory_space<vmem>>, vector<1x8xf32>
    %428 = arith.addf %422, %427 : vector<1x8xf32>
    %429 = tpu.concatenate %402, %428 in 0 : vector<1x8xf32>, vector<1x8xf32> -> vector<2x8xf32>
    %c0_175 = arith.constant 0 : index
    %c0_176 = arith.constant 0 : index
    %c0_177 = arith.constant 0 : index
    %430 = vector.load %arg2[%c0_175, %c0_176, %c0_177] : memref<8x2x1xi32, #tpu.memory_space<vmem>>, vector<1x2x1xi32>
    %431 = vector.shape_cast %430 : vector<1x2x1xi32> to vector<2x1xi32>
    %432 = vector.broadcast %431 : vector<2x1xi32> to vector<2x8xi32>
    %433 = arith.cmpi eq, %5, %432 : vector<2x8xi32>
    %434 = arith.extui %433 : vector<2x8xi1> to vector<2x8xi32>
    %435 = arith.sitofp %434 : vector<2x8xi32> to vector<2x8xf32>
    %c1 = arith.constant 1 : index
    %c0_178 = arith.constant 0 : index
    %c0_179 = arith.constant 0 : index
    %436 = vector.load %arg2[%c1, %c0_178, %c0_179] : memref<8x2x1xi32, #tpu.memory_space<vmem>>, vector<1x2x1xi32>
    %437 = vector.shape_cast %436 : vector<1x2x1xi32> to vector<2x1xi32>
    %438 = vector.broadcast %437 : vector<2x1xi32> to vector<2x8xi32>
    %439 = arith.cmpi eq, %5, %438 : vector<2x8xi32>
    %440 = arith.extui %439 : vector<2x8xi1> to vector<2x8xi32>
    %441 = arith.sitofp %440 : vector<2x8xi32> to vector<2x8xf32>
    %c2 = arith.constant 2 : index
    %c0_180 = arith.constant 0 : index
    %c0_181 = arith.constant 0 : index
    %442 = vector.load %arg2[%c2, %c0_180, %c0_181] : memref<8x2x1xi32, #tpu.memory_space<vmem>>, vector<1x2x1xi32>
    %443 = vector.shape_cast %442 : vector<1x2x1xi32> to vector<2x1xi32>
    %444 = vector.broadcast %443 : vector<2x1xi32> to vector<2x8xi32>
    %445 = arith.cmpi eq, %5, %444 : vector<2x8xi32>
    %446 = arith.extui %445 : vector<2x8xi1> to vector<2x8xi32>
    %447 = arith.sitofp %446 : vector<2x8xi32> to vector<2x8xf32>
    %c3 = arith.constant 3 : index
    %c0_182 = arith.constant 0 : index
    %c0_183 = arith.constant 0 : index
    %448 = vector.load %arg2[%c3, %c0_182, %c0_183] : memref<8x2x1xi32, #tpu.memory_space<vmem>>, vector<1x2x1xi32>
    %449 = vector.shape_cast %448 : vector<1x2x1xi32> to vector<2x1xi32>
    %450 = vector.broadcast %449 : vector<2x1xi32> to vector<2x8xi32>
    %451 = arith.cmpi eq, %5, %450 : vector<2x8xi32>
    %452 = arith.extui %451 : vector<2x8xi1> to vector<2x8xi32>
    %453 = arith.sitofp %452 : vector<2x8xi32> to vector<2x8xf32>
    %c4 = arith.constant 4 : index
    %c0_184 = arith.constant 0 : index
    %c0_185 = arith.constant 0 : index
    %454 = vector.load %arg2[%c4, %c0_184, %c0_185] : memref<8x2x1xi32, #tpu.memory_space<vmem>>, vector<1x2x1xi32>
    %455 = vector.shape_cast %454 : vector<1x2x1xi32> to vector<2x1xi32>
    %456 = vector.broadcast %455 : vector<2x1xi32> to vector<2x8xi32>
    %457 = arith.cmpi eq, %5, %456 : vector<2x8xi32>
    %458 = arith.extui %457 : vector<2x8xi1> to vector<2x8xi32>
    %459 = arith.sitofp %458 : vector<2x8xi32> to vector<2x8xf32>
    %c5 = arith.constant 5 : index
    %c0_186 = arith.constant 0 : index
    %c0_187 = arith.constant 0 : index
    %460 = vector.load %arg2[%c5, %c0_186, %c0_187] : memref<8x2x1xi32, #tpu.memory_space<vmem>>, vector<1x2x1xi32>
    %461 = vector.shape_cast %460 : vector<1x2x1xi32> to vector<2x1xi32>
    %462 = vector.broadcast %461 : vector<2x1xi32> to vector<2x8xi32>
    %463 = arith.cmpi eq, %5, %462 : vector<2x8xi32>
    %464 = arith.extui %463 : vector<2x8xi1> to vector<2x8xi32>
    %465 = arith.sitofp %464 : vector<2x8xi32> to vector<2x8xf32>
    %c6 = arith.constant 6 : index
    %c0_188 = arith.constant 0 : index
    %c0_189 = arith.constant 0 : index
    %466 = vector.load %arg2[%c6, %c0_188, %c0_189] : memref<8x2x1xi32, #tpu.memory_space<vmem>>, vector<1x2x1xi32>
    %467 = vector.shape_cast %466 : vector<1x2x1xi32> to vector<2x1xi32>
    %468 = vector.broadcast %467 : vector<2x1xi32> to vector<2x8xi32>
    %469 = arith.cmpi eq, %5, %468 : vector<2x8xi32>
    %470 = arith.extui %469 : vector<2x8xi1> to vector<2x8xi32>
    %471 = arith.sitofp %470 : vector<2x8xi32> to vector<2x8xf32>
    %c7 = arith.constant 7 : index
    %c0_190 = arith.constant 0 : index
    %c0_191 = arith.constant 0 : index
    %472 = vector.load %arg2[%c7, %c0_190, %c0_191] : memref<8x2x1xi32, #tpu.memory_space<vmem>>, vector<1x2x1xi32>
    %473 = vector.shape_cast %472 : vector<1x2x1xi32> to vector<2x1xi32>
    %474 = vector.broadcast %473 : vector<2x1xi32> to vector<2x8xi32>
    %475 = arith.cmpi eq, %5, %474 : vector<2x8xi32>
    %476 = arith.extui %475 : vector<2x8xi1> to vector<2x8xi32>
    %477 = arith.sitofp %476 : vector<2x8xi32> to vector<2x8xf32>
    %c1_192 = arith.constant 1 : index
    %c0_193 = arith.constant 0 : index
    %c0_194 = arith.constant 0 : index
    %478 = vector.load %arg3[%c1_192, %c0_193, %c0_194] : memref<8x2x1xf32, #tpu.memory_space<vmem>>, vector<1x2x1xf32>
    %479 = vector.shape_cast %478 : vector<1x2x1xf32> to vector<2x1xf32>
    %c2_195 = arith.constant 2 : index
    %c0_196 = arith.constant 0 : index
    %c0_197 = arith.constant 0 : index
    %480 = vector.load %arg3[%c2_195, %c0_196, %c0_197] : memref<8x2x1xf32, #tpu.memory_space<vmem>>, vector<1x2x1xf32>
    %481 = vector.shape_cast %480 : vector<1x2x1xf32> to vector<2x1xf32>
    %c3_198 = arith.constant 3 : index
    %c0_199 = arith.constant 0 : index
    %c0_200 = arith.constant 0 : index
    %482 = vector.load %arg3[%c3_198, %c0_199, %c0_200] : memref<8x2x1xf32, #tpu.memory_space<vmem>>, vector<1x2x1xf32>
    %483 = vector.shape_cast %482 : vector<1x2x1xf32> to vector<2x1xf32>
    %c4_201 = arith.constant 4 : index
    %c0_202 = arith.constant 0 : index
    %c0_203 = arith.constant 0 : index
    %484 = vector.load %arg3[%c4_201, %c0_202, %c0_203] : memref<8x2x1xf32, #tpu.memory_space<vmem>>, vector<1x2x1xf32>
    %485 = vector.shape_cast %484 : vector<1x2x1xf32> to vector<2x1xf32>
    %c5_204 = arith.constant 5 : index
    %c0_205 = arith.constant 0 : index
    %c0_206 = arith.constant 0 : index
    %486 = vector.load %arg3[%c5_204, %c0_205, %c0_206] : memref<8x2x1xf32, #tpu.memory_space<vmem>>, vector<1x2x1xf32>
    %487 = vector.shape_cast %486 : vector<1x2x1xf32> to vector<2x1xf32>
    %c6_207 = arith.constant 6 : index
    %c0_208 = arith.constant 0 : index
    %c0_209 = arith.constant 0 : index
    %488 = vector.load %arg3[%c6_207, %c0_208, %c0_209] : memref<8x2x1xf32, #tpu.memory_space<vmem>>, vector<1x2x1xf32>
    %489 = vector.shape_cast %488 : vector<1x2x1xf32> to vector<2x1xf32>
    %c7_210 = arith.constant 7 : index
    %c0_211 = arith.constant 0 : index
    %c0_212 = arith.constant 0 : index
    %490 = vector.load %arg3[%c7_210, %c0_211, %c0_212] : memref<8x2x1xf32, #tpu.memory_space<vmem>>, vector<1x2x1xf32>
    %491 = vector.shape_cast %490 : vector<1x2x1xf32> to vector<2x1xf32>
    %c0_213 = arith.constant 0 : index
    %c0_214 = arith.constant 0 : index
    %492 = vector.load %arg4[%c0_213, %c0_214] : memref<2x1xi32, #tpu.memory_space<vmem>>, vector<2x1xi32>
    %493 = vector.broadcast %492 : vector<2x1xi32> to vector<2x8xi32>
    %494 = arith.cmpi eq, %5, %493 : vector<2x8xi32>
    %495 = arith.extui %494 : vector<2x8xi1> to vector<2x8xi32>
    %496 = arith.sitofp %495 : vector<2x8xi32> to vector<2x8xf32>
    %497 = vector.broadcast %1 : vector<1x8xf32> to vector<2x8xf32>
    %498 = arith.mulf %435, %497 : vector<2x8xf32>
    %cst = arith.constant dense<0.000000e+00> : vector<2xf32>
    %499 = vector.multi_reduction <add>, %498, %cst [1] : vector<2x8xf32> to vector<2xf32>
    %500 = vector.shape_cast %499 : vector<2xf32> to vector<2x1xf32>
    %501 = arith.mulf %435, %58 : vector<2x8xf32>
    %cst_215 = arith.constant dense<0.000000e+00> : vector<2xf32>
    %502 = vector.multi_reduction <add>, %501, %cst_215 [1] : vector<2x8xf32> to vector<2xf32>
    %503 = vector.shape_cast %502 : vector<2xf32> to vector<2x1xf32>
    %504 = arith.addf %500, %503 : vector<2x1xf32>
    %505 = vector.broadcast %2 : vector<1x8xf32> to vector<2x8xf32>
    %506 = arith.mulf %496, %505 : vector<2x8xf32>
    %cst_216 = arith.constant dense<0.000000e+00> : vector<2xf32>
    %507 = vector.multi_reduction <add>, %506, %cst_216 [1] : vector<2x8xf32> to vector<2xf32>
    %508 = vector.shape_cast %507 : vector<2xf32> to vector<2x1xf32>
    %509 = arith.addf %504, %508 : vector<2x1xf32>
    %cst_217 = arith.constant 0.000000e+00 : f32
    %510 = vector.broadcast %cst_217 : f32 to vector<2x1xf32>
    %511 = arith.mulf %441, %111 : vector<2x8xf32>
    %cst_218 = arith.constant dense<0.000000e+00> : vector<2xf32>
    %512 = vector.multi_reduction <add>, %511, %cst_218 [1] : vector<2x8xf32> to vector<2xf32>
    %513 = vector.shape_cast %512 : vector<2xf32> to vector<2x1xf32>
    %514 = arith.mulf %479, %513 : vector<2x1xf32>
    %515 = arith.addf %510, %514 : vector<2x1xf32>
    %516 = arith.mulf %447, %164 : vector<2x8xf32>
    %cst_219 = arith.constant dense<0.000000e+00> : vector<2xf32>
    %517 = vector.multi_reduction <add>, %516, %cst_219 [1] : vector<2x8xf32> to vector<2xf32>
    %518 = vector.shape_cast %517 : vector<2xf32> to vector<2x1xf32>
    %519 = arith.mulf %481, %518 : vector<2x1xf32>
    %520 = arith.addf %515, %519 : vector<2x1xf32>
    %521 = arith.mulf %453, %217 : vector<2x8xf32>
    %cst_220 = arith.constant dense<0.000000e+00> : vector<2xf32>
    %522 = vector.multi_reduction <add>, %521, %cst_220 [1] : vector<2x8xf32> to vector<2xf32>
    %523 = vector.shape_cast %522 : vector<2xf32> to vector<2x1xf32>
    %524 = arith.mulf %483, %523 : vector<2x1xf32>
    %525 = arith.addf %520, %524 : vector<2x1xf32>
    %526 = arith.mulf %459, %270 : vector<2x8xf32>
    %cst_221 = arith.constant dense<0.000000e+00> : vector<2xf32>
    %527 = vector.multi_reduction <add>, %526, %cst_221 [1] : vector<2x8xf32> to vector<2xf32>
    %528 = vector.shape_cast %527 : vector<2xf32> to vector<2x1xf32>
    %529 = arith.mulf %485, %528 : vector<2x1xf32>
    %530 = arith.addf %525, %529 : vector<2x1xf32>
    %531 = arith.mulf %465, %323 : vector<2x8xf32>
    %cst_222 = arith.constant dense<0.000000e+00> : vector<2xf32>
    %532 = vector.multi_reduction <add>, %531, %cst_222 [1] : vector<2x8xf32> to vector<2xf32>
    %533 = vector.shape_cast %532 : vector<2xf32> to vector<2x1xf32>
    %534 = arith.mulf %487, %533 : vector<2x1xf32>
    %535 = arith.addf %530, %534 : vector<2x1xf32>
    %536 = arith.mulf %471, %376 : vector<2x8xf32>
    %cst_223 = arith.constant dense<0.000000e+00> : vector<2xf32>
    %537 = vector.multi_reduction <add>, %536, %cst_223 [1] : vector<2x8xf32> to vector<2xf32>
    %538 = vector.shape_cast %537 : vector<2xf32> to vector<2x1xf32>
    %539 = arith.mulf %489, %538 : vector<2x1xf32>
    %540 = arith.addf %535, %539 : vector<2x1xf32>
    %541 = arith.mulf %477, %429 : vector<2x8xf32>
    %cst_224 = arith.constant dense<0.000000e+00> : vector<2xf32>
    %542 = vector.multi_reduction <add>, %541, %cst_224 [1] : vector<2x8xf32> to vector<2xf32>
    %543 = vector.shape_cast %542 : vector<2xf32> to vector<2x1xf32>
    %544 = arith.mulf %491, %543 : vector<2x1xf32>
    %545 = arith.addf %540, %544 : vector<2x1xf32>
    %546 = tpu.concatenate %441, %447, %453, %459, %465, %471, %477 in 0 : vector<2x8xf32>, vector<2x8xf32>, vector<2x8xf32>, vector<2x8xf32>, vector<2x8xf32>, vector<2x8xf32>, vector<2x8xf32> -> vector<14x8xf32>
    %547 = tpu.concatenate %435, %441, %447, %453, %459, %465, %471 in 0 : vector<2x8xf32>, vector<2x8xf32>, vector<2x8xf32>, vector<2x8xf32>, vector<2x8xf32>, vector<2x8xf32>, vector<2x8xf32> -> vector<14x8xf32>
    %548 = tpu.concatenate %479, %481, %483, %485, %487, %489, %491 in 0 : vector<2x1xf32>, vector<2x1xf32>, vector<2x1xf32>, vector<2x1xf32>, vector<2x1xf32>, vector<2x1xf32>, vector<2x1xf32> -> vector<14x1xf32>
    %cst_225 = arith.constant dense<0.000000e+00> : vector<14x8xf32>
    %549 = tpu.matmul %546, %3, %cst_225 {dimension_numbers = #tpu.dot_dimension_numbers<[1], [0], [0], [1], [0, 0, 1, 1], [], []>} : vector<14x8xf32>, vector<8x8xf32>, vector<14x8xf32> -> vector<14x8xf32>
    %550 = arith.mulf %549, %547 : vector<14x8xf32>
    %551 = vector.broadcast %548 : vector<14x1xf32> to vector<14x8xf32>
    %552 = arith.mulf %550, %551 : vector<14x8xf32>
    %cst_226 = arith.constant dense<0.000000e+00> : vector<14xf32>
    %553 = vector.multi_reduction <add>, %552, %cst_226 [1] : vector<14x8xf32> to vector<14xf32>
    %554 = vector.shape_cast %553 : vector<14xf32> to vector<14x1xf32>
    %cst_227 = arith.constant dense<0.000000e+00> : vector<1xf32>
    %555 = vector.multi_reduction <add>, %554, %cst_227 [0] : vector<14x1xf32> to vector<1xf32>
    %556 = vector.shape_cast %555 : vector<1xf32> to vector<1x1xf32>
    %557 = vector.broadcast %1 : vector<1x8xf32> to vector<2x8xf32>
    %558 = arith.addf %557, %58 : vector<2x8xf32>
    %559 = vector.extract_strided_slice %3 {offsets = [0, 0], sizes = [1, 8], strides = [1, 1]} : vector<8x8xf32> to vector<1x8xf32>
    %560 = vector.broadcast %559 : vector<1x8xf32> to vector<2x8xf32>
    %561 = arith.addf %558, %560 : vector<2x8xf32>
    %cst_228 = arith.constant dense<0xFF800000> : vector<2xf32>
    %562 = vector.multi_reduction <maximumf>, %561, %cst_228 [1] : vector<2x8xf32> to vector<2xf32>
    %563 = vector.shape_cast %562 : vector<2xf32> to vector<2x1xf32>
    %564 = vector.broadcast %563 : vector<2x1xf32> to vector<2x8xf32>
    %565 = arith.subf %561, %564 : vector<2x8xf32>
    %566 = math.exp %565 : vector<2x8xf32>
    %cst_229 = arith.constant dense<0.000000e+00> : vector<2xf32>
    %567 = vector.multi_reduction <add>, %566, %cst_229 [1] : vector<2x8xf32> to vector<2xf32>
    %568 = vector.shape_cast %567 : vector<2xf32> to vector<2x1xf32>
    %569 = math.log %568 : vector<2x1xf32>
    %570 = arith.addf %563, %569 : vector<2x1xf32>
    %571 = vector.extract_strided_slice %3 {offsets = [1, 0], sizes = [1, 8], strides = [1, 1]} : vector<8x8xf32> to vector<1x8xf32>
    %572 = vector.broadcast %571 : vector<1x8xf32> to vector<2x8xf32>
    %573 = arith.addf %558, %572 : vector<2x8xf32>
    %cst_230 = arith.constant dense<0xFF800000> : vector<2xf32>
    %574 = vector.multi_reduction <maximumf>, %573, %cst_230 [1] : vector<2x8xf32> to vector<2xf32>
    %575 = vector.shape_cast %574 : vector<2xf32> to vector<2x1xf32>
    %576 = vector.broadcast %575 : vector<2x1xf32> to vector<2x8xf32>
    %577 = arith.subf %573, %576 : vector<2x8xf32>
    %578 = math.exp %577 : vector<2x8xf32>
    %cst_231 = arith.constant dense<0.000000e+00> : vector<2xf32>
    %579 = vector.multi_reduction <add>, %578, %cst_231 [1] : vector<2x8xf32> to vector<2xf32>
    %580 = vector.shape_cast %579 : vector<2xf32> to vector<2x1xf32>
    %581 = math.log %580 : vector<2x1xf32>
    %582 = arith.addf %575, %581 : vector<2x1xf32>
    %583 = vector.extract_strided_slice %3 {offsets = [2, 0], sizes = [1, 8], strides = [1, 1]} : vector<8x8xf32> to vector<1x8xf32>
    %584 = vector.broadcast %583 : vector<1x8xf32> to vector<2x8xf32>
    %585 = arith.addf %558, %584 : vector<2x8xf32>
    %cst_232 = arith.constant dense<0xFF800000> : vector<2xf32>
    %586 = vector.multi_reduction <maximumf>, %585, %cst_232 [1] : vector<2x8xf32> to vector<2xf32>
    %587 = vector.shape_cast %586 : vector<2xf32> to vector<2x1xf32>
    %588 = vector.broadcast %587 : vector<2x1xf32> to vector<2x8xf32>
    %589 = arith.subf %585, %588 : vector<2x8xf32>
    %590 = math.exp %589 : vector<2x8xf32>
    %cst_233 = arith.constant dense<0.000000e+00> : vector<2xf32>
    %591 = vector.multi_reduction <add>, %590, %cst_233 [1] : vector<2x8xf32> to vector<2xf32>
    %592 = vector.shape_cast %591 : vector<2xf32> to vector<2x1xf32>
    %593 = math.log %592 : vector<2x1xf32>
    %594 = arith.addf %587, %593 : vector<2x1xf32>
    %595 = vector.extract_strided_slice %3 {offsets = [3, 0], sizes = [1, 8], strides = [1, 1]} : vector<8x8xf32> to vector<1x8xf32>
    %596 = vector.broadcast %595 : vector<1x8xf32> to vector<2x8xf32>
    %597 = arith.addf %558, %596 : vector<2x8xf32>
    %cst_234 = arith.constant dense<0xFF800000> : vector<2xf32>
    %598 = vector.multi_reduction <maximumf>, %597, %cst_234 [1] : vector<2x8xf32> to vector<2xf32>
    %599 = vector.shape_cast %598 : vector<2xf32> to vector<2x1xf32>
    %600 = vector.broadcast %599 : vector<2x1xf32> to vector<2x8xf32>
    %601 = arith.subf %597, %600 : vector<2x8xf32>
    %602 = math.exp %601 : vector<2x8xf32>
    %cst_235 = arith.constant dense<0.000000e+00> : vector<2xf32>
    %603 = vector.multi_reduction <add>, %602, %cst_235 [1] : vector<2x8xf32> to vector<2xf32>
    %604 = vector.shape_cast %603 : vector<2xf32> to vector<2x1xf32>
    %605 = math.log %604 : vector<2x1xf32>
    %606 = arith.addf %599, %605 : vector<2x1xf32>
    %607 = vector.extract_strided_slice %3 {offsets = [4, 0], sizes = [1, 8], strides = [1, 1]} : vector<8x8xf32> to vector<1x8xf32>
    %608 = vector.broadcast %607 : vector<1x8xf32> to vector<2x8xf32>
    %609 = arith.addf %558, %608 : vector<2x8xf32>
    %cst_236 = arith.constant dense<0xFF800000> : vector<2xf32>
    %610 = vector.multi_reduction <maximumf>, %609, %cst_236 [1] : vector<2x8xf32> to vector<2xf32>
    %611 = vector.shape_cast %610 : vector<2xf32> to vector<2x1xf32>
    %612 = vector.broadcast %611 : vector<2x1xf32> to vector<2x8xf32>
    %613 = arith.subf %609, %612 : vector<2x8xf32>
    %614 = math.exp %613 : vector<2x8xf32>
    %cst_237 = arith.constant dense<0.000000e+00> : vector<2xf32>
    %615 = vector.multi_reduction <add>, %614, %cst_237 [1] : vector<2x8xf32> to vector<2xf32>
    %616 = vector.shape_cast %615 : vector<2xf32> to vector<2x1xf32>
    %617 = math.log %616 : vector<2x1xf32>
    %618 = arith.addf %611, %617 : vector<2x1xf32>
    %619 = vector.extract_strided_slice %3 {offsets = [5, 0], sizes = [1, 8], strides = [1, 1]} : vector<8x8xf32> to vector<1x8xf32>
    %620 = vector.broadcast %619 : vector<1x8xf32> to vector<2x8xf32>
    %621 = arith.addf %558, %620 : vector<2x8xf32>
    %cst_238 = arith.constant dense<0xFF800000> : vector<2xf32>
    %622 = vector.multi_reduction <maximumf>, %621, %cst_238 [1] : vector<2x8xf32> to vector<2xf32>
    %623 = vector.shape_cast %622 : vector<2xf32> to vector<2x1xf32>
    %624 = vector.broadcast %623 : vector<2x1xf32> to vector<2x8xf32>
    %625 = arith.subf %621, %624 : vector<2x8xf32>
    %626 = math.exp %625 : vector<2x8xf32>
    %cst_239 = arith.constant dense<0.000000e+00> : vector<2xf32>
    %627 = vector.multi_reduction <add>, %626, %cst_239 [1] : vector<2x8xf32> to vector<2xf32>
    %628 = vector.shape_cast %627 : vector<2xf32> to vector<2x1xf32>
    %629 = math.log %628 : vector<2x1xf32>
    %630 = arith.addf %623, %629 : vector<2x1xf32>
    %631 = vector.extract_strided_slice %3 {offsets = [6, 0], sizes = [1, 8], strides = [1, 1]} : vector<8x8xf32> to vector<1x8xf32>
    %632 = vector.broadcast %631 : vector<1x8xf32> to vector<2x8xf32>
    %633 = arith.addf %558, %632 : vector<2x8xf32>
    %cst_240 = arith.constant dense<0xFF800000> : vector<2xf32>
    %634 = vector.multi_reduction <maximumf>, %633, %cst_240 [1] : vector<2x8xf32> to vector<2xf32>
    %635 = vector.shape_cast %634 : vector<2xf32> to vector<2x1xf32>
    %636 = vector.broadcast %635 : vector<2x1xf32> to vector<2x8xf32>
    %637 = arith.subf %633, %636 : vector<2x8xf32>
    %638 = math.exp %637 : vector<2x8xf32>
    %cst_241 = arith.constant dense<0.000000e+00> : vector<2xf32>
    %639 = vector.multi_reduction <add>, %638, %cst_241 [1] : vector<2x8xf32> to vector<2xf32>
    %640 = vector.shape_cast %639 : vector<2xf32> to vector<2x1xf32>
    %641 = math.log %640 : vector<2x1xf32>
    %642 = arith.addf %635, %641 : vector<2x1xf32>
    %643 = vector.extract_strided_slice %3 {offsets = [7, 0], sizes = [1, 8], strides = [1, 1]} : vector<8x8xf32> to vector<1x8xf32>
    %644 = vector.broadcast %643 : vector<1x8xf32> to vector<2x8xf32>
    %645 = arith.addf %558, %644 : vector<2x8xf32>
    %cst_242 = arith.constant dense<0xFF800000> : vector<2xf32>
    %646 = vector.multi_reduction <maximumf>, %645, %cst_242 [1] : vector<2x8xf32> to vector<2xf32>
    %647 = vector.shape_cast %646 : vector<2xf32> to vector<2x1xf32>
    %648 = vector.broadcast %647 : vector<2x1xf32> to vector<2x8xf32>
    %649 = arith.subf %645, %648 : vector<2x8xf32>
    %650 = math.exp %649 : vector<2x8xf32>
    %cst_243 = arith.constant dense<0.000000e+00> : vector<2xf32>
    %651 = vector.multi_reduction <add>, %650, %cst_243 [1] : vector<2x8xf32> to vector<2xf32>
    %652 = vector.shape_cast %651 : vector<2xf32> to vector<2x1xf32>
    %653 = math.log %652 : vector<2x1xf32>
    %654 = arith.addf %647, %653 : vector<2x1xf32>
    %655 = tpu.concatenate %570, %582, %594, %606, %618, %630, %642, %654 in 1 : vector<2x1xf32>, vector<2x1xf32>, vector<2x1xf32>, vector<2x1xf32>, vector<2x1xf32>, vector<2x1xf32>, vector<2x1xf32>, vector<2x1xf32> -> vector<2x8xf32>
    %656 = arith.addf %655, %111 : vector<2x8xf32>
    %cst_244 = arith.constant 0.000000e+00 : f32
    %657 = vector.broadcast %cst_244 : f32 to vector<2x1xf32>
    %658 = arith.cmpf ogt, %479, %657 : vector<2x1xf32>
    %659 = vector.shape_cast %658 : vector<2x1xi1> to vector<2x1xi1>
    %660 = vector.broadcast %659 : vector<2x1xi1> to vector<2x8xi1>
    %661 = arith.select %660, %656, %558 : vector<2x8xi1>, vector<2x8xf32>
    %662 = vector.extract_strided_slice %3 {offsets = [0, 0], sizes = [1, 8], strides = [1, 1]} : vector<8x8xf32> to vector<1x8xf32>
    %663 = vector.broadcast %662 : vector<1x8xf32> to vector<2x8xf32>
    %664 = arith.addf %661, %663 : vector<2x8xf32>
    %cst_245 = arith.constant dense<0xFF800000> : vector<2xf32>
    %665 = vector.multi_reduction <maximumf>, %664, %cst_245 [1] : vector<2x8xf32> to vector<2xf32>
    %666 = vector.shape_cast %665 : vector<2xf32> to vector<2x1xf32>
    %667 = vector.broadcast %666 : vector<2x1xf32> to vector<2x8xf32>
    %668 = arith.subf %664, %667 : vector<2x8xf32>
    %669 = math.exp %668 : vector<2x8xf32>
    %cst_246 = arith.constant dense<0.000000e+00> : vector<2xf32>
    %670 = vector.multi_reduction <add>, %669, %cst_246 [1] : vector<2x8xf32> to vector<2xf32>
    %671 = vector.shape_cast %670 : vector<2xf32> to vector<2x1xf32>
    %672 = math.log %671 : vector<2x1xf32>
    %673 = arith.addf %666, %672 : vector<2x1xf32>
    %674 = vector.extract_strided_slice %3 {offsets = [1, 0], sizes = [1, 8], strides = [1, 1]} : vector<8x8xf32> to vector<1x8xf32>
    %675 = vector.broadcast %674 : vector<1x8xf32> to vector<2x8xf32>
    %676 = arith.addf %661, %675 : vector<2x8xf32>
    %cst_247 = arith.constant dense<0xFF800000> : vector<2xf32>
    %677 = vector.multi_reduction <maximumf>, %676, %cst_247 [1] : vector<2x8xf32> to vector<2xf32>
    %678 = vector.shape_cast %677 : vector<2xf32> to vector<2x1xf32>
    %679 = vector.broadcast %678 : vector<2x1xf32> to vector<2x8xf32>
    %680 = arith.subf %676, %679 : vector<2x8xf32>
    %681 = math.exp %680 : vector<2x8xf32>
    %cst_248 = arith.constant dense<0.000000e+00> : vector<2xf32>
    %682 = vector.multi_reduction <add>, %681, %cst_248 [1] : vector<2x8xf32> to vector<2xf32>
    %683 = vector.shape_cast %682 : vector<2xf32> to vector<2x1xf32>
    %684 = math.log %683 : vector<2x1xf32>
    %685 = arith.addf %678, %684 : vector<2x1xf32>
    %686 = vector.extract_strided_slice %3 {offsets = [2, 0], sizes = [1, 8], strides = [1, 1]} : vector<8x8xf32> to vector<1x8xf32>
    %687 = vector.broadcast %686 : vector<1x8xf32> to vector<2x8xf32>
    %688 = arith.addf %661, %687 : vector<2x8xf32>
    %cst_249 = arith.constant dense<0xFF800000> : vector<2xf32>
    %689 = vector.multi_reduction <maximumf>, %688, %cst_249 [1] : vector<2x8xf32> to vector<2xf32>
    %690 = vector.shape_cast %689 : vector<2xf32> to vector<2x1xf32>
    %691 = vector.broadcast %690 : vector<2x1xf32> to vector<2x8xf32>
    %692 = arith.subf %688, %691 : vector<2x8xf32>
    %693 = math.exp %692 : vector<2x8xf32>
    %cst_250 = arith.constant dense<0.000000e+00> : vector<2xf32>
    %694 = vector.multi_reduction <add>, %693, %cst_250 [1] : vector<2x8xf32> to vector<2xf32>
    %695 = vector.shape_cast %694 : vector<2xf32> to vector<2x1xf32>
    %696 = math.log %695 : vector<2x1xf32>
    %697 = arith.addf %690, %696 : vector<2x1xf32>
    %698 = vector.extract_strided_slice %3 {offsets = [3, 0], sizes = [1, 8], strides = [1, 1]} : vector<8x8xf32> to vector<1x8xf32>
    %699 = vector.broadcast %698 : vector<1x8xf32> to vector<2x8xf32>
    %700 = arith.addf %661, %699 : vector<2x8xf32>
    %cst_251 = arith.constant dense<0xFF800000> : vector<2xf32>
    %701 = vector.multi_reduction <maximumf>, %700, %cst_251 [1] : vector<2x8xf32> to vector<2xf32>
    %702 = vector.shape_cast %701 : vector<2xf32> to vector<2x1xf32>
    %703 = vector.broadcast %702 : vector<2x1xf32> to vector<2x8xf32>
    %704 = arith.subf %700, %703 : vector<2x8xf32>
    %705 = math.exp %704 : vector<2x8xf32>
    %cst_252 = arith.constant dense<0.000000e+00> : vector<2xf32>
    %706 = vector.multi_reduction <add>, %705, %cst_252 [1] : vector<2x8xf32> to vector<2xf32>
    %707 = vector.shape_cast %706 : vector<2xf32> to vector<2x1xf32>
    %708 = math.log %707 : vector<2x1xf32>
    %709 = arith.addf %702, %708 : vector<2x1xf32>
    %710 = vector.extract_strided_slice %3 {offsets = [4, 0], sizes = [1, 8], strides = [1, 1]} : vector<8x8xf32> to vector<1x8xf32>
    %711 = vector.broadcast %710 : vector<1x8xf32> to vector<2x8xf32>
    %712 = arith.addf %661, %711 : vector<2x8xf32>
    %cst_253 = arith.constant dense<0xFF800000> : vector<2xf32>
    %713 = vector.multi_reduction <maximumf>, %712, %cst_253 [1] : vector<2x8xf32> to vector<2xf32>
    %714 = vector.shape_cast %713 : vector<2xf32> to vector<2x1xf32>
    %715 = vector.broadcast %714 : vector<2x1xf32> to vector<2x8xf32>
    %716 = arith.subf %712, %715 : vector<2x8xf32>
    %717 = math.exp %716 : vector<2x8xf32>
    %cst_254 = arith.constant dense<0.000000e+00> : vector<2xf32>
    %718 = vector.multi_reduction <add>, %717, %cst_254 [1] : vector<2x8xf32> to vector<2xf32>
    %719 = vector.shape_cast %718 : vector<2xf32> to vector<2x1xf32>
    %720 = math.log %719 : vector<2x1xf32>
    %721 = arith.addf %714, %720 : vector<2x1xf32>
    %722 = vector.extract_strided_slice %3 {offsets = [5, 0], sizes = [1, 8], strides = [1, 1]} : vector<8x8xf32> to vector<1x8xf32>
    %723 = vector.broadcast %722 : vector<1x8xf32> to vector<2x8xf32>
    %724 = arith.addf %661, %723 : vector<2x8xf32>
    %cst_255 = arith.constant dense<0xFF800000> : vector<2xf32>
    %725 = vector.multi_reduction <maximumf>, %724, %cst_255 [1] : vector<2x8xf32> to vector<2xf32>
    %726 = vector.shape_cast %725 : vector<2xf32> to vector<2x1xf32>
    %727 = vector.broadcast %726 : vector<2x1xf32> to vector<2x8xf32>
    %728 = arith.subf %724, %727 : vector<2x8xf32>
    %729 = math.exp %728 : vector<2x8xf32>
    %cst_256 = arith.constant dense<0.000000e+00> : vector<2xf32>
    %730 = vector.multi_reduction <add>, %729, %cst_256 [1] : vector<2x8xf32> to vector<2xf32>
    %731 = vector.shape_cast %730 : vector<2xf32> to vector<2x1xf32>
    %732 = math.log %731 : vector<2x1xf32>
    %733 = arith.addf %726, %732 : vector<2x1xf32>
    %734 = vector.extract_strided_slice %3 {offsets = [6, 0], sizes = [1, 8], strides = [1, 1]} : vector<8x8xf32> to vector<1x8xf32>
    %735 = vector.broadcast %734 : vector<1x8xf32> to vector<2x8xf32>
    %736 = arith.addf %661, %735 : vector<2x8xf32>
    %cst_257 = arith.constant dense<0xFF800000> : vector<2xf32>
    %737 = vector.multi_reduction <maximumf>, %736, %cst_257 [1] : vector<2x8xf32> to vector<2xf32>
    %738 = vector.shape_cast %737 : vector<2xf32> to vector<2x1xf32>
    %739 = vector.broadcast %738 : vector<2x1xf32> to vector<2x8xf32>
    %740 = arith.subf %736, %739 : vector<2x8xf32>
    %741 = math.exp %740 : vector<2x8xf32>
    %cst_258 = arith.constant dense<0.000000e+00> : vector<2xf32>
    %742 = vector.multi_reduction <add>, %741, %cst_258 [1] : vector<2x8xf32> to vector<2xf32>
    %743 = vector.shape_cast %742 : vector<2xf32> to vector<2x1xf32>
    %744 = math.log %743 : vector<2x1xf32>
    %745 = arith.addf %738, %744 : vector<2x1xf32>
    %746 = vector.extract_strided_slice %3 {offsets = [7, 0], sizes = [1, 8], strides = [1, 1]} : vector<8x8xf32> to vector<1x8xf32>
    %747 = vector.broadcast %746 : vector<1x8xf32> to vector<2x8xf32>
    %748 = arith.addf %661, %747 : vector<2x8xf32>
    %cst_259 = arith.constant dense<0xFF800000> : vector<2xf32>
    %749 = vector.multi_reduction <maximumf>, %748, %cst_259 [1] : vector<2x8xf32> to vector<2xf32>
    %750 = vector.shape_cast %749 : vector<2xf32> to vector<2x1xf32>
    %751 = vector.broadcast %750 : vector<2x1xf32> to vector<2x8xf32>
    %752 = arith.subf %748, %751 : vector<2x8xf32>
    %753 = math.exp %752 : vector<2x8xf32>
    %cst_260 = arith.constant dense<0.000000e+00> : vector<2xf32>
    %754 = vector.multi_reduction <add>, %753, %cst_260 [1] : vector<2x8xf32> to vector<2xf32>
    %755 = vector.shape_cast %754 : vector<2xf32> to vector<2x1xf32>
    %756 = math.log %755 : vector<2x1xf32>
    %757 = arith.addf %750, %756 : vector<2x1xf32>
    %758 = tpu.concatenate %673, %685, %697, %709, %721, %733, %745, %757 in 1 : vector<2x1xf32>, vector<2x1xf32>, vector<2x1xf32>, vector<2x1xf32>, vector<2x1xf32>, vector<2x1xf32>, vector<2x1xf32>, vector<2x1xf32> -> vector<2x8xf32>
    %759 = arith.addf %758, %164 : vector<2x8xf32>
    %cst_261 = arith.constant 0.000000e+00 : f32
    %760 = vector.broadcast %cst_261 : f32 to vector<2x1xf32>
    %761 = arith.cmpf ogt, %481, %760 : vector<2x1xf32>
    %762 = vector.shape_cast %761 : vector<2x1xi1> to vector<2x1xi1>
    %763 = vector.broadcast %762 : vector<2x1xi1> to vector<2x8xi1>
    %764 = arith.select %763, %759, %661 : vector<2x8xi1>, vector<2x8xf32>
    %765 = vector.extract_strided_slice %3 {offsets = [0, 0], sizes = [1, 8], strides = [1, 1]} : vector<8x8xf32> to vector<1x8xf32>
    %766 = vector.broadcast %765 : vector<1x8xf32> to vector<2x8xf32>
    %767 = arith.addf %764, %766 : vector<2x8xf32>
    %cst_262 = arith.constant dense<0xFF800000> : vector<2xf32>
    %768 = vector.multi_reduction <maximumf>, %767, %cst_262 [1] : vector<2x8xf32> to vector<2xf32>
    %769 = vector.shape_cast %768 : vector<2xf32> to vector<2x1xf32>
    %770 = vector.broadcast %769 : vector<2x1xf32> to vector<2x8xf32>
    %771 = arith.subf %767, %770 : vector<2x8xf32>
    %772 = math.exp %771 : vector<2x8xf32>
    %cst_263 = arith.constant dense<0.000000e+00> : vector<2xf32>
    %773 = vector.multi_reduction <add>, %772, %cst_263 [1] : vector<2x8xf32> to vector<2xf32>
    %774 = vector.shape_cast %773 : vector<2xf32> to vector<2x1xf32>
    %775 = math.log %774 : vector<2x1xf32>
    %776 = arith.addf %769, %775 : vector<2x1xf32>
    %777 = vector.extract_strided_slice %3 {offsets = [1, 0], sizes = [1, 8], strides = [1, 1]} : vector<8x8xf32> to vector<1x8xf32>
    %778 = vector.broadcast %777 : vector<1x8xf32> to vector<2x8xf32>
    %779 = arith.addf %764, %778 : vector<2x8xf32>
    %cst_264 = arith.constant dense<0xFF800000> : vector<2xf32>
    %780 = vector.multi_reduction <maximumf>, %779, %cst_264 [1] : vector<2x8xf32> to vector<2xf32>
    %781 = vector.shape_cast %780 : vector<2xf32> to vector<2x1xf32>
    %782 = vector.broadcast %781 : vector<2x1xf32> to vector<2x8xf32>
    %783 = arith.subf %779, %782 : vector<2x8xf32>
    %784 = math.exp %783 : vector<2x8xf32>
    %cst_265 = arith.constant dense<0.000000e+00> : vector<2xf32>
    %785 = vector.multi_reduction <add>, %784, %cst_265 [1] : vector<2x8xf32> to vector<2xf32>
    %786 = vector.shape_cast %785 : vector<2xf32> to vector<2x1xf32>
    %787 = math.log %786 : vector<2x1xf32>
    %788 = arith.addf %781, %787 : vector<2x1xf32>
    %789 = vector.extract_strided_slice %3 {offsets = [2, 0], sizes = [1, 8], strides = [1, 1]} : vector<8x8xf32> to vector<1x8xf32>
    %790 = vector.broadcast %789 : vector<1x8xf32> to vector<2x8xf32>
    %791 = arith.addf %764, %790 : vector<2x8xf32>
    %cst_266 = arith.constant dense<0xFF800000> : vector<2xf32>
    %792 = vector.multi_reduction <maximumf>, %791, %cst_266 [1] : vector<2x8xf32> to vector<2xf32>
    %793 = vector.shape_cast %792 : vector<2xf32> to vector<2x1xf32>
    %794 = vector.broadcast %793 : vector<2x1xf32> to vector<2x8xf32>
    %795 = arith.subf %791, %794 : vector<2x8xf32>
    %796 = math.exp %795 : vector<2x8xf32>
    %cst_267 = arith.constant dense<0.000000e+00> : vector<2xf32>
    %797 = vector.multi_reduction <add>, %796, %cst_267 [1] : vector<2x8xf32> to vector<2xf32>
    %798 = vector.shape_cast %797 : vector<2xf32> to vector<2x1xf32>
    %799 = math.log %798 : vector<2x1xf32>
    %800 = arith.addf %793, %799 : vector<2x1xf32>
    %801 = vector.extract_strided_slice %3 {offsets = [3, 0], sizes = [1, 8], strides = [1, 1]} : vector<8x8xf32> to vector<1x8xf32>
    %802 = vector.broadcast %801 : vector<1x8xf32> to vector<2x8xf32>
    %803 = arith.addf %764, %802 : vector<2x8xf32>
    %cst_268 = arith.constant dense<0xFF800000> : vector<2xf32>
    %804 = vector.multi_reduction <maximumf>, %803, %cst_268 [1] : vector<2x8xf32> to vector<2xf32>
    %805 = vector.shape_cast %804 : vector<2xf32> to vector<2x1xf32>
    %806 = vector.broadcast %805 : vector<2x1xf32> to vector<2x8xf32>
    %807 = arith.subf %803, %806 : vector<2x8xf32>
    %808 = math.exp %807 : vector<2x8xf32>
    %cst_269 = arith.constant dense<0.000000e+00> : vector<2xf32>
    %809 = vector.multi_reduction <add>, %808, %cst_269 [1] : vector<2x8xf32> to vector<2xf32>
    %810 = vector.shape_cast %809 : vector<2xf32> to vector<2x1xf32>
    %811 = math.log %810 : vector<2x1xf32>
    %812 = arith.addf %805, %811 : vector<2x1xf32>
    %813 = vector.extract_strided_slice %3 {offsets = [4, 0], sizes = [1, 8], strides = [1, 1]} : vector<8x8xf32> to vector<1x8xf32>
    %814 = vector.broadcast %813 : vector<1x8xf32> to vector<2x8xf32>
    %815 = arith.addf %764, %814 : vector<2x8xf32>
    %cst_270 = arith.constant dense<0xFF800000> : vector<2xf32>
    %816 = vector.multi_reduction <maximumf>, %815, %cst_270 [1] : vector<2x8xf32> to vector<2xf32>
    %817 = vector.shape_cast %816 : vector<2xf32> to vector<2x1xf32>
    %818 = vector.broadcast %817 : vector<2x1xf32> to vector<2x8xf32>
    %819 = arith.subf %815, %818 : vector<2x8xf32>
    %820 = math.exp %819 : vector<2x8xf32>
    %cst_271 = arith.constant dense<0.000000e+00> : vector<2xf32>
    %821 = vector.multi_reduction <add>, %820, %cst_271 [1] : vector<2x8xf32> to vector<2xf32>
    %822 = vector.shape_cast %821 : vector<2xf32> to vector<2x1xf32>
    %823 = math.log %822 : vector<2x1xf32>
    %824 = arith.addf %817, %823 : vector<2x1xf32>
    %825 = vector.extract_strided_slice %3 {offsets = [5, 0], sizes = [1, 8], strides = [1, 1]} : vector<8x8xf32> to vector<1x8xf32>
    %826 = vector.broadcast %825 : vector<1x8xf32> to vector<2x8xf32>
    %827 = arith.addf %764, %826 : vector<2x8xf32>
    %cst_272 = arith.constant dense<0xFF800000> : vector<2xf32>
    %828 = vector.multi_reduction <maximumf>, %827, %cst_272 [1] : vector<2x8xf32> to vector<2xf32>
    %829 = vector.shape_cast %828 : vector<2xf32> to vector<2x1xf32>
    %830 = vector.broadcast %829 : vector<2x1xf32> to vector<2x8xf32>
    %831 = arith.subf %827, %830 : vector<2x8xf32>
    %832 = math.exp %831 : vector<2x8xf32>
    %cst_273 = arith.constant dense<0.000000e+00> : vector<2xf32>
    %833 = vector.multi_reduction <add>, %832, %cst_273 [1] : vector<2x8xf32> to vector<2xf32>
    %834 = vector.shape_cast %833 : vector<2xf32> to vector<2x1xf32>
    %835 = math.log %834 : vector<2x1xf32>
    %836 = arith.addf %829, %835 : vector<2x1xf32>
    %837 = vector.extract_strided_slice %3 {offsets = [6, 0], sizes = [1, 8], strides = [1, 1]} : vector<8x8xf32> to vector<1x8xf32>
    %838 = vector.broadcast %837 : vector<1x8xf32> to vector<2x8xf32>
    %839 = arith.addf %764, %838 : vector<2x8xf32>
    %cst_274 = arith.constant dense<0xFF800000> : vector<2xf32>
    %840 = vector.multi_reduction <maximumf>, %839, %cst_274 [1] : vector<2x8xf32> to vector<2xf32>
    %841 = vector.shape_cast %840 : vector<2xf32> to vector<2x1xf32>
    %842 = vector.broadcast %841 : vector<2x1xf32> to vector<2x8xf32>
    %843 = arith.subf %839, %842 : vector<2x8xf32>
    %844 = math.exp %843 : vector<2x8xf32>
    %cst_275 = arith.constant dense<0.000000e+00> : vector<2xf32>
    %845 = vector.multi_reduction <add>, %844, %cst_275 [1] : vector<2x8xf32> to vector<2xf32>
    %846 = vector.shape_cast %845 : vector<2xf32> to vector<2x1xf32>
    %847 = math.log %846 : vector<2x1xf32>
    %848 = arith.addf %841, %847 : vector<2x1xf32>
    %849 = vector.extract_strided_slice %3 {offsets = [7, 0], sizes = [1, 8], strides = [1, 1]} : vector<8x8xf32> to vector<1x8xf32>
    %850 = vector.broadcast %849 : vector<1x8xf32> to vector<2x8xf32>
    %851 = arith.addf %764, %850 : vector<2x8xf32>
    %cst_276 = arith.constant dense<0xFF800000> : vector<2xf32>
    %852 = vector.multi_reduction <maximumf>, %851, %cst_276 [1] : vector<2x8xf32> to vector<2xf32>
    %853 = vector.shape_cast %852 : vector<2xf32> to vector<2x1xf32>
    %854 = vector.broadcast %853 : vector<2x1xf32> to vector<2x8xf32>
    %855 = arith.subf %851, %854 : vector<2x8xf32>
    %856 = math.exp %855 : vector<2x8xf32>
    %cst_277 = arith.constant dense<0.000000e+00> : vector<2xf32>
    %857 = vector.multi_reduction <add>, %856, %cst_277 [1] : vector<2x8xf32> to vector<2xf32>
    %858 = vector.shape_cast %857 : vector<2xf32> to vector<2x1xf32>
    %859 = math.log %858 : vector<2x1xf32>
    %860 = arith.addf %853, %859 : vector<2x1xf32>
    %861 = tpu.concatenate %776, %788, %800, %812, %824, %836, %848, %860 in 1 : vector<2x1xf32>, vector<2x1xf32>, vector<2x1xf32>, vector<2x1xf32>, vector<2x1xf32>, vector<2x1xf32>, vector<2x1xf32>, vector<2x1xf32> -> vector<2x8xf32>
    %862 = arith.addf %861, %217 : vector<2x8xf32>
    %cst_278 = arith.constant 0.000000e+00 : f32
    %863 = vector.broadcast %cst_278 : f32 to vector<2x1xf32>
    %864 = arith.cmpf ogt, %483, %863 : vector<2x1xf32>
    %865 = vector.shape_cast %864 : vector<2x1xi1> to vector<2x1xi1>
    %866 = vector.broadcast %865 : vector<2x1xi1> to vector<2x8xi1>
    %867 = arith.select %866, %862, %764 : vector<2x8xi1>, vector<2x8xf32>
    %868 = vector.extract_strided_slice %3 {offsets = [0, 0], sizes = [1, 8], strides = [1, 1]} : vector<8x8xf32> to vector<1x8xf32>
    %869 = vector.broadcast %868 : vector<1x8xf32> to vector<2x8xf32>
    %870 = arith.addf %867, %869 : vector<2x8xf32>
    %cst_279 = arith.constant dense<0xFF800000> : vector<2xf32>
    %871 = vector.multi_reduction <maximumf>, %870, %cst_279 [1] : vector<2x8xf32> to vector<2xf32>
    %872 = vector.shape_cast %871 : vector<2xf32> to vector<2x1xf32>
    %873 = vector.broadcast %872 : vector<2x1xf32> to vector<2x8xf32>
    %874 = arith.subf %870, %873 : vector<2x8xf32>
    %875 = math.exp %874 : vector<2x8xf32>
    %cst_280 = arith.constant dense<0.000000e+00> : vector<2xf32>
    %876 = vector.multi_reduction <add>, %875, %cst_280 [1] : vector<2x8xf32> to vector<2xf32>
    %877 = vector.shape_cast %876 : vector<2xf32> to vector<2x1xf32>
    %878 = math.log %877 : vector<2x1xf32>
    %879 = arith.addf %872, %878 : vector<2x1xf32>
    %880 = vector.extract_strided_slice %3 {offsets = [1, 0], sizes = [1, 8], strides = [1, 1]} : vector<8x8xf32> to vector<1x8xf32>
    %881 = vector.broadcast %880 : vector<1x8xf32> to vector<2x8xf32>
    %882 = arith.addf %867, %881 : vector<2x8xf32>
    %cst_281 = arith.constant dense<0xFF800000> : vector<2xf32>
    %883 = vector.multi_reduction <maximumf>, %882, %cst_281 [1] : vector<2x8xf32> to vector<2xf32>
    %884 = vector.shape_cast %883 : vector<2xf32> to vector<2x1xf32>
    %885 = vector.broadcast %884 : vector<2x1xf32> to vector<2x8xf32>
    %886 = arith.subf %882, %885 : vector<2x8xf32>
    %887 = math.exp %886 : vector<2x8xf32>
    %cst_282 = arith.constant dense<0.000000e+00> : vector<2xf32>
    %888 = vector.multi_reduction <add>, %887, %cst_282 [1] : vector<2x8xf32> to vector<2xf32>
    %889 = vector.shape_cast %888 : vector<2xf32> to vector<2x1xf32>
    %890 = math.log %889 : vector<2x1xf32>
    %891 = arith.addf %884, %890 : vector<2x1xf32>
    %892 = vector.extract_strided_slice %3 {offsets = [2, 0], sizes = [1, 8], strides = [1, 1]} : vector<8x8xf32> to vector<1x8xf32>
    %893 = vector.broadcast %892 : vector<1x8xf32> to vector<2x8xf32>
    %894 = arith.addf %867, %893 : vector<2x8xf32>
    %cst_283 = arith.constant dense<0xFF800000> : vector<2xf32>
    %895 = vector.multi_reduction <maximumf>, %894, %cst_283 [1] : vector<2x8xf32> to vector<2xf32>
    %896 = vector.shape_cast %895 : vector<2xf32> to vector<2x1xf32>
    %897 = vector.broadcast %896 : vector<2x1xf32> to vector<2x8xf32>
    %898 = arith.subf %894, %897 : vector<2x8xf32>
    %899 = math.exp %898 : vector<2x8xf32>
    %cst_284 = arith.constant dense<0.000000e+00> : vector<2xf32>
    %900 = vector.multi_reduction <add>, %899, %cst_284 [1] : vector<2x8xf32> to vector<2xf32>
    %901 = vector.shape_cast %900 : vector<2xf32> to vector<2x1xf32>
    %902 = math.log %901 : vector<2x1xf32>
    %903 = arith.addf %896, %902 : vector<2x1xf32>
    %904 = vector.extract_strided_slice %3 {offsets = [3, 0], sizes = [1, 8], strides = [1, 1]} : vector<8x8xf32> to vector<1x8xf32>
    %905 = vector.broadcast %904 : vector<1x8xf32> to vector<2x8xf32>
    %906 = arith.addf %867, %905 : vector<2x8xf32>
    %cst_285 = arith.constant dense<0xFF800000> : vector<2xf32>
    %907 = vector.multi_reduction <maximumf>, %906, %cst_285 [1] : vector<2x8xf32> to vector<2xf32>
    %908 = vector.shape_cast %907 : vector<2xf32> to vector<2x1xf32>
    %909 = vector.broadcast %908 : vector<2x1xf32> to vector<2x8xf32>
    %910 = arith.subf %906, %909 : vector<2x8xf32>
    %911 = math.exp %910 : vector<2x8xf32>
    %cst_286 = arith.constant dense<0.000000e+00> : vector<2xf32>
    %912 = vector.multi_reduction <add>, %911, %cst_286 [1] : vector<2x8xf32> to vector<2xf32>
    %913 = vector.shape_cast %912 : vector<2xf32> to vector<2x1xf32>
    %914 = math.log %913 : vector<2x1xf32>
    %915 = arith.addf %908, %914 : vector<2x1xf32>
    %916 = vector.extract_strided_slice %3 {offsets = [4, 0], sizes = [1, 8], strides = [1, 1]} : vector<8x8xf32> to vector<1x8xf32>
    %917 = vector.broadcast %916 : vector<1x8xf32> to vector<2x8xf32>
    %918 = arith.addf %867, %917 : vector<2x8xf32>
    %cst_287 = arith.constant dense<0xFF800000> : vector<2xf32>
    %919 = vector.multi_reduction <maximumf>, %918, %cst_287 [1] : vector<2x8xf32> to vector<2xf32>
    %920 = vector.shape_cast %919 : vector<2xf32> to vector<2x1xf32>
    %921 = vector.broadcast %920 : vector<2x1xf32> to vector<2x8xf32>
    %922 = arith.subf %918, %921 : vector<2x8xf32>
    %923 = math.exp %922 : vector<2x8xf32>
    %cst_288 = arith.constant dense<0.000000e+00> : vector<2xf32>
    %924 = vector.multi_reduction <add>, %923, %cst_288 [1] : vector<2x8xf32> to vector<2xf32>
    %925 = vector.shape_cast %924 : vector<2xf32> to vector<2x1xf32>
    %926 = math.log %925 : vector<2x1xf32>
    %927 = arith.addf %920, %926 : vector<2x1xf32>
    %928 = vector.extract_strided_slice %3 {offsets = [5, 0], sizes = [1, 8], strides = [1, 1]} : vector<8x8xf32> to vector<1x8xf32>
    %929 = vector.broadcast %928 : vector<1x8xf32> to vector<2x8xf32>
    %930 = arith.addf %867, %929 : vector<2x8xf32>
    %cst_289 = arith.constant dense<0xFF800000> : vector<2xf32>
    %931 = vector.multi_reduction <maximumf>, %930, %cst_289 [1] : vector<2x8xf32> to vector<2xf32>
    %932 = vector.shape_cast %931 : vector<2xf32> to vector<2x1xf32>
    %933 = vector.broadcast %932 : vector<2x1xf32> to vector<2x8xf32>
    %934 = arith.subf %930, %933 : vector<2x8xf32>
    %935 = math.exp %934 : vector<2x8xf32>
    %cst_290 = arith.constant dense<0.000000e+00> : vector<2xf32>
    %936 = vector.multi_reduction <add>, %935, %cst_290 [1] : vector<2x8xf32> to vector<2xf32>
    %937 = vector.shape_cast %936 : vector<2xf32> to vector<2x1xf32>
    %938 = math.log %937 : vector<2x1xf32>
    %939 = arith.addf %932, %938 : vector<2x1xf32>
    %940 = vector.extract_strided_slice %3 {offsets = [6, 0], sizes = [1, 8], strides = [1, 1]} : vector<8x8xf32> to vector<1x8xf32>
    %941 = vector.broadcast %940 : vector<1x8xf32> to vector<2x8xf32>
    %942 = arith.addf %867, %941 : vector<2x8xf32>
    %cst_291 = arith.constant dense<0xFF800000> : vector<2xf32>
    %943 = vector.multi_reduction <maximumf>, %942, %cst_291 [1] : vector<2x8xf32> to vector<2xf32>
    %944 = vector.shape_cast %943 : vector<2xf32> to vector<2x1xf32>
    %945 = vector.broadcast %944 : vector<2x1xf32> to vector<2x8xf32>
    %946 = arith.subf %942, %945 : vector<2x8xf32>
    %947 = math.exp %946 : vector<2x8xf32>
    %cst_292 = arith.constant dense<0.000000e+00> : vector<2xf32>
    %948 = vector.multi_reduction <add>, %947, %cst_292 [1] : vector<2x8xf32> to vector<2xf32>
    %949 = vector.shape_cast %948 : vector<2xf32> to vector<2x1xf32>
    %950 = math.log %949 : vector<2x1xf32>
    %951 = arith.addf %944, %950 : vector<2x1xf32>
    %952 = vector.extract_strided_slice %3 {offsets = [7, 0], sizes = [1, 8], strides = [1, 1]} : vector<8x8xf32> to vector<1x8xf32>
    %953 = vector.broadcast %952 : vector<1x8xf32> to vector<2x8xf32>
    %954 = arith.addf %867, %953 : vector<2x8xf32>
    %cst_293 = arith.constant dense<0xFF800000> : vector<2xf32>
    %955 = vector.multi_reduction <maximumf>, %954, %cst_293 [1] : vector<2x8xf32> to vector<2xf32>
    %956 = vector.shape_cast %955 : vector<2xf32> to vector<2x1xf32>
    %957 = vector.broadcast %956 : vector<2x1xf32> to vector<2x8xf32>
    %958 = arith.subf %954, %957 : vector<2x8xf32>
    %959 = math.exp %958 : vector<2x8xf32>
    %cst_294 = arith.constant dense<0.000000e+00> : vector<2xf32>
    %960 = vector.multi_reduction <add>, %959, %cst_294 [1] : vector<2x8xf32> to vector<2xf32>
    %961 = vector.shape_cast %960 : vector<2xf32> to vector<2x1xf32>
    %962 = math.log %961 : vector<2x1xf32>
    %963 = arith.addf %956, %962 : vector<2x1xf32>
    %964 = tpu.concatenate %879, %891, %903, %915, %927, %939, %951, %963 in 1 : vector<2x1xf32>, vector<2x1xf32>, vector<2x1xf32>, vector<2x1xf32>, vector<2x1xf32>, vector<2x1xf32>, vector<2x1xf32>, vector<2x1xf32> -> vector<2x8xf32>
    %965 = arith.addf %964, %270 : vector<2x8xf32>
    %cst_295 = arith.constant 0.000000e+00 : f32
    %966 = vector.broadcast %cst_295 : f32 to vector<2x1xf32>
    %967 = arith.cmpf ogt, %485, %966 : vector<2x1xf32>
    %968 = vector.shape_cast %967 : vector<2x1xi1> to vector<2x1xi1>
    %969 = vector.broadcast %968 : vector<2x1xi1> to vector<2x8xi1>
    %970 = arith.select %969, %965, %867 : vector<2x8xi1>, vector<2x8xf32>
    %971 = vector.extract_strided_slice %3 {offsets = [0, 0], sizes = [1, 8], strides = [1, 1]} : vector<8x8xf32> to vector<1x8xf32>
    %972 = vector.broadcast %971 : vector<1x8xf32> to vector<2x8xf32>
    %973 = arith.addf %970, %972 : vector<2x8xf32>
    %cst_296 = arith.constant dense<0xFF800000> : vector<2xf32>
    %974 = vector.multi_reduction <maximumf>, %973, %cst_296 [1] : vector<2x8xf32> to vector<2xf32>
    %975 = vector.shape_cast %974 : vector<2xf32> to vector<2x1xf32>
    %976 = vector.broadcast %975 : vector<2x1xf32> to vector<2x8xf32>
    %977 = arith.subf %973, %976 : vector<2x8xf32>
    %978 = math.exp %977 : vector<2x8xf32>
    %cst_297 = arith.constant dense<0.000000e+00> : vector<2xf32>
    %979 = vector.multi_reduction <add>, %978, %cst_297 [1] : vector<2x8xf32> to vector<2xf32>
    %980 = vector.shape_cast %979 : vector<2xf32> to vector<2x1xf32>
    %981 = math.log %980 : vector<2x1xf32>
    %982 = arith.addf %975, %981 : vector<2x1xf32>
    %983 = vector.extract_strided_slice %3 {offsets = [1, 0], sizes = [1, 8], strides = [1, 1]} : vector<8x8xf32> to vector<1x8xf32>
    %984 = vector.broadcast %983 : vector<1x8xf32> to vector<2x8xf32>
    %985 = arith.addf %970, %984 : vector<2x8xf32>
    %cst_298 = arith.constant dense<0xFF800000> : vector<2xf32>
    %986 = vector.multi_reduction <maximumf>, %985, %cst_298 [1] : vector<2x8xf32> to vector<2xf32>
    %987 = vector.shape_cast %986 : vector<2xf32> to vector<2x1xf32>
    %988 = vector.broadcast %987 : vector<2x1xf32> to vector<2x8xf32>
    %989 = arith.subf %985, %988 : vector<2x8xf32>
    %990 = math.exp %989 : vector<2x8xf32>
    %cst_299 = arith.constant dense<0.000000e+00> : vector<2xf32>
    %991 = vector.multi_reduction <add>, %990, %cst_299 [1] : vector<2x8xf32> to vector<2xf32>
    %992 = vector.shape_cast %991 : vector<2xf32> to vector<2x1xf32>
    %993 = math.log %992 : vector<2x1xf32>
    %994 = arith.addf %987, %993 : vector<2x1xf32>
    %995 = vector.extract_strided_slice %3 {offsets = [2, 0], sizes = [1, 8], strides = [1, 1]} : vector<8x8xf32> to vector<1x8xf32>
    %996 = vector.broadcast %995 : vector<1x8xf32> to vector<2x8xf32>
    %997 = arith.addf %970, %996 : vector<2x8xf32>
    %cst_300 = arith.constant dense<0xFF800000> : vector<2xf32>
    %998 = vector.multi_reduction <maximumf>, %997, %cst_300 [1] : vector<2x8xf32> to vector<2xf32>
    %999 = vector.shape_cast %998 : vector<2xf32> to vector<2x1xf32>
    %1000 = vector.broadcast %999 : vector<2x1xf32> to vector<2x8xf32>
    %1001 = arith.subf %997, %1000 : vector<2x8xf32>
    %1002 = math.exp %1001 : vector<2x8xf32>
    %cst_301 = arith.constant dense<0.000000e+00> : vector<2xf32>
    %1003 = vector.multi_reduction <add>, %1002, %cst_301 [1] : vector<2x8xf32> to vector<2xf32>
    %1004 = vector.shape_cast %1003 : vector<2xf32> to vector<2x1xf32>
    %1005 = math.log %1004 : vector<2x1xf32>
    %1006 = arith.addf %999, %1005 : vector<2x1xf32>
    %1007 = vector.extract_strided_slice %3 {offsets = [3, 0], sizes = [1, 8], strides = [1, 1]} : vector<8x8xf32> to vector<1x8xf32>
    %1008 = vector.broadcast %1007 : vector<1x8xf32> to vector<2x8xf32>
    %1009 = arith.addf %970, %1008 : vector<2x8xf32>
    %cst_302 = arith.constant dense<0xFF800000> : vector<2xf32>
    %1010 = vector.multi_reduction <maximumf>, %1009, %cst_302 [1] : vector<2x8xf32> to vector<2xf32>
    %1011 = vector.shape_cast %1010 : vector<2xf32> to vector<2x1xf32>
    %1012 = vector.broadcast %1011 : vector<2x1xf32> to vector<2x8xf32>
    %1013 = arith.subf %1009, %1012 : vector<2x8xf32>
    %1014 = math.exp %1013 : vector<2x8xf32>
    %cst_303 = arith.constant dense<0.000000e+00> : vector<2xf32>
    %1015 = vector.multi_reduction <add>, %1014, %cst_303 [1] : vector<2x8xf32> to vector<2xf32>
    %1016 = vector.shape_cast %1015 : vector<2xf32> to vector<2x1xf32>
    %1017 = math.log %1016 : vector<2x1xf32>
    %1018 = arith.addf %1011, %1017 : vector<2x1xf32>
    %1019 = vector.extract_strided_slice %3 {offsets = [4, 0], sizes = [1, 8], strides = [1, 1]} : vector<8x8xf32> to vector<1x8xf32>
    %1020 = vector.broadcast %1019 : vector<1x8xf32> to vector<2x8xf32>
    %1021 = arith.addf %970, %1020 : vector<2x8xf32>
    %cst_304 = arith.constant dense<0xFF800000> : vector<2xf32>
    %1022 = vector.multi_reduction <maximumf>, %1021, %cst_304 [1] : vector<2x8xf32> to vector<2xf32>
    %1023 = vector.shape_cast %1022 : vector<2xf32> to vector<2x1xf32>
    %1024 = vector.broadcast %1023 : vector<2x1xf32> to vector<2x8xf32>
    %1025 = arith.subf %1021, %1024 : vector<2x8xf32>
    %1026 = math.exp %1025 : vector<2x8xf32>
    %cst_305 = arith.constant dense<0.000000e+00> : vector<2xf32>
    %1027 = vector.multi_reduction <add>, %1026, %cst_305 [1] : vector<2x8xf32> to vector<2xf32>
    %1028 = vector.shape_cast %1027 : vector<2xf32> to vector<2x1xf32>
    %1029 = math.log %1028 : vector<2x1xf32>
    %1030 = arith.addf %1023, %1029 : vector<2x1xf32>
    %1031 = vector.extract_strided_slice %3 {offsets = [5, 0], sizes = [1, 8], strides = [1, 1]} : vector<8x8xf32> to vector<1x8xf32>
    %1032 = vector.broadcast %1031 : vector<1x8xf32> to vector<2x8xf32>
    %1033 = arith.addf %970, %1032 : vector<2x8xf32>
    %cst_306 = arith.constant dense<0xFF800000> : vector<2xf32>
    %1034 = vector.multi_reduction <maximumf>, %1033, %cst_306 [1] : vector<2x8xf32> to vector<2xf32>
    %1035 = vector.shape_cast %1034 : vector<2xf32> to vector<2x1xf32>
    %1036 = vector.broadcast %1035 : vector<2x1xf32> to vector<2x8xf32>
    %1037 = arith.subf %1033, %1036 : vector<2x8xf32>
    %1038 = math.exp %1037 : vector<2x8xf32>
    %cst_307 = arith.constant dense<0.000000e+00> : vector<2xf32>
    %1039 = vector.multi_reduction <add>, %1038, %cst_307 [1] : vector<2x8xf32> to vector<2xf32>
    %1040 = vector.shape_cast %1039 : vector<2xf32> to vector<2x1xf32>
    %1041 = math.log %1040 : vector<2x1xf32>
    %1042 = arith.addf %1035, %1041 : vector<2x1xf32>
    %1043 = vector.extract_strided_slice %3 {offsets = [6, 0], sizes = [1, 8], strides = [1, 1]} : vector<8x8xf32> to vector<1x8xf32>
    %1044 = vector.broadcast %1043 : vector<1x8xf32> to vector<2x8xf32>
    %1045 = arith.addf %970, %1044 : vector<2x8xf32>
    %cst_308 = arith.constant dense<0xFF800000> : vector<2xf32>
    %1046 = vector.multi_reduction <maximumf>, %1045, %cst_308 [1] : vector<2x8xf32> to vector<2xf32>
    %1047 = vector.shape_cast %1046 : vector<2xf32> to vector<2x1xf32>
    %1048 = vector.broadcast %1047 : vector<2x1xf32> to vector<2x8xf32>
    %1049 = arith.subf %1045, %1048 : vector<2x8xf32>
    %1050 = math.exp %1049 : vector<2x8xf32>
    %cst_309 = arith.constant dense<0.000000e+00> : vector<2xf32>
    %1051 = vector.multi_reduction <add>, %1050, %cst_309 [1] : vector<2x8xf32> to vector<2xf32>
    %1052 = vector.shape_cast %1051 : vector<2xf32> to vector<2x1xf32>
    %1053 = math.log %1052 : vector<2x1xf32>
    %1054 = arith.addf %1047, %1053 : vector<2x1xf32>
    %1055 = vector.extract_strided_slice %3 {offsets = [7, 0], sizes = [1, 8], strides = [1, 1]} : vector<8x8xf32> to vector<1x8xf32>
    %1056 = vector.broadcast %1055 : vector<1x8xf32> to vector<2x8xf32>
    %1057 = arith.addf %970, %1056 : vector<2x8xf32>
    %cst_310 = arith.constant dense<0xFF800000> : vector<2xf32>
    %1058 = vector.multi_reduction <maximumf>, %1057, %cst_310 [1] : vector<2x8xf32> to vector<2xf32>
    %1059 = vector.shape_cast %1058 : vector<2xf32> to vector<2x1xf32>
    %1060 = vector.broadcast %1059 : vector<2x1xf32> to vector<2x8xf32>
    %1061 = arith.subf %1057, %1060 : vector<2x8xf32>
    %1062 = math.exp %1061 : vector<2x8xf32>
    %cst_311 = arith.constant dense<0.000000e+00> : vector<2xf32>
    %1063 = vector.multi_reduction <add>, %1062, %cst_311 [1] : vector<2x8xf32> to vector<2xf32>
    %1064 = vector.shape_cast %1063 : vector<2xf32> to vector<2x1xf32>
    %1065 = math.log %1064 : vector<2x1xf32>
    %1066 = arith.addf %1059, %1065 : vector<2x1xf32>
    %1067 = tpu.concatenate %982, %994, %1006, %1018, %1030, %1042, %1054, %1066 in 1 : vector<2x1xf32>, vector<2x1xf32>, vector<2x1xf32>, vector<2x1xf32>, vector<2x1xf32>, vector<2x1xf32>, vector<2x1xf32>, vector<2x1xf32> -> vector<2x8xf32>
    %1068 = arith.addf %1067, %323 : vector<2x8xf32>
    %cst_312 = arith.constant 0.000000e+00 : f32
    %1069 = vector.broadcast %cst_312 : f32 to vector<2x1xf32>
    %1070 = arith.cmpf ogt, %487, %1069 : vector<2x1xf32>
    %1071 = vector.shape_cast %1070 : vector<2x1xi1> to vector<2x1xi1>
    %1072 = vector.broadcast %1071 : vector<2x1xi1> to vector<2x8xi1>
    %1073 = arith.select %1072, %1068, %970 : vector<2x8xi1>, vector<2x8xf32>
    %1074 = vector.extract_strided_slice %3 {offsets = [0, 0], sizes = [1, 8], strides = [1, 1]} : vector<8x8xf32> to vector<1x8xf32>
    %1075 = vector.broadcast %1074 : vector<1x8xf32> to vector<2x8xf32>
    %1076 = arith.addf %1073, %1075 : vector<2x8xf32>
    %cst_313 = arith.constant dense<0xFF800000> : vector<2xf32>
    %1077 = vector.multi_reduction <maximumf>, %1076, %cst_313 [1] : vector<2x8xf32> to vector<2xf32>
    %1078 = vector.shape_cast %1077 : vector<2xf32> to vector<2x1xf32>
    %1079 = vector.broadcast %1078 : vector<2x1xf32> to vector<2x8xf32>
    %1080 = arith.subf %1076, %1079 : vector<2x8xf32>
    %1081 = math.exp %1080 : vector<2x8xf32>
    %cst_314 = arith.constant dense<0.000000e+00> : vector<2xf32>
    %1082 = vector.multi_reduction <add>, %1081, %cst_314 [1] : vector<2x8xf32> to vector<2xf32>
    %1083 = vector.shape_cast %1082 : vector<2xf32> to vector<2x1xf32>
    %1084 = math.log %1083 : vector<2x1xf32>
    %1085 = arith.addf %1078, %1084 : vector<2x1xf32>
    %1086 = vector.extract_strided_slice %3 {offsets = [1, 0], sizes = [1, 8], strides = [1, 1]} : vector<8x8xf32> to vector<1x8xf32>
    %1087 = vector.broadcast %1086 : vector<1x8xf32> to vector<2x8xf32>
    %1088 = arith.addf %1073, %1087 : vector<2x8xf32>
    %cst_315 = arith.constant dense<0xFF800000> : vector<2xf32>
    %1089 = vector.multi_reduction <maximumf>, %1088, %cst_315 [1] : vector<2x8xf32> to vector<2xf32>
    %1090 = vector.shape_cast %1089 : vector<2xf32> to vector<2x1xf32>
    %1091 = vector.broadcast %1090 : vector<2x1xf32> to vector<2x8xf32>
    %1092 = arith.subf %1088, %1091 : vector<2x8xf32>
    %1093 = math.exp %1092 : vector<2x8xf32>
    %cst_316 = arith.constant dense<0.000000e+00> : vector<2xf32>
    %1094 = vector.multi_reduction <add>, %1093, %cst_316 [1] : vector<2x8xf32> to vector<2xf32>
    %1095 = vector.shape_cast %1094 : vector<2xf32> to vector<2x1xf32>
    %1096 = math.log %1095 : vector<2x1xf32>
    %1097 = arith.addf %1090, %1096 : vector<2x1xf32>
    %1098 = vector.extract_strided_slice %3 {offsets = [2, 0], sizes = [1, 8], strides = [1, 1]} : vector<8x8xf32> to vector<1x8xf32>
    %1099 = vector.broadcast %1098 : vector<1x8xf32> to vector<2x8xf32>
    %1100 = arith.addf %1073, %1099 : vector<2x8xf32>
    %cst_317 = arith.constant dense<0xFF800000> : vector<2xf32>
    %1101 = vector.multi_reduction <maximumf>, %1100, %cst_317 [1] : vector<2x8xf32> to vector<2xf32>
    %1102 = vector.shape_cast %1101 : vector<2xf32> to vector<2x1xf32>
    %1103 = vector.broadcast %1102 : vector<2x1xf32> to vector<2x8xf32>
    %1104 = arith.subf %1100, %1103 : vector<2x8xf32>
    %1105 = math.exp %1104 : vector<2x8xf32>
    %cst_318 = arith.constant dense<0.000000e+00> : vector<2xf32>
    %1106 = vector.multi_reduction <add>, %1105, %cst_318 [1] : vector<2x8xf32> to vector<2xf32>
    %1107 = vector.shape_cast %1106 : vector<2xf32> to vector<2x1xf32>
    %1108 = math.log %1107 : vector<2x1xf32>
    %1109 = arith.addf %1102, %1108 : vector<2x1xf32>
    %1110 = vector.extract_strided_slice %3 {offsets = [3, 0], sizes = [1, 8], strides = [1, 1]} : vector<8x8xf32> to vector<1x8xf32>
    %1111 = vector.broadcast %1110 : vector<1x8xf32> to vector<2x8xf32>
    %1112 = arith.addf %1073, %1111 : vector<2x8xf32>
    %cst_319 = arith.constant dense<0xFF800000> : vector<2xf32>
    %1113 = vector.multi_reduction <maximumf>, %1112, %cst_319 [1] : vector<2x8xf32> to vector<2xf32>
    %1114 = vector.shape_cast %1113 : vector<2xf32> to vector<2x1xf32>
    %1115 = vector.broadcast %1114 : vector<2x1xf32> to vector<2x8xf32>
    %1116 = arith.subf %1112, %1115 : vector<2x8xf32>
    %1117 = math.exp %1116 : vector<2x8xf32>
    %cst_320 = arith.constant dense<0.000000e+00> : vector<2xf32>
    %1118 = vector.multi_reduction <add>, %1117, %cst_320 [1] : vector<2x8xf32> to vector<2xf32>
    %1119 = vector.shape_cast %1118 : vector<2xf32> to vector<2x1xf32>
    %1120 = math.log %1119 : vector<2x1xf32>
    %1121 = arith.addf %1114, %1120 : vector<2x1xf32>
    %1122 = vector.extract_strided_slice %3 {offsets = [4, 0], sizes = [1, 8], strides = [1, 1]} : vector<8x8xf32> to vector<1x8xf32>
    %1123 = vector.broadcast %1122 : vector<1x8xf32> to vector<2x8xf32>
    %1124 = arith.addf %1073, %1123 : vector<2x8xf32>
    %cst_321 = arith.constant dense<0xFF800000> : vector<2xf32>
    %1125 = vector.multi_reduction <maximumf>, %1124, %cst_321 [1] : vector<2x8xf32> to vector<2xf32>
    %1126 = vector.shape_cast %1125 : vector<2xf32> to vector<2x1xf32>
    %1127 = vector.broadcast %1126 : vector<2x1xf32> to vector<2x8xf32>
    %1128 = arith.subf %1124, %1127 : vector<2x8xf32>
    %1129 = math.exp %1128 : vector<2x8xf32>
    %cst_322 = arith.constant dense<0.000000e+00> : vector<2xf32>
    %1130 = vector.multi_reduction <add>, %1129, %cst_322 [1] : vector<2x8xf32> to vector<2xf32>
    %1131 = vector.shape_cast %1130 : vector<2xf32> to vector<2x1xf32>
    %1132 = math.log %1131 : vector<2x1xf32>
    %1133 = arith.addf %1126, %1132 : vector<2x1xf32>
    %1134 = vector.extract_strided_slice %3 {offsets = [5, 0], sizes = [1, 8], strides = [1, 1]} : vector<8x8xf32> to vector<1x8xf32>
    %1135 = vector.broadcast %1134 : vector<1x8xf32> to vector<2x8xf32>
    %1136 = arith.addf %1073, %1135 : vector<2x8xf32>
    %cst_323 = arith.constant dense<0xFF800000> : vector<2xf32>
    %1137 = vector.multi_reduction <maximumf>, %1136, %cst_323 [1] : vector<2x8xf32> to vector<2xf32>
    %1138 = vector.shape_cast %1137 : vector<2xf32> to vector<2x1xf32>
    %1139 = vector.broadcast %1138 : vector<2x1xf32> to vector<2x8xf32>
    %1140 = arith.subf %1136, %1139 : vector<2x8xf32>
    %1141 = math.exp %1140 : vector<2x8xf32>
    %cst_324 = arith.constant dense<0.000000e+00> : vector<2xf32>
    %1142 = vector.multi_reduction <add>, %1141, %cst_324 [1] : vector<2x8xf32> to vector<2xf32>
    %1143 = vector.shape_cast %1142 : vector<2xf32> to vector<2x1xf32>
    %1144 = math.log %1143 : vector<2x1xf32>
    %1145 = arith.addf %1138, %1144 : vector<2x1xf32>
    %1146 = vector.extract_strided_slice %3 {offsets = [6, 0], sizes = [1, 8], strides = [1, 1]} : vector<8x8xf32> to vector<1x8xf32>
    %1147 = vector.broadcast %1146 : vector<1x8xf32> to vector<2x8xf32>
    %1148 = arith.addf %1073, %1147 : vector<2x8xf32>
    %cst_325 = arith.constant dense<0xFF800000> : vector<2xf32>
    %1149 = vector.multi_reduction <maximumf>, %1148, %cst_325 [1] : vector<2x8xf32> to vector<2xf32>
    %1150 = vector.shape_cast %1149 : vector<2xf32> to vector<2x1xf32>
    %1151 = vector.broadcast %1150 : vector<2x1xf32> to vector<2x8xf32>
    %1152 = arith.subf %1148, %1151 : vector<2x8xf32>
    %1153 = math.exp %1152 : vector<2x8xf32>
    %cst_326 = arith.constant dense<0.000000e+00> : vector<2xf32>
    %1154 = vector.multi_reduction <add>, %1153, %cst_326 [1] : vector<2x8xf32> to vector<2xf32>
    %1155 = vector.shape_cast %1154 : vector<2xf32> to vector<2x1xf32>
    %1156 = math.log %1155 : vector<2x1xf32>
    %1157 = arith.addf %1150, %1156 : vector<2x1xf32>
    %1158 = vector.extract_strided_slice %3 {offsets = [7, 0], sizes = [1, 8], strides = [1, 1]} : vector<8x8xf32> to vector<1x8xf32>
    %1159 = vector.broadcast %1158 : vector<1x8xf32> to vector<2x8xf32>
    %1160 = arith.addf %1073, %1159 : vector<2x8xf32>
    %cst_327 = arith.constant dense<0xFF800000> : vector<2xf32>
    %1161 = vector.multi_reduction <maximumf>, %1160, %cst_327 [1] : vector<2x8xf32> to vector<2xf32>
    %1162 = vector.shape_cast %1161 : vector<2xf32> to vector<2x1xf32>
    %1163 = vector.broadcast %1162 : vector<2x1xf32> to vector<2x8xf32>
    %1164 = arith.subf %1160, %1163 : vector<2x8xf32>
    %1165 = math.exp %1164 : vector<2x8xf32>
    %cst_328 = arith.constant dense<0.000000e+00> : vector<2xf32>
    %1166 = vector.multi_reduction <add>, %1165, %cst_328 [1] : vector<2x8xf32> to vector<2xf32>
    %1167 = vector.shape_cast %1166 : vector<2xf32> to vector<2x1xf32>
    %1168 = math.log %1167 : vector<2x1xf32>
    %1169 = arith.addf %1162, %1168 : vector<2x1xf32>
    %1170 = tpu.concatenate %1085, %1097, %1109, %1121, %1133, %1145, %1157, %1169 in 1 : vector<2x1xf32>, vector<2x1xf32>, vector<2x1xf32>, vector<2x1xf32>, vector<2x1xf32>, vector<2x1xf32>, vector<2x1xf32>, vector<2x1xf32> -> vector<2x8xf32>
    %1171 = arith.addf %1170, %376 : vector<2x8xf32>
    %cst_329 = arith.constant 0.000000e+00 : f32
    %1172 = vector.broadcast %cst_329 : f32 to vector<2x1xf32>
    %1173 = arith.cmpf ogt, %489, %1172 : vector<2x1xf32>
    %1174 = vector.shape_cast %1173 : vector<2x1xi1> to vector<2x1xi1>
    %1175 = vector.broadcast %1174 : vector<2x1xi1> to vector<2x8xi1>
    %1176 = arith.select %1175, %1171, %1073 : vector<2x8xi1>, vector<2x8xf32>
    %1177 = vector.extract_strided_slice %3 {offsets = [0, 0], sizes = [1, 8], strides = [1, 1]} : vector<8x8xf32> to vector<1x8xf32>
    %1178 = vector.broadcast %1177 : vector<1x8xf32> to vector<2x8xf32>
    %1179 = arith.addf %1176, %1178 : vector<2x8xf32>
    %cst_330 = arith.constant dense<0xFF800000> : vector<2xf32>
    %1180 = vector.multi_reduction <maximumf>, %1179, %cst_330 [1] : vector<2x8xf32> to vector<2xf32>
    %1181 = vector.shape_cast %1180 : vector<2xf32> to vector<2x1xf32>
    %1182 = vector.broadcast %1181 : vector<2x1xf32> to vector<2x8xf32>
    %1183 = arith.subf %1179, %1182 : vector<2x8xf32>
    %1184 = math.exp %1183 : vector<2x8xf32>
    %cst_331 = arith.constant dense<0.000000e+00> : vector<2xf32>
    %1185 = vector.multi_reduction <add>, %1184, %cst_331 [1] : vector<2x8xf32> to vector<2xf32>
    %1186 = vector.shape_cast %1185 : vector<2xf32> to vector<2x1xf32>
    %1187 = math.log %1186 : vector<2x1xf32>
    %1188 = arith.addf %1181, %1187 : vector<2x1xf32>
    %1189 = vector.extract_strided_slice %3 {offsets = [1, 0], sizes = [1, 8], strides = [1, 1]} : vector<8x8xf32> to vector<1x8xf32>
    %1190 = vector.broadcast %1189 : vector<1x8xf32> to vector<2x8xf32>
    %1191 = arith.addf %1176, %1190 : vector<2x8xf32>
    %cst_332 = arith.constant dense<0xFF800000> : vector<2xf32>
    %1192 = vector.multi_reduction <maximumf>, %1191, %cst_332 [1] : vector<2x8xf32> to vector<2xf32>
    %1193 = vector.shape_cast %1192 : vector<2xf32> to vector<2x1xf32>
    %1194 = vector.broadcast %1193 : vector<2x1xf32> to vector<2x8xf32>
    %1195 = arith.subf %1191, %1194 : vector<2x8xf32>
    %1196 = math.exp %1195 : vector<2x8xf32>
    %cst_333 = arith.constant dense<0.000000e+00> : vector<2xf32>
    %1197 = vector.multi_reduction <add>, %1196, %cst_333 [1] : vector<2x8xf32> to vector<2xf32>
    %1198 = vector.shape_cast %1197 : vector<2xf32> to vector<2x1xf32>
    %1199 = math.log %1198 : vector<2x1xf32>
    %1200 = arith.addf %1193, %1199 : vector<2x1xf32>
    %1201 = vector.extract_strided_slice %3 {offsets = [2, 0], sizes = [1, 8], strides = [1, 1]} : vector<8x8xf32> to vector<1x8xf32>
    %1202 = vector.broadcast %1201 : vector<1x8xf32> to vector<2x8xf32>
    %1203 = arith.addf %1176, %1202 : vector<2x8xf32>
    %cst_334 = arith.constant dense<0xFF800000> : vector<2xf32>
    %1204 = vector.multi_reduction <maximumf>, %1203, %cst_334 [1] : vector<2x8xf32> to vector<2xf32>
    %1205 = vector.shape_cast %1204 : vector<2xf32> to vector<2x1xf32>
    %1206 = vector.broadcast %1205 : vector<2x1xf32> to vector<2x8xf32>
    %1207 = arith.subf %1203, %1206 : vector<2x8xf32>
    %1208 = math.exp %1207 : vector<2x8xf32>
    %cst_335 = arith.constant dense<0.000000e+00> : vector<2xf32>
    %1209 = vector.multi_reduction <add>, %1208, %cst_335 [1] : vector<2x8xf32> to vector<2xf32>
    %1210 = vector.shape_cast %1209 : vector<2xf32> to vector<2x1xf32>
    %1211 = math.log %1210 : vector<2x1xf32>
    %1212 = arith.addf %1205, %1211 : vector<2x1xf32>
    %1213 = vector.extract_strided_slice %3 {offsets = [3, 0], sizes = [1, 8], strides = [1, 1]} : vector<8x8xf32> to vector<1x8xf32>
    %1214 = vector.broadcast %1213 : vector<1x8xf32> to vector<2x8xf32>
    %1215 = arith.addf %1176, %1214 : vector<2x8xf32>
    %cst_336 = arith.constant dense<0xFF800000> : vector<2xf32>
    %1216 = vector.multi_reduction <maximumf>, %1215, %cst_336 [1] : vector<2x8xf32> to vector<2xf32>
    %1217 = vector.shape_cast %1216 : vector<2xf32> to vector<2x1xf32>
    %1218 = vector.broadcast %1217 : vector<2x1xf32> to vector<2x8xf32>
    %1219 = arith.subf %1215, %1218 : vector<2x8xf32>
    %1220 = math.exp %1219 : vector<2x8xf32>
    %cst_337 = arith.constant dense<0.000000e+00> : vector<2xf32>
    %1221 = vector.multi_reduction <add>, %1220, %cst_337 [1] : vector<2x8xf32> to vector<2xf32>
    %1222 = vector.shape_cast %1221 : vector<2xf32> to vector<2x1xf32>
    %1223 = math.log %1222 : vector<2x1xf32>
    %1224 = arith.addf %1217, %1223 : vector<2x1xf32>
    %1225 = vector.extract_strided_slice %3 {offsets = [4, 0], sizes = [1, 8], strides = [1, 1]} : vector<8x8xf32> to vector<1x8xf32>
    %1226 = vector.broadcast %1225 : vector<1x8xf32> to vector<2x8xf32>
    %1227 = arith.addf %1176, %1226 : vector<2x8xf32>
    %cst_338 = arith.constant dense<0xFF800000> : vector<2xf32>
    %1228 = vector.multi_reduction <maximumf>, %1227, %cst_338 [1] : vector<2x8xf32> to vector<2xf32>
    %1229 = vector.shape_cast %1228 : vector<2xf32> to vector<2x1xf32>
    %1230 = vector.broadcast %1229 : vector<2x1xf32> to vector<2x8xf32>
    %1231 = arith.subf %1227, %1230 : vector<2x8xf32>
    %1232 = math.exp %1231 : vector<2x8xf32>
    %cst_339 = arith.constant dense<0.000000e+00> : vector<2xf32>
    %1233 = vector.multi_reduction <add>, %1232, %cst_339 [1] : vector<2x8xf32> to vector<2xf32>
    %1234 = vector.shape_cast %1233 : vector<2xf32> to vector<2x1xf32>
    %1235 = math.log %1234 : vector<2x1xf32>
    %1236 = arith.addf %1229, %1235 : vector<2x1xf32>
    %1237 = vector.extract_strided_slice %3 {offsets = [5, 0], sizes = [1, 8], strides = [1, 1]} : vector<8x8xf32> to vector<1x8xf32>
    %1238 = vector.broadcast %1237 : vector<1x8xf32> to vector<2x8xf32>
    %1239 = arith.addf %1176, %1238 : vector<2x8xf32>
    %cst_340 = arith.constant dense<0xFF800000> : vector<2xf32>
    %1240 = vector.multi_reduction <maximumf>, %1239, %cst_340 [1] : vector<2x8xf32> to vector<2xf32>
    %1241 = vector.shape_cast %1240 : vector<2xf32> to vector<2x1xf32>
    %1242 = vector.broadcast %1241 : vector<2x1xf32> to vector<2x8xf32>
    %1243 = arith.subf %1239, %1242 : vector<2x8xf32>
    %1244 = math.exp %1243 : vector<2x8xf32>
    %cst_341 = arith.constant dense<0.000000e+00> : vector<2xf32>
    %1245 = vector.multi_reduction <add>, %1244, %cst_341 [1] : vector<2x8xf32> to vector<2xf32>
    %1246 = vector.shape_cast %1245 : vector<2xf32> to vector<2x1xf32>
    %1247 = math.log %1246 : vector<2x1xf32>
    %1248 = arith.addf %1241, %1247 : vector<2x1xf32>
    %1249 = vector.extract_strided_slice %3 {offsets = [6, 0], sizes = [1, 8], strides = [1, 1]} : vector<8x8xf32> to vector<1x8xf32>
    %1250 = vector.broadcast %1249 : vector<1x8xf32> to vector<2x8xf32>
    %1251 = arith.addf %1176, %1250 : vector<2x8xf32>
    %cst_342 = arith.constant dense<0xFF800000> : vector<2xf32>
    %1252 = vector.multi_reduction <maximumf>, %1251, %cst_342 [1] : vector<2x8xf32> to vector<2xf32>
    %1253 = vector.shape_cast %1252 : vector<2xf32> to vector<2x1xf32>
    %1254 = vector.broadcast %1253 : vector<2x1xf32> to vector<2x8xf32>
    %1255 = arith.subf %1251, %1254 : vector<2x8xf32>
    %1256 = math.exp %1255 : vector<2x8xf32>
    %cst_343 = arith.constant dense<0.000000e+00> : vector<2xf32>
    %1257 = vector.multi_reduction <add>, %1256, %cst_343 [1] : vector<2x8xf32> to vector<2xf32>
    %1258 = vector.shape_cast %1257 : vector<2xf32> to vector<2x1xf32>
    %1259 = math.log %1258 : vector<2x1xf32>
    %1260 = arith.addf %1253, %1259 : vector<2x1xf32>
    %1261 = vector.extract_strided_slice %3 {offsets = [7, 0], sizes = [1, 8], strides = [1, 1]} : vector<8x8xf32> to vector<1x8xf32>
    %1262 = vector.broadcast %1261 : vector<1x8xf32> to vector<2x8xf32>
    %1263 = arith.addf %1176, %1262 : vector<2x8xf32>
    %cst_344 = arith.constant dense<0xFF800000> : vector<2xf32>
    %1264 = vector.multi_reduction <maximumf>, %1263, %cst_344 [1] : vector<2x8xf32> to vector<2xf32>
    %1265 = vector.shape_cast %1264 : vector<2xf32> to vector<2x1xf32>
    %1266 = vector.broadcast %1265 : vector<2x1xf32> to vector<2x8xf32>
    %1267 = arith.subf %1263, %1266 : vector<2x8xf32>
    %1268 = math.exp %1267 : vector<2x8xf32>
    %cst_345 = arith.constant dense<0.000000e+00> : vector<2xf32>
    %1269 = vector.multi_reduction <add>, %1268, %cst_345 [1] : vector<2x8xf32> to vector<2xf32>
    %1270 = vector.shape_cast %1269 : vector<2xf32> to vector<2x1xf32>
    %1271 = math.log %1270 : vector<2x1xf32>
    %1272 = arith.addf %1265, %1271 : vector<2x1xf32>
    %1273 = tpu.concatenate %1188, %1200, %1212, %1224, %1236, %1248, %1260, %1272 in 1 : vector<2x1xf32>, vector<2x1xf32>, vector<2x1xf32>, vector<2x1xf32>, vector<2x1xf32>, vector<2x1xf32>, vector<2x1xf32>, vector<2x1xf32> -> vector<2x8xf32>
    %1274 = arith.addf %1273, %429 : vector<2x8xf32>
    %cst_346 = arith.constant 0.000000e+00 : f32
    %1275 = vector.broadcast %cst_346 : f32 to vector<2x1xf32>
    %1276 = arith.cmpf ogt, %491, %1275 : vector<2x1xf32>
    %1277 = vector.shape_cast %1276 : vector<2x1xi1> to vector<2x1xi1>
    %1278 = vector.broadcast %1277 : vector<2x1xi1> to vector<2x8xi1>
    %1279 = arith.select %1278, %1274, %1176 : vector<2x8xi1>, vector<2x8xf32>
    %1280 = vector.broadcast %2 : vector<1x8xf32> to vector<2x8xf32>
    %1281 = arith.addf %1279, %1280 : vector<2x8xf32>
    %cst_347 = arith.constant dense<0xFF800000> : vector<2xf32>
    %1282 = vector.multi_reduction <maximumf>, %1281, %cst_347 [1] : vector<2x8xf32> to vector<2xf32>
    %1283 = vector.shape_cast %1282 : vector<2xf32> to vector<2x1xf32>
    %1284 = vector.broadcast %1283 : vector<2x1xf32> to vector<2x8xf32>
    %1285 = arith.subf %1281, %1284 : vector<2x8xf32>
    %1286 = math.exp %1285 : vector<2x8xf32>
    %cst_348 = arith.constant dense<0.000000e+00> : vector<2xf32>
    %1287 = vector.multi_reduction <add>, %1286, %cst_348 [1] : vector<2x8xf32> to vector<2xf32>
    %1288 = vector.shape_cast %1287 : vector<2xf32> to vector<2x1xf32>
    %1289 = math.log %1288 : vector<2x1xf32>
    %1290 = arith.addf %1283, %1289 : vector<2x1xf32>
    %1291 = arith.subf %509, %1290 : vector<2x1xf32>
    %1292 = arith.mulf %1291, %4 : vector<2x1xf32>
    %cst_349 = arith.constant dense<0.000000e+00> : vector<2xf32>
    %1293 = vector.multi_reduction <add>, %1292, %cst_349 [1] : vector<2x1xf32> to vector<2xf32>
    %1294 = vector.shape_cast %1293 : vector<2xf32> to vector<2x1xf32>
    %cst_350 = arith.constant dense<0.000000e+00> : vector<1xf32>
    %1295 = vector.multi_reduction <add>, %1294, %cst_350 [0] : vector<2x1xf32> to vector<1xf32>
    %1296 = vector.shape_cast %1295 : vector<1xf32> to vector<1x1xf32>
    %cst_351 = arith.constant dense<0.000000e+00> : vector<2xf32>
    %1297 = vector.multi_reduction <add>, %545, %cst_351 [1] : vector<2x1xf32> to vector<2xf32>
    %1298 = vector.shape_cast %1297 : vector<2xf32> to vector<2x1xf32>
    %cst_352 = arith.constant dense<0.000000e+00> : vector<1xf32>
    %1299 = vector.multi_reduction <add>, %1298, %cst_352 [0] : vector<2x1xf32> to vector<1xf32>
    %1300 = vector.shape_cast %1299 : vector<1xf32> to vector<1x1xf32>
    %1301 = arith.addf %1296, %1300 : vector<1x1xf32>
    %1302 = arith.addf %1301, %556 : vector<1x1xf32>
    %1303 = vector.shape_cast %1302 : vector<1x1xf32> to vector<1x1x1xf32>
    %c0_353 = arith.constant 0 : index
    %c0_354 = arith.constant 0 : index
    %c0_355 = arith.constant 0 : index
    %1304 = vector.load %arg10[%c0_353, %c0_354, %c0_355] : memref<1x1x1xf32, #tpu.memory_space<vmem>>, vector<1x1x1xf32>
    tpu.vector_store %arg10[%c0_353, %c0_354, %c0_355], %1303 {strides = array<i32>} : memref<1x1x1xf32, #tpu.memory_space<vmem>>, vector<1x1x1xf32>,
    return
  }
  func.func @transform_0(%arg0: i32, %arg1: memref<64xi32, #tpu.memory_space<smem>>) -> (i32, i32, i32) {
    %c0_i32 = arith.constant 0 : i32
    %c0_i32_0 = arith.constant 0 : i32
    %c0_i32_1 = arith.constant 0 : i32
    return %c0_i32, %arg0, %c0_i32_0 : i32, i32, i32
  }
  func.func @transform_1(%arg0: i32, %arg1: memref<64xi32, #tpu.memory_space<smem>>) -> (i32, i32, i32) {
    %c0_i32 = arith.constant 0 : i32
    %c0_i32_0 = arith.constant 0 : i32
    %c0_i32_1 = arith.constant 0 : i32
    return %c0_i32, %arg0, %c0_i32_0 : i32, i32, i32
  }
  func.func @transform_2(%arg0: i32, %arg1: memref<64xi32, #tpu.memory_space<smem>>) -> (i32, i32) {
    %c0_i32 = arith.constant 0 : i32
    %c0_i32_0 = arith.constant 0 : i32
    return %arg0, %c0_i32 : i32, i32
  }
  func.func @transform_3(%arg0: i32, %arg1: memref<64xi32, #tpu.memory_space<smem>>) -> (i32, i32) {
    %c0_i32 = arith.constant 0 : i32
    %c0_i32_0 = arith.constant 0 : i32
    return %arg0, %c0_i32 : i32, i32
  }
  func.func @transform_4(%arg0: i32, %arg1: memref<64xi32, #tpu.memory_space<smem>>) -> (i32, i32) {
    %c0_i32 = arith.constant 0 : i32
    %c0_i32_0 = arith.constant 0 : i32
    %c0_i32_1 = arith.constant 0 : i32
    return %c0_i32, %c0_i32_0 : i32, i32
  }
  func.func @transform_5(%arg0: i32, %arg1: memref<64xi32, #tpu.memory_space<smem>>) -> (i32, i32) {
    %c0_i32 = arith.constant 0 : i32
    %c0_i32_0 = arith.constant 0 : i32
    %c0_i32_1 = arith.constant 0 : i32
    return %c0_i32, %c0_i32_0 : i32, i32
  }
  func.func @transform_6(%arg0: i32, %arg1: memref<64xi32, #tpu.memory_space<smem>>) -> (i32, i32) {
    %c0_i32 = arith.constant 0 : i32
    %c0_i32_0 = arith.constant 0 : i32
    %c0_i32_1 = arith.constant 0 : i32
    return %c0_i32, %c0_i32_0 : i32, i32
  }
  func.func @transform_7(%arg0: i32, %arg1: memref<64xi32, #tpu.memory_space<smem>>) -> (i32, i32) {
    %c0_i32 = arith.constant 0 : i32
    %c0_i32_0 = arith.constant 0 : i32
    %c0_i32_1 = arith.constant 0 : i32
    return %c0_i32, %c0_i32_0 : i32, i32
  }
  func.func @transform_8(%arg0: i32, %arg1: memref<64xi32, #tpu.memory_space<smem>>) -> (i32, i32, i32) {
    %c0_i32 = arith.constant 0 : i32
    %c0_i32_0 = arith.constant 0 : i32
    %c0_i32_1 = arith.constant 0 : i32
    return %arg0, %c0_i32, %c0_i32_0 : i32, i32, i32
  }
}

</mosaic_0001>

<llo_original>
// kernel: tpu_custom_call.1
$region0: #{tpu_custom_call.1}
  #allocation0 [shape = 'u32[]', space=smem, size = 0x4, offset = 0x4, fixed_abs, tag = 'smem constant byte address 0x4 - core index']
  #allocation1 [shape = 'u32[144,128]{1,0:T(1,128)}', space=vmem, size = 0x12000, scoped, tag = 'internal scratch']
  #allocation2 [shape = 's32[1]{0}', space=sflag, size = 0x4, scoped, tag = 'scoped memory for tpu_custom_call.1']
  #allocation3 [shape = 'u8[512]{0}', space=smem, size = 0x200, scoped, tag = 'prefetched SMEM operand 0']
  %s0 = inlined_call_operand.vmem [shape: s32[64], index: 0, kind: input, shape index: {}]
  %s1 = inlined_call_operand.vmem [shape: s32[8,2,1], index: 1, kind: input, shape index: {}]
  %s2 = inlined_call_operand.vmem [shape: f32[8,2,1], index: 2, kind: input, shape index: {}]
  %s3 = inlined_call_operand.vmem [shape: s32[2,1], index: 3, kind: input, shape index: {}]
  %s4 = inlined_call_operand.vmem [shape: f32[2,1], index: 4, kind: input, shape index: {}]
  %s5 = inlined_call_operand.vmem [shape: f32[32,8], index: 5, kind: input, shape index: {}]
  %s6 = inlined_call_operand.vmem [shape: f32[1,8], index: 6, kind: input, shape index: {}]
  %s7 = inlined_call_operand.vmem [shape: f32[1,8], index: 7, kind: input, shape index: {}]
  %s8 = inlined_call_operand.vmem [shape: f32[8,8], index: 8, kind: input, shape index: {}]
  %s9 = inlined_call_operand.hbm [shape: f32[1,1,1], index: 9, kind: output, shape index: {}]
  %s10 = sld [smem:[#allocation0]]
  $region42: #{tpu_custom_call.1} parent=0
    _
  %s12 = ssub.s32 1, %s10
  %s13 = scalar_select 0, %s12, %s10
  %s14 = sshll.u32 %s0, 4
  %s15 = int_to_ptr.vmem [resolvable:$true] %s14
  %17 = dma.vmem_to_smem %s15, 16, [#allocation3], [#allocation2]
  %18 = dma.done [#allocation2], 16
  %19 = sfence
  $region1: #{tpu_custom_call.1} parent=0
    #allocation4 [shape = 'u8[512]{0}', space=vmem, size = 0x400, scoped, tag = 'output window, operand 0, single buffered']
    #allocation5 [shape = 's32[1]{0}', space=sflag, size = 0x4, scoped, tag = 'scoped memory for tpu_custom_call.1']
    %20 = vsyncpa [#allocation5], 0
    // Predicated region
    $region2: #{tpu_custom_call.1} parent=1 // pred_check
      _
    $region3: #{tpu_custom_call.1} parent=1 // pred_check_branch
      %22 = sbr.rel (0) target = $region5
    $region4: #{tpu_custom_call.1} parent=1 // pred_region
      _
    $region5: #{tpu_custom_call.1} parent=1 // pred_fallthru
      _
    // Predicated region
    $region6: #{tpu_custom_call.1} parent=1 // pred_check
      _
    $region7: #{tpu_custom_call.1} parent=1 // pred_check_branch
      %24 = sbr.rel (0) target = $region9
    $region8: #{tpu_custom_call.1} parent=1 // pred_region
      _
    $region9: #{tpu_custom_call.1} parent=1 // pred_fallthru
      _
    // Predicated region
    $region10: #{tpu_custom_call.1} parent=1 // pred_check
      _
    $region11: #{tpu_custom_call.1} parent=1 // pred_check_branch
      %26 = sbr.rel (0) target = $region13
    $region12: #{tpu_custom_call.1} parent=1 // pred_region
      _
    $region13: #{tpu_custom_call.1} parent=1 // pred_fallthru
      _
    // Predicated region
    $region14: #{tpu_custom_call.1} parent=1 // pred_check
      _
    $region15: #{tpu_custom_call.1} parent=1 // pred_check_branch
      %28 = sbr.rel (0) target = $region17
    $region16: #{tpu_custom_call.1} parent=1 // pred_region
      _
    $region17: #{tpu_custom_call.1} parent=1 // pred_fallthru
      _
    // Predicated region
    $region18: #{tpu_custom_call.1} parent=1 // pred_check
      _
    $region19: #{tpu_custom_call.1} parent=1 // pred_check_branch
      %30 = sbr.rel (0) target = $region21
    $region20: #{tpu_custom_call.1} parent=1 // pred_region
      _
    $region21: #{tpu_custom_call.1} parent=1 // pred_fallthru
      _
    // Predicated region
    $region22: #{tpu_custom_call.1} parent=1 // pred_check
      _
    $region23: #{tpu_custom_call.1} parent=1 // pred_check_branch
      %32 = sbr.rel (0) target = $region25
    $region24: #{tpu_custom_call.1} parent=1 // pred_region
      _
    $region25: #{tpu_custom_call.1} parent=1 // pred_fallthru
      _
    // Predicated region
    $region26: #{tpu_custom_call.1} parent=1 // pred_check
      _
    $region27: #{tpu_custom_call.1} parent=1 // pred_check_branch
      %34 = sbr.rel (0) target = $region29
    $region28: #{tpu_custom_call.1} parent=1 // pred_region
      _
    $region29: #{tpu_custom_call.1} parent=1 // pred_fallthru
      _
    // Predicated region
    $region30: #{tpu_custom_call.1} parent=1 // pred_check
      _
    $region31: #{tpu_custom_call.1} parent=1 // pred_check_branch
      %36 = sbr.rel (0) target = $region33
    $region32: #{tpu_custom_call.1} parent=1 // pred_region
      _
    $region33: #{tpu_custom_call.1} parent=1 // pred_fallthru
      _
    %s37 = smul.u32 0, 2
    %v38 = vld [vmem:[%s6] sm:$0x1]
    %v39 = vld [vmem:[%s7] sm:$0x1]
    %v40 = vld [vmem:[%s8] sm:$0xff]
    %v41 = vld [vmem:[%s4] sm:$0x3]
    %v42 = vlaneseq
    %v43 = vand.u32 %v42, 127
    %s44 = smul.u32 0, 64
    %s45 = sld [smem:[#allocation3 + %s44]]
    %s46 = scalar_lea.vmem %s5, %s45
    %v47 = vld [vmem:[%s46] sm:$0x1]
    %s48 = sadd.s32 %s44, 1
    %s49 = sld [smem:[#allocation3 + %s48]]
    %s50 = scalar_lea.vmem %s5, %s49
    %v51 = vld [vmem:[%s50] sm:$0x1]
    %v52 = vadd.f32 %v47, %v51
    %s53 = sadd.s32 %s44, 2
    %s54 = sld [smem:[#allocation3 + %s53]]
    %s55 = scalar_lea.vmem %s5, %s54
    %v56 = vld [vmem:[%s55] sm:$0x1]
    %v57 = vadd.f32 %v52, %v56
    %s58 = sadd.s32 %s44, 3
    %s59 = sld [smem:[#allocation3 + %s58]]
    %s60 = scalar_lea.vmem %s5, %s59
    %v61 = vld [vmem:[%s60] sm:$0x1]
    %v62 = vadd.f32 %v57, %v61
    %s63 = sadd.s32 %s37, 1
    %s64 = smul.u32 %s63, 32
    %s65 = sld [smem:[#allocation3 + %s64]]
    %s66 = scalar_lea.vmem %s5, %s65
    %v67 = vld [vmem:[%s66] sm:$0x1]
    %s68 = sadd.s32 %s64, 1
    %s69 = sld [smem:[#allocation3 + %s68]]
    %s70 = scalar_lea.vmem %s5, %s69
    %v71 = vld [vmem:[%s70] sm:$0x1]
    %v72 = vadd.f32 %v67, %v71
    %s73 = sadd.s32 %s64, 2
    %s74 = sld [smem:[#allocation3 + %s73]]
    %s75 = scalar_lea.vmem %s5, %s74
    %v76 = vld [vmem:[%s75] sm:$0x1]
    %v77 = vadd.f32 %v72, %v76
    %s78 = sadd.s32 %s64, 3
    %s79 = sld [smem:[#allocation3 + %s78]]
    %s80 = scalar_lea.vmem %s5, %s79
    %v81 = vld [vmem:[%s80] sm:$0x1]
    %v82 = vadd.f32 %v77, %v81
    %v84 = vrot.slane %v82, 7
    %vm86 = vcmask 1040384
    %v87 = vsel %vm86, %v62, %v84
    %s88 = smul.u32 0, 16
    %s89 = sadd.s32 %s88, 1
    %s90 = smul.u32 %s89, 4
    %s91 = sld [smem:[#allocation3 + %s90]]
    %s92 = scalar_lea.vmem %s5, %s91
    %v93 = vld [vmem:[%s92] sm:$0x1]
    %s94 = sadd.s32 %s90, 1
    %s95 = sld [smem:[#allocation3 + %s94]]
    %s96 = scalar_lea.vmem %s5, %s95
    %v97 = vld [vmem:[%s96] sm:$0x1]
    %v98 = vadd.f32 %v93, %v97
    %s99 = sadd.s32 %s90, 2
    %s100 = sld [smem:[#allocation3 + %s99]]
    %s101 = scalar_lea.vmem %s5, %s100
    %v102 = vld [vmem:[%s101] sm:$0x1]
    %v103 = vadd.f32 %v98, %v102
    %s104 = sadd.s32 %s90, 3
    %s105 = sld [smem:[#allocation3 + %s104]]
    %s106 = scalar_lea.vmem %s5, %s105
    %v107 = vld [vmem:[%s106] sm:$0x1]
    %v108 = vadd.f32 %v103, %v107
    %s109 = smul.u32 %s63, 8
    %s110 = sadd.s32 %s109, 1
    %s111 = smul.u32 %s110, 4
    %s112 = sld [smem:[#allocation3 + %s111]]
    %s113 = scalar_lea.vmem %s5, %s112
    %v114 = vld [vmem:[%s113] sm:$0x1]
    %s115 = sadd.s32 %s111, 1
    %s116 = sld [smem:[#allocation3 + %s115]]
    %s117 = scalar_lea.vmem %s5, %s116
    %v118 = vld [vmem:[%s117] sm:$0x1]
    %v119 = vadd.f32 %v114, %v118
    %s120 = sadd.s32 %s111, 2
    %s121 = sld [smem:[#allocation3 + %s120]]
    %s122 = scalar_lea.vmem %s5, %s121
    %v123 = vld [vmem:[%s122] sm:$0x1]
    %v124 = vadd.f32 %v119, %v123
    %s125 = sadd.s32 %s111, 3
    %s126 = sld [smem:[#allocation3 + %s125]]
    %s127 = scalar_lea.vmem %s5, %s126
    %v128 = vld [vmem:[%s127] sm:$0x1]
    %v129 = vadd.f32 %v124, %v128
    %v131 = vrot.slane %v129, 7
    %v133 = vsel %vm86, %v108, %v131
    %s134 = sadd.s32 %s88, 2
    %s135 = smul.u32 %s134, 4
    %s136 = sld [smem:[#allocation3 + %s135]]
    %s137 = scalar_lea.vmem %s5, %s136
    %v138 = vld [vmem:[%s137] sm:$0x1]
    %s139 = sadd.s32 %s135, 1
    %s140 = sld [smem:[#allocation3 + %s139]]
    %s141 = scalar_lea.vmem %s5, %s140
    %v142 = vld [vmem:[%s141] sm:$0x1]
    %v143 = vadd.f32 %v138, %v142
    %s144 = sadd.s32 %s135, 2
    %s145 = sld [smem:[#allocation3 + %s144]]
    %s146 = scalar_lea.vmem %s5, %s145
    %v147 = vld [vmem:[%s146] sm:$0x1]
    %v148 = vadd.f32 %v143, %v147
    %s149 = sadd.s32 %s135, 3
    %s150 = sld [smem:[#allocation3 + %s149]]
    %s151 = scalar_lea.vmem %s5, %s150
    %v152 = vld [vmem:[%s151] sm:$0x1]
    %v153 = vadd.f32 %v148, %v152
    %s154 = sadd.s32 %s109, 2
    %s155 = smul.u32 %s154, 4
    %s156 = sld [smem:[#allocation3 + %s155]]
    %s157 = scalar_lea.vmem %s5, %s156
    %v158 = vld [vmem:[%s157] sm:$0x1]
    %s159 = sadd.s32 %s155, 1
    %s160 = sld [smem:[#allocation3 + %s159]]
    %s161 = scalar_lea.vmem %s5, %s160
    %v162 = vld [vmem:[%s161] sm:$0x1]
    %v163 = vadd.f32 %v158, %v162
    %s164 = sadd.s32 %s155, 2
    %s165 = sld [smem:[#allocation3 + %s164]]
    %s166 = scalar_lea.vmem %s5, %s165
    %v167 = vld [vmem:[%s166] sm:$0x1]
    %v168 = vadd.f32 %v163, %v167
    %s169 = sadd.s32 %s155, 3
    %s170 = sld [smem:[#allocation3 + %s169]]
    %s171 = scalar_lea.vmem %s5, %s170
    %v172 = vld [vmem:[%s171] sm:$0x1]
    %v173 = vadd.f32 %v168, %v172
    %v175 = vrot.slane %v173, 7
    %v177 = vsel %vm86, %v153, %v175
    %s178 = sadd.s32 %s88, 3
    %s179 = smul.u32 %s178, 4
    %s180 = sld [smem:[#allocation3 + %s179]]
    %s181 = scalar_lea.vmem %s5, %s180
    %v182 = vld [vmem:[%s181] sm:$0x1]
    %s183 = sadd.s32 %s179, 1
    %s184 = sld [smem:[#allocation3 + %s183]]
    %s185 = scalar_lea.vmem %s5, %s184
    %v186 = vld [vmem:[%s185] sm:$0x1]
    %v187 = vadd.f32 %v182, %v186
    %s188 = sadd.s32 %s179, 2
    %s189 = sld [smem:[#allocation3 + %s188]]
    %s190 = scalar_lea.vmem %s5, %s189
    %v191 = vld [vmem:[%s190] sm:$0x1]
    %v192 = vadd.f32 %v187, %v191
    %s193 = sadd.s32 %s179, 3
    %s194 = sld [smem:[#allocation3 + %s193]]
    %s195 = scalar_lea.vmem %s5, %s194
    %v196 = vld [vmem:[%s195] sm:$0x1]
    %v197 = vadd.f32 %v192, %v196
    %s198 = sadd.s32 %s109, 3
    %s199 = smul.u32 %s198, 4
    %s200 = sld [smem:[#allocation3 + %s199]]
    %s201 = scalar_lea.vmem %s5, %s200
    %v202 = vld [vmem:[%s201] sm:$0x1]
    %s203 = sadd.s32 %s199, 1
    %s204 = sld [smem:[#allocation3 + %s203]]
    %s205 = scalar_lea.vmem %s5, %s204
    %v206 = vld [vmem:[%s205] sm:$0x1]
    %v207 = vadd.f32 %v202, %v206
    %s208 = sadd.s32 %s199, 2
    %s209 = sld [smem:[#allocation3 + %s208]]
    %s210 = scalar_lea.vmem %s5, %s209
    %v211 = vld [vmem:[%s210] sm:$0x1]
    %v212 = vadd.f32 %v207, %v211
    %s213 = sadd.s32 %s199, 3
    %s214 = sld [smem:[#allocation3 + %s213]]
    %s215 = scalar_lea.vmem %s5, %s214
    %v216 = vld [vmem:[%s215] sm:$0x1]
    %v217 = vadd.f32 %v212, %v216
    %v219 = vrot.slane %v217, 7
    %v221 = vsel %vm86, %v197, %v219
    %s222 = sadd.s32 %s88, 4
    %s223 = smul.u32 %s222, 4
    %s224 = sld [smem:[#allocation3 + %s223]]
    %s225 = scalar_lea.vmem %s5, %s224
    %v226 = vld [vmem:[%s225] sm:$0x1]
    %s227 = sadd.s32 %s223, 1
    %s228 = sld [smem:[#allocation3 + %s227]]
    %s229 = scalar_lea.vmem %s5, %s228
    %v230 = vld [vmem:[%s229] sm:$0x1]
    %v231 = vadd.f32 %v226, %v230
    %s232 = sadd.s32 %s223, 2
    %s233 = sld [smem:[#allocation3 + %s232]]
    %s234 = scalar_lea.vmem %s5, %s233
    %v235 = vld [vmem:[%s234] sm:$0x1]
    %v236 = vadd.f32 %v231, %v235
    %s237 = sadd.s32 %s223, 3
    %s238 = sld [smem:[#allocation3 + %s237]]
    %s239 = scalar_lea.vmem %s5, %s238
    %v240 = vld [vmem:[%s239] sm:$0x1]
    %v241 = vadd.f32 %v236, %v240
    %s242 = sadd.s32 %s109, 4
    %s243 = smul.u32 %s242, 4
    %s244 = sld [smem:[#allocation3 + %s243]]
    %s245 = scalar_lea.vmem %s5, %s244
    %v246 = vld [vmem:[%s245] sm:$0x1]
    %s247 = sadd.s32 %s243, 1
    %s248 = sld [smem:[#allocation3 + %s247]]
    %s249 = scalar_lea.vmem %s5, %s248
    %v250 = vld [vmem:[%s249] sm:$0x1]
    %v251 = vadd.f32 %v246, %v250
    %s252 = sadd.s32 %s243, 2
    %s253 = sld [smem:[#allocation3 + %s252]]
    %s254 = scalar_lea.vmem %s5, %s253
    %v255 = vld [vmem:[%s254] sm:$0x1]
    %v256 = vadd.f32 %v251, %v255
    %s257 = sadd.s32 %s243, 3
    %s258 = sld [smem:[#allocation3 + %s257]]
    %s259 = scalar_lea.vmem %s5, %s258
    %v260 = vld [vmem:[%s259] sm:$0x1]
    %v261 = vadd.f32 %v256, %v260
    %v263 = vrot.slane %v261, 7
    %v265 = vsel %vm86, %v241, %v263
    %s266 = sadd.s32 %s88, 5
    %s267 = smul.u32 %s266, 4
    %s268 = sld [smem:[#allocation3 + %s267]]
    %s269 = scalar_lea.vmem %s5, %s268
    %v270 = vld [vmem:[%s269] sm:$0x1]
    %s271 = sadd.s32 %s267, 1
    %s272 = sld [smem:[#allocation3 + %s271]]
    %s273 = scalar_lea.vmem %s5, %s272
    %v274 = vld [vmem:[%s273] sm:$0x1]
    %v275 = vadd.f32 %v270, %v274
    %s276 = sadd.s32 %s267, 2
    %s277 = sld [smem:[#allocation3 + %s276]]
    %s278 = scalar_lea.vmem %s5, %s277
    %v279 = vld [vmem:[%s278] sm:$0x1]
    %v280 = vadd.f32 %v275, %v279
    %s281 = sadd.s32 %s267, 3
    %s282 = sld [smem:[#allocation3 + %s281]]
    %s283 = scalar_lea.vmem %s5, %s282
    %v284 = vld [vmem:[%s283] sm:$0x1]
    %v285 = vadd.f32 %v280, %v284
    %s286 = sadd.s32 %s109, 5
    %s287 = smul.u32 %s286, 4
    %s288 = sld [smem:[#allocation3 + %s287]]
    %s289 = scalar_lea.vmem %s5, %s288
    %v290 = vld [vmem:[%s289] sm:$0x1]
    %s291 = sadd.s32 %s287, 1
    %s292 = sld [smem:[#allocation3 + %s291]]
    %s293 = scalar_lea.vmem %s5, %s292
    %v294 = vld [vmem:[%s293] sm:$0x1]
    %v295 = vadd.f32 %v290, %v294
    %s296 = sadd.s32 %s287, 2
    %s297 = sld [smem:[#allocation3 + %s296]]
    %s298 = scalar_lea.vmem %s5, %s297
    %v299 = vld [vmem:[%s298] sm:$0x1]
    %v300 = vadd.f32 %v295, %v299
    %s301 = sadd.s32 %s287, 3
    %s302 = sld [smem:[#allocation3 + %s301]]
    %s303 = scalar_lea.vmem %s5, %s302
    %v304 = vld [vmem:[%s303] sm:$0x1]
    %v305 = vadd.f32 %v300, %v304
    %v307 = vrot.slane %v305, 7
    %v309 = vsel %vm86, %v285, %v307
    %s310 = sadd.s32 %s88, 6
    %s311 = smul.u32 %s310, 4
    %s312 = sld [smem:[#allocation3 + %s311]]
    %s313 = scalar_lea.vmem %s5, %s312
    %v314 = vld [vmem:[%s313] sm:$0x1]
    %s315 = sadd.s32 %s311, 1
    %s316 = sld [smem:[#allocation3 + %s315]]
    %s317 = scalar_lea.vmem %s5, %s316
    %v318 = vld [vmem:[%s317] sm:$0x1]
    %v319 = vadd.f32 %v314, %v318
    %s320 = sadd.s32 %s311, 2
    %s321 = sld [smem:[#allocation3 + %s320]]
    %s322 = scalar_lea.vmem %s5, %s321
    %v323 = vld [vmem:[%s322] sm:$0x1]
    %v324 = vadd.f32 %v319, %v323
    %s325 = sadd.s32 %s311, 3
    %s326 = sld [smem:[#allocation3 + %s325]]
    %s327 = scalar_lea.vmem %s5, %s326
    %v328 = vld [vmem:[%s327] sm:$0x1]
    %v329 = vadd.f32 %v324, %v328
    %s330 = sadd.s32 %s109, 6
    %s331 = smul.u32 %s330, 4
    %s332 = sld [smem:[#allocation3 + %s331]]
    %s333 = scalar_lea.vmem %s5, %s332
    %v334 = vld [vmem:[%s333] sm:$0x1]
    %s335 = sadd.s32 %s331, 1
    %s336 = sld [smem:[#allocation3 + %s335]]
    %s337 = scalar_lea.vmem %s5, %s336
    %v338 = vld [vmem:[%s337] sm:$0x1]
    %v339 = vadd.f32 %v334, %v338
    %s340 = sadd.s32 %s331, 2
    %s341 = sld [smem:[#allocation3 + %s340]]
    %s342 = scalar_lea.vmem %s5, %s341
    %v343 = vld [vmem:[%s342] sm:$0x1]
    %v344 = vadd.f32 %v339, %v343
    %s345 = sadd.s32 %s331, 3
    %s346 = sld [smem:[#allocation3 + %s345]]
    %s347 = scalar_lea.vmem %s5, %s346
    %v348 = vld [vmem:[%s347] sm:$0x1]
    %v349 = vadd.f32 %v344, %v348
    %v351 = vrot.slane %v349, 7
    %v353 = vsel %vm86, %v329, %v351
    %s354 = sadd.s32 %s88, 7
    %s355 = smul.u32 %s354, 4
    %s356 = sld [smem:[#allocation3 + %s355]]
    %s357 = scalar_lea.vmem %s5, %s356
    %v358 = vld [vmem:[%s357] sm:$0x1]
    %s359 = sadd.s32 %s355, 1
    %s360 = sld [smem:[#allocation3 + %s359]]
    %s361 = scalar_lea.vmem %s5, %s360
    %v362 = vld [vmem:[%s361] sm:$0x1]
    %v363 = vadd.f32 %v358, %v362
    %s364 = sadd.s32 %s355, 2
    %s365 = sld [smem:[#allocation3 + %s364]]
    %s366 = scalar_lea.vmem %s5, %s365
    %v367 = vld [vmem:[%s366] sm:$0x1]
    %v368 = vadd.f32 %v363, %v367
    %s369 = sadd.s32 %s355, 3
    %s370 = sld [smem:[#allocation3 + %s369]]
    %s371 = scalar_lea.vmem %s5, %s370
    %v372 = vld [vmem:[%s371] sm:$0x1]
    %v373 = vadd.f32 %v368, %v372
    %s374 = sadd.s32 %s109, 7
    %s375 = smul.u32 %s374, 4
    %s376 = sld [smem:[#allocation3 + %s375]]
    %s377 = scalar_lea.vmem %s5, %s376
    %v378 = vld [vmem:[%s377] sm:$0x1]
    %s379 = sadd.s32 %s375, 1
    %s380 = sld [smem:[#allocation3 + %s379]]
    %s381 = scalar_lea.vmem %s5, %s380
    %v382 = vld [vmem:[%s381] sm:$0x1]
    %v383 = vadd.f32 %v378, %v382
    %s384 = sadd.s32 %s375, 2
    %s385 = sld [smem:[#allocation3 + %s384]]
    %s386 = scalar_lea.vmem %s5, %s385
    %v387 = vld [vmem:[%s386] sm:$0x1]
    %v388 = vadd.f32 %v383, %v387
    %s389 = sadd.s32 %s375, 3
    %s390 = sld [smem:[#allocation3 + %s389]]
    %s391 = scalar_lea.vmem %s5, %s390
    %v392 = vld [vmem:[%s391] sm:$0x1]
    %v393 = vadd.f32 %v388, %v392
    %v395 = vrot.slane %v393, 7
    %v397 = vsel %vm86, %v373, %v395
    %v398 = vld [vmem:[%s1] sm:$0x3]
    %399 = vset.pattern.permute.xlu0 0
    %400 = vperm.xlu0 %399, %v398
    %v401 = vpop.permute.xlu0 %400
    %vm402 = vcmp.eq.s32.totalorder %v43, %v401
    %v403 = vsel %vm402, 1, 0
    %v404 = vcvt.s32.f32 %v403
    %s405 = scalar_lea.vmem %s1, 2
    %v406 = vld [vmem:[%s405] sm:$0x3]
    %407 = vset.pattern.permute.xlu0 0
    %408 = vperm.xlu0 %407, %v406
    %v409 = vpop.permute.xlu0 %408
    %vm410 = vcmp.eq.s32.totalorder %v43, %v409
    %v411 = vsel %vm410, 1, 0
    %v412 = vcvt.s32.f32 %v411
    %s413 = scalar_lea.vmem %s1, 4
    %v414 = vld [vmem:[%s413] sm:$0x3]
    %415 = vset.pattern.permute.xlu0 0
    %416 = vperm.xlu0 %415, %v414
    %v417 = vpop.permute.xlu0 %416
    %vm418 = vcmp.eq.s32.totalorder %v43, %v417
    %v419 = vsel %vm418, 1, 0
    %v420 = vcvt.s32.f32 %v419
    %s421 = scalar_lea.vmem %s1, 6
    %v422 = vld [vmem:[%s421] sm:$0x3]
    %423 = vset.pattern.permute.xlu0 0
    %424 = vperm.xlu0 %423, %v422
    %v425 = vpop.permute.xlu0 %424
    %vm426 = vcmp.eq.s32.totalorder %v43, %v425
    %v427 = vsel %vm426, 1, 0
    %v428 = vcvt.s32.f32 %v427
    %s429 = scalar_lea.vmem %s1, 8
    %v430 = vld [vmem:[%s429] sm:$0x3]
    %431 = vset.pattern.permute.xlu0 0
    %432 = vperm.xlu0 %431, %v430
    %v433 = vpop.permute.xlu0 %432
    %vm434 = vcmp.eq.s32.totalorder %v43, %v433
    %v435 = vsel %vm434, 1, 0
    %v436 = vcvt.s32.f32 %v435
    %s437 = scalar_lea.vmem %s1, 10
    %v438 = vld [vmem:[%s437] sm:$0x3]
    %439 = vset.pattern.permute.xlu0 0
    %440 = vperm.xlu0 %439, %v438
    %v441 = vpop.permute.xlu0 %440
    %vm442 = vcmp.eq.s32.totalorder %v43, %v441
    %v443 = vsel %vm442, 1, 0
    %v444 = vcvt.s32.f32 %v443
    %s445 = scalar_lea.vmem %s1, 12
    %v446 = vld [vmem:[%s445] sm:$0x3]
    %447 = vset.pattern.permute.xlu0 0
    %448 = vperm.xlu0 %447, %v446
    %v449 = vpop.permute.xlu0 %448
    %vm450 = vcmp.eq.s32.totalorder %v43, %v449
    %v451 = vsel %vm450, 1, 0
    %v452 = vcvt.s32.f32 %v451
    %s453 = scalar_lea.vmem %s1, 14
    %v454 = vld [vmem:[%s453] sm:$0x3]
    %455 = vset.pattern.permute.xlu0 0
    %456 = vperm.xlu0 %455, %v454
    %v457 = vpop.permute.xlu0 %456
    %vm458 = vcmp.eq.s32.totalorder %v43, %v457
    %v459 = vsel %vm458, 1, 0
    %v460 = vcvt.s32.f32 %v459
    %s461 = scalar_lea.vmem %s2, 2
    %v462 = vld [vmem:[%s461] sm:$0x3]
    %s463 = scalar_lea.vmem %s2, 4
    %v464 = vld [vmem:[%s463] sm:$0x3]
    %s465 = scalar_lea.vmem %s2, 6
    %v466 = vld [vmem:[%s465] sm:$0x3]
    %s467 = scalar_lea.vmem %s2, 8
    %v468 = vld [vmem:[%s467] sm:$0x3]
    %s469 = scalar_lea.vmem %s2, 10
    %v470 = vld [vmem:[%s469] sm:$0x3]
    %s471 = scalar_lea.vmem %s2, 12
    %v472 = vld [vmem:[%s471] sm:$0x3]
    %s473 = scalar_lea.vmem %s2, 14
    %v474 = vld [vmem:[%s473] sm:$0x3]
    %v475 = vld [vmem:[%s3] sm:$0x3]
    %476 = vset.pattern.permute.xlu0 0
    %477 = vperm.xlu0 %476, %v475
    %v478 = vpop.permute.xlu0 %477
    %vm479 = vcmp.eq.s32.totalorder %v43, %v478
    %v480 = vsel %vm479, 1, 0
    %v481 = vcvt.s32.f32 %v480
    %v483 = vlaneseq
    %v484 = vshrl.u32 %v483, 7
    %v485 = vsub.s32 0, %v484
    %v486 = vrot.slane %v38, %v485
    %v488 = vmul.f32 %v404, %v486
    %vm489 = vcmask 58368
    %v490 = vsel %vm489, %v488, 0.0
    %491 = vadd.xlane.f32.xlu0 %v490
    %v492 = vpop.xlane.xlu0 %491
    %v493 = vmul.f32 %v404, %v87
    %v494 = vsel %vm489, %v493, 0.0
    %495 = vadd.xlane.f32.xlu0 %v494
    %v496 = vpop.xlane.xlu0 %495
    %v497 = vadd.f32 %v492, %v496
    %v499 = vlaneseq
    %v500 = vshrl.u32 %v499, 7
    %v501 = vsub.s32 0, %v500
    %v502 = vrot.slane %v39, %v501
    %v504 = vmul.f32 %v481, %v502
    %v505 = vsel %vm489, %v504, 0.0
    %506 = vadd.xlane.f32.xlu0 %v505
    %v507 = vpop.xlane.xlu0 %506
    %v508 = vadd.f32 %v497, %v507
    %v509 = vmul.f32 %v412, %v133
    %v510 = vsel %vm489, %v509, 0.0
    %511 = vadd.xlane.f32.xlu0 %v510
    %v512 = vpop.xlane.xlu0 %511
    %v513 = vmul.f32 %v462, %v512
    %v514 = vadd.f32 %v513, 0.0
    %v515 = vmul.f32 %v420, %v177
    %v516 = vsel %vm489, %v515, 0.0
    %517 = vadd.xlane.f32.xlu0 %v516
    %v518 = vpop.xlane.xlu0 %517
    %v519 = vmul.f32 %v464, %v518
    %v520 = vadd.f32 %v514, %v519
    %v521 = vmul.f32 %v428, %v221
    %v522 = vsel %vm489, %v521, 0.0
    %523 = vadd.xlane.f32.xlu0 %v522
    %v524 = vpop.xlane.xlu0 %523
    %v525 = vmul.f32 %v466, %v524
    %v526 = vadd.f32 %v520, %v525
    %v527 = vmul.f32 %v436, %v265
    %v528 = vsel %vm489, %v527, 0.0
    %529 = vadd.xlane.f32.xlu0 %v528
    %v530 = vpop.xlane.xlu0 %529
    %v531 = vmul.f32 %v468, %v530
    %v532 = vadd.f32 %v526, %v531
    %v533 = vmul.f32 %v444, %v309
    %v534 = vsel %vm489, %v533, 0.0
    %535 = vadd.xlane.f32.xlu0 %v534
    %v536 = vpop.xlane.xlu0 %535
    %v537 = vmul.f32 %v470, %v536
    %v538 = vadd.f32 %v532, %v537
    %v539 = vmul.f32 %v452, %v353
    %v540 = vsel %vm489, %v539, 0.0
    %541 = vadd.xlane.f32.xlu0 %v540
    %v542 = vpop.xlane.xlu0 %541
    %v543 = vmul.f32 %v472, %v542
    %v544 = vadd.f32 %v538, %v543
    %v545 = vmul.f32 %v460, %v397
    %v546 = vsel %vm489, %v545, 0.0
    %547 = vadd.xlane.f32.xlu0 %v546
    %v548 = vpop.xlane.xlu0 %547
    %v549 = vmul.f32 %v474, %v548
    %v550 = vadd.f32 %v544, %v549
    %v552 = vrot.slane %v420, 6
    %v555 = vrot.slane %v428, 4
    %v558 = vrot.slane %v436, 2
    %v561 = vrot.slane %v452, 6
    %v564 = vrot.slane %v460, 4
    %vm566 = vcmask 1041408
    %v567 = vsel %vm566, %v412, %v552
    %vm568 = vcmask 1043456
    %v569 = vsel %vm568, %v567, %v555
    %vm570 = vcmask 1045504
    %v571 = vsel %vm570, %v569, %v558
    %v572 = vsel %vm566, %v444, %v561
    %v573 = vsel %vm568, %v572, %v564
    %v575 = vrot.slane %v412, 6
    %v577 = vrot.slane %v420, 4
    %v579 = vrot.slane %v428, 2
    %v582 = vrot.slane %v444, 6
    %v584 = vrot.slane %v452, 4
    %v586 = vsel %vm566, %v404, %v575
    %v587 = vsel %vm568, %v586, %v577
    %v588 = vsel %vm570, %v587, %v579
    %v589 = vsel %vm566, %v436, %v582
    %v590 = vsel %vm568, %v589, %v584
    %v592 = vrot.slane %v464, 6
    %v595 = vrot.slane %v466, 4
    %v598 = vrot.slane %v468, 2
    %v601 = vrot.slane %v472, 6
    %v604 = vrot.slane %v474, 4
    %v606 = vsel %vm566, %v462, %v592
    %v607 = vsel %vm568, %v606, %v595
    %v608 = vsel %vm570, %v607, %v598
    %v609 = vsel %vm566, %v470, %v601
    %v610 = vsel %vm568, %v609, %v604
    %vm611 = vcmask 64512
    %v613 = vsel %vm611, %v571, 0
    %v616 = vsel %vm611, %v573, 0
    %618 = vmatprep.subr.mxu0 0.0
    %619 = vmatpush1.msra.mxu0 0.0
    %620 = vmatprep.subr.mxu0 0.0
    %621 = vmatpush1.msra.mxu0 0.0
    %622 = vmatprep.subr.mxu0 0.0
    %623 = vmatpush1.msra.mxu0 0.0
    %624 = vmatprep.subr.mxu0 0.0
    %625 = vmatpush1.msra.mxu0 0.0
    %626 = vmatprep.subr.mxu0 0.0
    %627 = vmatpush1.msra.mxu0 0.0
    %628 = vmatprep.subr.mxu0 0.0
    %629 = vmatpush1.msra.mxu0 0.0
    %630 = vmatprep.subr.mxu0 0.0
    %631 = vmatpush1.msra.mxu0 0.0
    %632 = vmatprep.subr.mxu0 0.0
    %633 = vmatpush1.msra.mxu0 0.0
    %634 = vmatprep.subr.mxu0 0.0
    %635 = vmatpush1.msra.mxu0 0.0
    %636 = vmatprep.subr.mxu0 0.0
    %637 = vmatpush1.msra.mxu0 0.0
    %638 = vmatprep.subr.mxu0 0.0
    %639 = vmatpush1.msra.mxu0 0.0
    %640 = vmatprep.subr.mxu0 0.0
    %641 = vmatpush1.msra.mxu0 0.0
    %642 = vmatprep.subr.mxu0 0.0
    %643 = vmatpush1.msra.mxu0 0.0
    %644 = vmatprep.subr.mxu0 0.0
    %645 = vmatpush1.msra.mxu0 0.0
    %646 = vmatprep.subr.mxu0 0.0
    %647 = vmatpush1.msra.mxu0 0.0
    %648 = vmatprep.subr.mxu0 0.0
    %649 = vmatpush1.msra.mxu0 %v40
    %650 = vmatprep.subr.mxu0 0.0
    %651 = vmatpush2.msra.mxu0 0.0
    %652 = vmatprep.subr.mxu0 0.0
    %653 = vmatpush2.msra.mxu0 0.0
    %654 = vmatprep.subr.mxu0 0.0
    %655 = vmatpush2.msra.mxu0 0.0
    %656 = vmatprep.subr.mxu0 0.0
    %657 = vmatpush2.msra.mxu0 0.0
    %658 = vmatprep.subr.mxu0 0.0
    %659 = vmatpush2.msra.mxu0 0.0
    %660 = vmatprep.subr.mxu0 0.0
    %661 = vmatpush2.msra.mxu0 0.0
    %662 = vmatprep.subr.mxu0 0.0
    %663 = vmatpush2.msra.mxu0 0.0
    %664 = vmatprep.subr.mxu0 0.0
    %665 = vmatpush2.msra.mxu0 0.0
    %666 = vmatprep.subr.mxu0 0.0
    %667 = vmatpush2.msra.mxu0 0.0
    %668 = vmatprep.subr.mxu0 0.0
    %669 = vmatpush2.msra.mxu0 0.0
    %670 = vmatprep.subr.mxu0 0.0
    %671 = vmatpush2.msra.mxu0 0.0
    %672 = vmatprep.subr.mxu0 0.0
    %673 = vmatpush2.msra.mxu0 0.0
    %674 = vmatprep.subr.mxu0 0.0
    %675 = vmatpush2.msra.mxu0 0.0
    %676 = vmatprep.subr.mxu0 0.0
    %677 = vmatpush2.msra.mxu0 0.0
    %678 = vmatprep.subr.mxu0 0.0
    %679 = vmatpush2.msra.mxu0 0.0
    %680 = vmatprep.subr.mxu0 0.0
    %681 = vmatpush2.msra.mxu0 0.0
    %682 = vmatprep.mubr.f32.mxu0 0.0
    %683 = vmatmul.mubr.f32.gmra.mxu0 %v613
    %v684 = vpop.f32.mrf.mxu0
    %v685 = vadd.f32 0.0, %v684
    %v686 = vpop.f32.mrf.mxu0
    %687 = vmatprep.mubr.f32.mxu0 0.0
    %688 = vmatmul.mubr.f32.gmra.mxu0 %v616
    %v689 = vpop.f32.mrf.mxu0
    %v690 = vadd.f32 0.0, %v689
    %v691 = vpop.f32.mrf.mxu0
    %692 = vdwg.mxu0
    %v693 = vmul.f32 %v685, %v588
    %v694 = vmul.f32 %v690, %v590
    %696 = vset.pattern.permute.xlu0 0
    %697 = vperm.xlu0 %696, %v608
    %v698 = vpop.permute.xlu0 %697
    %701 = vset.pattern.permute.xlu0 0
    %702 = vperm.xlu0 %701, %v610
    %v703 = vpop.permute.xlu0 %702
    %v705 = vmul.f32 %v693, %v698
    %v706 = vmul.f32 %v694, %v703
    %v707 = vsel %vm611, %v705, 0.0
    %708 = vadd.xlane.f32.xlu0 %v707
    %v709 = vpop.xlane.xlu0 %708
    %vm710 = vcmask 62464
    %v711 = vsel %vm710, %v706, 0.0
    %712 = vadd.xlane.f32.xlu0 %v711
    %v713 = vpop.xlane.xlu0 %712
    %v714 = vsel %vm570, %v713, 0.0
    %v715 = vadd.f32 %v709, %v714
    %v716 = vrot.slane %v715, 4
    %v717 = vadd.f32 %v715, %v716
    %v718 = vrot.slane %v717, 2
    %v719 = vadd.f32 %v717, %v718
    %v720 = vrot.slane %v719, 1
    %v721 = vadd.f32 %v719, %v720
    %v722 = vadd.f32 %v486, %v87
    %v723 = vlaneseq
    %v724 = vshrl.u32 %v723, 7
    %v725 = vsub.s32 0, %v724
    %v726 = vrot.slane %v40, %v725
    %v727 = vadd.f32 %v722, %v726
    %v728 = vsel %vm489, %v727, -inf
    %729 = vmax.xlane.f32.xlu0 %v728
    %v730 = vpop.xlane.xlu0 %729
    %v731 = vsub.f32 %v727, %v730
    %v732 = vmul.f32 %v731, 1.442695
    %v733 = vpow.pop %v732
    %v734 = vsel %vm489, %v733, 0.0
    %735 = vadd.xlane.f32.xlu0 %v734
    %v736 = vpop.xlane.xlu0 %735
    %v737 = vlog2.pop %v736
    %v738 = vmul.f32 %v737, 0.6931472
    %v739 = vadd.f32 %v730, %v738
    %v740 = vlaneseq
    %v741 = vshrl.u32 %v740, 7
    %v742 = vsub.s32 1, %v741
    %v743 = vrot.slane %v40, %v742
    %v744 = vadd.f32 %v722, %v743
    %v745 = vsel %vm489, %v744, -inf
    %746 = vmax.xlane.f32.xlu0 %v745
    %v747 = vpop.xlane.xlu0 %746
    %v748 = vsub.f32 %v744, %v747
    %v749 = vmul.f32 %v748, 1.442695
    %v750 = vpow.pop %v749
    %v751 = vsel %vm489, %v750, 0.0
    %752 = vadd.xlane.f32.xlu0 %v751
    %v753 = vpop.xlane.xlu0 %752
    %v754 = vlog2.pop %v753
    %v755 = vmul.f32 %v754, 0.6931472
    %v756 = vadd.f32 %v747, %v755
    %v757 = vlaneseq
    %v758 = vshrl.u32 %v757, 7
    %v759 = vsub.s32 2, %v758
    %v760 = vrot.slane %v40, %v759
    %v761 = vadd.f32 %v722, %v760
    %v762 = vsel %vm489, %v761, -inf
    %763 = vmax.xlane.f32.xlu0 %v762
    %v764 = vpop.xlane.xlu0 %763
    %v765 = vsub.f32 %v761, %v764
    %v766 = vmul.f32 %v765, 1.442695
    %v767 = vpow.pop %v766
    %v768 = vsel %vm489, %v767, 0.0
    %769 = vadd.xlane.f32.xlu0 %v768
    %v770 = vpop.xlane.xlu0 %769
    %v771 = vlog2.pop %v770
    %v772 = vmul.f32 %v771, 0.6931472
    %v773 = vadd.f32 %v764, %v772
    %v774 = vlaneseq
    %v775 = vshrl.u32 %v774, 7
    %v776 = vsub.s32 3, %v775
    %v777 = vrot.slane %v40, %v776
    %v778 = vadd.f32 %v722, %v777
    %v779 = vsel %vm489, %v778, -inf
    %780 = vmax.xlane.f32.xlu0 %v779
    %v781 = vpop.xlane.xlu0 %780
    %v782 = vsub.f32 %v778, %v781
    %v783 = vmul.f32 %v782, 1.442695
    %v784 = vpow.pop %v783
    %v785 = vsel %vm489, %v784, 0.0
    %786 = vadd.xlane.f32.xlu0 %v785
    %v787 = vpop.xlane.xlu0 %786
    %v788 = vlog2.pop %v787
    %v789 = vmul.f32 %v788, 0.6931472
    %v790 = vadd.f32 %v781, %v789
    %v791 = vlaneseq
    %v792 = vshrl.u32 %v791, 7
    %v793 = vsub.s32 4, %v792
    %v794 = vrot.slane %v40, %v793
    %v795 = vadd.f32 %v722, %v794
    %v796 = vsel %vm489, %v795, -inf
    %797 = vmax.xlane.f32.xlu0 %v796
    %v798 = vpop.xlane.xlu0 %797
    %v799 = vsub.f32 %v795, %v798
    %v800 = vmul.f32 %v799, 1.442695
    %v801 = vpow.pop %v800
    %v802 = vsel %vm489, %v801, 0.0
    %803 = vadd.xlane.f32.xlu0 %v802
    %v804 = vpop.xlane.xlu0 %803
    %v805 = vlog2.pop %v804
    %v806 = vmul.f32 %v805, 0.6931472
    %v807 = vadd.f32 %v798, %v806
    %v808 = vlaneseq
    %v809 = vshrl.u32 %v808, 7
    %v810 = vsub.s32 5, %v809
    %v811 = vrot.slane %v40, %v810
    %v812 = vadd.f32 %v722, %v811
    %v813 = vsel %vm489, %v812, -inf
    %814 = vmax.xlane.f32.xlu0 %v813
    %v815 = vpop.xlane.xlu0 %814
    %v816 = vsub.f32 %v812, %v815
    %v817 = vmul.f32 %v816, 1.442695
    %v818 = vpow.pop %v817
    %v819 = vsel %vm489, %v818, 0.0
    %820 = vadd.xlane.f32.xlu0 %v819
    %v821 = vpop.xlane.xlu0 %820
    %v822 = vlog2.pop %v821
    %v823 = vmul.f32 %v822, 0.6931472
    %v824 = vadd.f32 %v815, %v823
    %v825 = vlaneseq
    %v826 = vshrl.u32 %v825, 7
    %v827 = vsub.s32 6, %v826
    %v828 = vrot.slane %v40, %v827
    %v829 = vadd.f32 %v722, %v828
    %v830 = vsel %vm489, %v829, -inf
    %831 = vmax.xlane.f32.xlu0 %v830
    %v832 = vpop.xlane.xlu0 %831
    %v833 = vsub.f32 %v829, %v832
    %v834 = vmul.f32 %v833, 1.442695
    %v835 = vpow.pop %v834
    %v836 = vsel %vm489, %v835, 0.0
    %837 = vadd.xlane.f32.xlu0 %v836
    %v838 = vpop.xlane.xlu0 %837
    %v839 = vlog2.pop %v838
    %v840 = vmul.f32 %v839, 0.6931472
    %v841 = vadd.f32 %v832, %v840
    %v842 = vlaneseq
    %v843 = vshrl.u32 %v842, 7
    %v844 = vsub.s32 7, %v843
    %v845 = vrot.slane %v40, %v844
    %v846 = vadd.f32 %v722, %v845
    %v847 = vsel %vm489, %v846, -inf
    %848 = vmax.xlane.f32.xlu0 %v847
    %v849 = vpop.xlane.xlu0 %848
    %v850 = vsub.f32 %v846, %v849
    %v851 = vmul.f32 %v850, 1.442695
    %v852 = vpow.pop %v851
    %v853 = vsel %vm489, %v852, 0.0
    %854 = vadd.xlane.f32.xlu0 %v853
    %v855 = vpop.xlane.xlu0 %854
    %v856 = vlog2.pop %v855
    %v857 = vmul.f32 %v856, 0.6931472
    %v858 = vadd.f32 %v849, %v857
    %vm859 = vcmask 7168
    %v860 = vsel %vm859, %v739, %v756
    %vm861 = vcmask 15360
    %v862 = vsel %vm861, %v860, %v773
    %vm863 = vcmask 23552
    %v864 = vsel %vm863, %v862, %v790
    %vm865 = vcmask 31744
    %v866 = vsel %vm865, %v864, %v807
    %vm867 = vcmask 39936
    %v868 = vsel %vm867, %v866, %v824
    %vm869 = vcmask 48128
    %v870 = vsel %vm869, %v868, %v841
    %vm871 = vcmask 56320
    %v872 = vsel %vm871, %v870, %v858
    %v873 = vadd.f32 %v872, %v133
    %vm874 = vcmp.gt.f32.partialorder %v462, 0.0
    %v875 = vsel %vm874, 1, 0
    %876 = vset.pattern.permute.xlu0 0
    %877 = vperm.xlu0 %876, %v875
    %v878 = vpop.permute.xlu0 %877
    %vm879 = vcmp.eq.s32.totalorder %v878, 1
    %v880 = vsel %vm879, %v873, %v722
    %v881 = vadd.f32 %v880, %v726
    %v882 = vsel %vm489, %v881, -inf
    %883 = vmax.xlane.f32.xlu0 %v882
    %v884 = vpop.xlane.xlu0 %883
    %v885 = vsub.f32 %v881, %v884
    %v886 = vmul.f32 %v885, 1.442695
    %v887 = vpow.pop %v886
    %v888 = vsel %vm489, %v887, 0.0
    %889 = vadd.xlane.f32.xlu0 %v888
    %v890 = vpop.xlane.xlu0 %889
    %v891 = vlog2.pop %v890
    %v892 = vmul.f32 %v891, 0.6931472
    %v893 = vadd.f32 %v884, %v892
    %v894 = vadd.f32 %v880, %v743
    %v895 = vsel %vm489, %v894, -inf
    %896 = vmax.xlane.f32.xlu0 %v895
    %v897 = vpop.xlane.xlu0 %896
    %v898 = vsub.f32 %v894, %v897
    %v899 = vmul.f32 %v898, 1.442695
    %v900 = vpow.pop %v899
    %v901 = vsel %vm489, %v900, 0.0
    %902 = vadd.xlane.f32.xlu0 %v901
    %v903 = vpop.xlane.xlu0 %902
    %v904 = vlog2.pop %v903
    %v905 = vmul.f32 %v904, 0.6931472
    %v906 = vadd.f32 %v897, %v905
    %v907 = vadd.f32 %v880, %v760
    %v908 = vsel %vm489, %v907, -inf
    %909 = vmax.xlane.f32.xlu0 %v908
    %v910 = vpop.xlane.xlu0 %909
    %v911 = vsub.f32 %v907, %v910
    %v912 = vmul.f32 %v911, 1.442695
    %v913 = vpow.pop %v912
    %v914 = vsel %vm489, %v913, 0.0
    %915 = vadd.xlane.f32.xlu0 %v914
    %v916 = vpop.xlane.xlu0 %915
    %v917 = vlog2.pop %v916
    %v918 = vmul.f32 %v917, 0.6931472
    %v919 = vadd.f32 %v910, %v918
    %v920 = vadd.f32 %v880, %v777
    %v921 = vsel %vm489, %v920, -inf
    %922 = vmax.xlane.f32.xlu0 %v921
    %v923 = vpop.xlane.xlu0 %922
    %v924 = vsub.f32 %v920, %v923
    %v925 = vmul.f32 %v924, 1.442695
    %v926 = vpow.pop %v925
    %v927 = vsel %vm489, %v926, 0.0
    %928 = vadd.xlane.f32.xlu0 %v927
    %v929 = vpop.xlane.xlu0 %928
    %v930 = vlog2.pop %v929
    %v931 = vmul.f32 %v930, 0.6931472
    %v932 = vadd.f32 %v923, %v931
    %v933 = vadd.f32 %v880, %v794
    %v934 = vsel %vm489, %v933, -inf
    %935 = vmax.xlane.f32.xlu0 %v934
    %v936 = vpop.xlane.xlu0 %935
    %v937 = vsub.f32 %v933, %v936
    %v938 = vmul.f32 %v937, 1.442695
    %v939 = vpow.pop %v938
    %v940 = vsel %vm489, %v939, 0.0
    %941 = vadd.xlane.f32.xlu0 %v940
    %v942 = vpop.xlane.xlu0 %941
    %v943 = vlog2.pop %v942
    %v944 = vmul.f32 %v943, 0.6931472
    %v945 = vadd.f32 %v936, %v944
    %v946 = vadd.f32 %v880, %v811
    %v947 = vsel %vm489, %v946, -inf
    %948 = vmax.xlane.f32.xlu0 %v947
    %v949 = vpop.xlane.xlu0 %948
    %v950 = vsub.f32 %v946, %v949
    %v951 = vmul.f32 %v950, 1.442695
    %v952 = vpow.pop %v951
    %v953 = vsel %vm489, %v952, 0.0
    %954 = vadd.xlane.f32.xlu0 %v953
    %v955 = vpop.xlane.xlu0 %954
    %v956 = vlog2.pop %v955
    %v957 = vmul.f32 %v956, 0.6931472
    %v958 = vadd.f32 %v949, %v957
    %v959 = vadd.f32 %v880, %v828
    %v960 = vsel %vm489, %v959, -inf
    %961 = vmax.xlane.f32.xlu0 %v960
    %v962 = vpop.xlane.xlu0 %961
    %v963 = vsub.f32 %v959, %v962
    %v964 = vmul.f32 %v963, 1.442695
    %v965 = vpow.pop %v964
    %v966 = vsel %vm489, %v965, 0.0
    %967 = vadd.xlane.f32.xlu0 %v966
    %v968 = vpop.xlane.xlu0 %967
    %v969 = vlog2.pop %v968
    %v970 = vmul.f32 %v969, 0.6931472
    %v971 = vadd.f32 %v962, %v970
    %v972 = vadd.f32 %v880, %v845
    %v973 = vsel %vm489, %v972, -inf
    %974 = vmax.xlane.f32.xlu0 %v973
    %v975 = vpop.xlane.xlu0 %974
    %v976 = vsub.f32 %v972, %v975
    %v977 = vmul.f32 %v976, 1.442695
    %v978 = vpow.pop %v977
    %v979 = vsel %vm489, %v978, 0.0
    %980 = vadd.xlane.f32.xlu0 %v979
    %v981 = vpop.xlane.xlu0 %980
    %v982 = vlog2.pop %v981
    %v983 = vmul.f32 %v982, 0.6931472
    %v984 = vadd.f32 %v975, %v983
    %v985 = vsel %vm859, %v893, %v906
    %v986 = vsel %vm861, %v985, %v919
    %v987 = vsel %vm863, %v986, %v932
    %v988 = vsel %vm865, %v987, %v945
    %v989 = vsel %vm867, %v988, %v958
    %v990 = vsel %vm869, %v989, %v971
    %v991 = vsel %vm871, %v990, %v984
    %v992 = vadd.f32 %v991, %v177
    %vm993 = vcmp.gt.f32.partialorder %v464, 0.0
    %v994 = vsel %vm993, 1, 0
    %995 = vset.pattern.permute.xlu0 0
    %996 = vperm.xlu0 %995, %v994
    %v997 = vpop.permute.xlu0 %996
    %vm998 = vcmp.eq.s32.totalorder %v997, 1
    %v999 = vsel %vm998, %v992, %v880
    %v1000 = vadd.f32 %v999, %v726
    %v1001 = vsel %vm489, %v1000, -inf
    %1002 = vmax.xlane.f32.xlu0 %v1001
    %v1003 = vpop.xlane.xlu0 %1002
    %v1004 = vsub.f32 %v1000, %v1003
    %v1005 = vmul.f32 %v1004, 1.442695
    %v1006 = vpow.pop %v1005
    %v1007 = vsel %vm489, %v1006, 0.0
    %1008 = vadd.xlane.f32.xlu0 %v1007
    %v1009 = vpop.xlane.xlu0 %1008
    %v1010 = vlog2.pop %v1009
    %v1011 = vmul.f32 %v1010, 0.6931472
    %v1012 = vadd.f32 %v1003, %v1011
    %v1013 = vadd.f32 %v999, %v743
    %v1014 = vsel %vm489, %v1013, -inf
    %1015 = vmax.xlane.f32.xlu0 %v1014
    %v1016 = vpop.xlane.xlu0 %1015
    %v1017 = vsub.f32 %v1013, %v1016
    %v1018 = vmul.f32 %v1017, 1.442695
    %v1019 = vpow.pop %v1018
    %v1020 = vsel %vm489, %v1019, 0.0
    %1021 = vadd.xlane.f32.xlu0 %v1020
    %v1022 = vpop.xlane.xlu0 %1021
    %v1023 = vlog2.pop %v1022
    %v1024 = vmul.f32 %v1023, 0.6931472
    %v1025 = vadd.f32 %v1016, %v1024
    %v1026 = vadd.f32 %v999, %v760
    %v1027 = vsel %vm489, %v1026, -inf
    %1028 = vmax.xlane.f32.xlu0 %v1027
    %v1029 = vpop.xlane.xlu0 %1028
    %v1030 = vsub.f32 %v1026, %v1029
    %v1031 = vmul.f32 %v1030, 1.442695
    %v1032 = vpow.pop %v1031
    %v1033 = vsel %vm489, %v1032, 0.0
    %1034 = vadd.xlane.f32.xlu0 %v1033
    %v1035 = vpop.xlane.xlu0 %1034
    %v1036 = vlog2.pop %v1035
    %v1037 = vmul.f32 %v1036, 0.6931472
    %v1038 = vadd.f32 %v1029, %v1037
    %v1039 = vadd.f32 %v999, %v777
    %v1040 = vsel %vm489, %v1039, -inf
    %1041 = vmax.xlane.f32.xlu0 %v1040
    %v1042 = vpop.xlane.xlu0 %1041
    %v1043 = vsub.f32 %v1039, %v1042
    %v1044 = vmul.f32 %v1043, 1.442695
    %v1045 = vpow.pop %v1044
    %v1046 = vsel %vm489, %v1045, 0.0
    %1047 = vadd.xlane.f32.xlu0 %v1046
    %v1048 = vpop.xlane.xlu0 %1047
    %v1049 = vlog2.pop %v1048
    %v1050 = vmul.f32 %v1049, 0.6931472
    %v1051 = vadd.f32 %v1042, %v1050
    %v1052 = vadd.f32 %v999, %v794
    %v1053 = vsel %vm489, %v1052, -inf
    %1054 = vmax.xlane.f32.xlu0 %v1053
    %v1055 = vpop.xlane.xlu0 %1054
    %v1056 = vsub.f32 %v1052, %v1055
    %v1057 = vmul.f32 %v1056, 1.442695
    %v1058 = vpow.pop %v1057
    %v1059 = vsel %vm489, %v1058, 0.0
    %1060 = vadd.xlane.f32.xlu0 %v1059
    %v1061 = vpop.xlane.xlu0 %1060
    %v1062 = vlog2.pop %v1061
    %v1063 = vmul.f32 %v1062, 0.6931472
    %v1064 = vadd.f32 %v1055, %v1063
    %v1065 = vadd.f32 %v999, %v811
    %v1066 = vsel %vm489, %v1065, -inf
    %1067 = vmax.xlane.f32.xlu0 %v1066
    %v1068 = vpop.xlane.xlu0 %1067
    %v1069 = vsub.f32 %v1065, %v1068
    %v1070 = vmul.f32 %v1069, 1.442695
    %v1071 = vpow.pop %v1070
    %v1072 = vsel %vm489, %v1071, 0.0
    %1073 = vadd.xlane.f32.xlu0 %v1072
    %v1074 = vpop.xlane.xlu0 %1073
    %v1075 = vlog2.pop %v1074
    %v1076 = vmul.f32 %v1075, 0.6931472
    %v1077 = vadd.f32 %v1068, %v1076
    %v1078 = vadd.f32 %v999, %v828
    %v1079 = vsel %vm489, %v1078, -inf
    %1080 = vmax.xlane.f32.xlu0 %v1079
    %v1081 = vpop.xlane.xlu0 %1080
    %v1082 = vsub.f32 %v1078, %v1081
    %v1083 = vmul.f32 %v1082, 1.442695
    %v1084 = vpow.pop %v1083
    %v1085 = vsel %vm489, %v1084, 0.0
    %1086 = vadd.xlane.f32.xlu0 %v1085
    %v1087 = vpop.xlane.xlu0 %1086
    %v1088 = vlog2.pop %v1087
    %v1089 = vmul.f32 %v1088, 0.6931472
    %v1090 = vadd.f32 %v1081, %v1089
    %v1091 = vadd.f32 %v999, %v845
    %v1092 = vsel %vm489, %v1091, -inf
    %1093 = vmax.xlane.f32.xlu0 %v1092
    %v1094 = vpop.xlane.xlu0 %1093
    %v1095 = vsub.f32 %v1091, %v1094
    %v1096 = vmul.f32 %v1095, 1.442695
    %v1097 = vpow.pop %v1096
    %v1098 = vsel %vm489, %v1097, 0.0
    %1099 = vadd.xlane.f32.xlu0 %v1098
    %v1100 = vpop.xlane.xlu0 %1099
    %v1101 = vlog2.pop %v1100
    %v1102 = vmul.f32 %v1101, 0.6931472
    %v1103 = vadd.f32 %v1094, %v1102
    %v1104 = vsel %vm859, %v1012, %v1025
    %v1105 = vsel %vm861, %v1104, %v1038
    %v1106 = vsel %vm863, %v1105, %v1051
    %v1107 = vsel %vm865, %v1106, %v1064
    %v1108 = vsel %vm867, %v1107, %v1077
    %v1109 = vsel %vm869, %v1108, %v1090
    %v1110 = vsel %vm871, %v1109, %v1103
    %v1111 = vadd.f32 %v1110, %v221
    %vm1112 = vcmp.gt.f32.partialorder %v466, 0.0
    %v1113 = vsel %vm1112, 1, 0
    %1114 = vset.pattern.permute.xlu0 0
    %1115 = vperm.xlu0 %1114, %v1113
    %v1116 = vpop.permute.xlu0 %1115
    %vm1117 = vcmp.eq.s32.totalorder %v1116, 1
    %v1118 = vsel %vm1117, %v1111, %v999
    %v1119 = vadd.f32 %v1118, %v726
    %v1120 = vsel %vm489, %v1119, -inf
    %1121 = vmax.xlane.f32.xlu0 %v1120
    %v1122 = vpop.xlane.xlu0 %1121
    %v1123 = vsub.f32 %v1119, %v1122
    %v1124 = vmul.f32 %v1123, 1.442695
    %v1125 = vpow.pop %v1124
    %v1126 = vsel %vm489, %v1125, 0.0
    %1127 = vadd.xlane.f32.xlu0 %v1126
    %v1128 = vpop.xlane.xlu0 %1127
    %v1129 = vlog2.pop %v1128
    %v1130 = vmul.f32 %v1129, 0.6931472
    %v1131 = vadd.f32 %v1122, %v1130
    %v1132 = vadd.f32 %v1118, %v743
    %v1133 = vsel %vm489, %v1132, -inf
    %1134 = vmax.xlane.f32.xlu0 %v1133
    %v1135 = vpop.xlane.xlu0 %1134
    %v1136 = vsub.f32 %v1132, %v1135
    %v1137 = vmul.f32 %v1136, 1.442695
    %v1138 = vpow.pop %v1137
    %v1139 = vsel %vm489, %v1138, 0.0
    %1140 = vadd.xlane.f32.xlu0 %v1139
    %v1141 = vpop.xlane.xlu0 %1140
    %v1142 = vlog2.pop %v1141
    %v1143 = vmul.f32 %v1142, 0.6931472
    %v1144 = vadd.f32 %v1135, %v1143
    %v1145 = vadd.f32 %v1118, %v760
    %v1146 = vsel %vm489, %v1145, -inf
    %1147 = vmax.xlane.f32.xlu0 %v1146
    %v1148 = vpop.xlane.xlu0 %1147
    %v1149 = vsub.f32 %v1145, %v1148
    %v1150 = vmul.f32 %v1149, 1.442695
    %v1151 = vpow.pop %v1150
    %v1152 = vsel %vm489, %v1151, 0.0
    %1153 = vadd.xlane.f32.xlu0 %v1152
    %v1154 = vpop.xlane.xlu0 %1153
    %v1155 = vlog2.pop %v1154
    %v1156 = vmul.f32 %v1155, 0.6931472
    %v1157 = vadd.f32 %v1148, %v1156
    %v1158 = vadd.f32 %v1118, %v777
    %v1159 = vsel %vm489, %v1158, -inf
    %1160 = vmax.xlane.f32.xlu0 %v1159
    %v1161 = vpop.xlane.xlu0 %1160
    %v1162 = vsub.f32 %v1158, %v1161
    %v1163 = vmul.f32 %v1162, 1.442695
    %v1164 = vpow.pop %v1163
    %v1165 = vsel %vm489, %v1164, 0.0
    %1166 = vadd.xlane.f32.xlu0 %v1165
    %v1167 = vpop.xlane.xlu0 %1166
    %v1168 = vlog2.pop %v1167
    %v1169 = vmul.f32 %v1168, 0.6931472
    %v1170 = vadd.f32 %v1161, %v1169
    %v1171 = vadd.f32 %v1118, %v794
    %v1172 = vsel %vm489, %v1171, -inf
    %1173 = vmax.xlane.f32.xlu0 %v1172
    %v1174 = vpop.xlane.xlu0 %1173
    %v1175 = vsub.f32 %v1171, %v1174
    %v1176 = vmul.f32 %v1175, 1.442695
    %v1177 = vpow.pop %v1176
    %v1178 = vsel %vm489, %v1177, 0.0
    %1179 = vadd.xlane.f32.xlu0 %v1178
    %v1180 = vpop.xlane.xlu0 %1179
    %v1181 = vlog2.pop %v1180
    %v1182 = vmul.f32 %v1181, 0.6931472
    %v1183 = vadd.f32 %v1174, %v1182
    %v1184 = vadd.f32 %v1118, %v811
    %v1185 = vsel %vm489, %v1184, -inf
    %1186 = vmax.xlane.f32.xlu0 %v1185
    %v1187 = vpop.xlane.xlu0 %1186
    %v1188 = vsub.f32 %v1184, %v1187
    %v1189 = vmul.f32 %v1188, 1.442695
    %v1190 = vpow.pop %v1189
    %v1191 = vsel %vm489, %v1190, 0.0
    %1192 = vadd.xlane.f32.xlu0 %v1191
    %v1193 = vpop.xlane.xlu0 %1192
    %v1194 = vlog2.pop %v1193
    %v1195 = vmul.f32 %v1194, 0.6931472
    %v1196 = vadd.f32 %v1187, %v1195
    %v1197 = vadd.f32 %v1118, %v828
    %v1198 = vsel %vm489, %v1197, -inf
    %1199 = vmax.xlane.f32.xlu0 %v1198
    %v1200 = vpop.xlane.xlu0 %1199
    %v1201 = vsub.f32 %v1197, %v1200
    %v1202 = vmul.f32 %v1201, 1.442695
    %v1203 = vpow.pop %v1202
    %v1204 = vsel %vm489, %v1203, 0.0
    %1205 = vadd.xlane.f32.xlu0 %v1204
    %v1206 = vpop.xlane.xlu0 %1205
    %v1207 = vlog2.pop %v1206
    %v1208 = vmul.f32 %v1207, 0.6931472
    %v1209 = vadd.f32 %v1200, %v1208
    %v1210 = vadd.f32 %v1118, %v845
    %v1211 = vsel %vm489, %v1210, -inf
    %1212 = vmax.xlane.f32.xlu0 %v1211
    %v1213 = vpop.xlane.xlu0 %1212
    %v1214 = vsub.f32 %v1210, %v1213
    %v1215 = vmul.f32 %v1214, 1.442695
    %v1216 = vpow.pop %v1215
    %v1217 = vsel %vm489, %v1216, 0.0
    %1218 = vadd.xlane.f32.xlu0 %v1217
    %v1219 = vpop.xlane.xlu0 %1218
    %v1220 = vlog2.pop %v1219
    %v1221 = vmul.f32 %v1220, 0.6931472
    %v1222 = vadd.f32 %v1213, %v1221
    %v1223 = vsel %vm859, %v1131, %v1144
    %v1224 = vsel %vm861, %v1223, %v1157
    %v1225 = vsel %vm863, %v1224, %v1170
    %v1226 = vsel %vm865, %v1225, %v1183
    %v1227 = vsel %vm867, %v1226, %v1196
    %v1228 = vsel %vm869, %v1227, %v1209
    %v1229 = vsel %vm871, %v1228, %v1222
    %v1230 = vadd.f32 %v1229, %v265
    %vm1231 = vcmp.gt.f32.partialorder %v468, 0.0
    %v1232 = vsel %vm1231, 1, 0
    %1233 = vset.pattern.permute.xlu0 0
    %1234 = vperm.xlu0 %1233, %v1232
    %v1235 = vpop.permute.xlu0 %1234
    %vm1236 = vcmp.eq.s32.totalorder %v1235, 1
    %v1237 = vsel %vm1236, %v1230, %v1118
    %v1238 = vadd.f32 %v1237, %v726
    %v1239 = vsel %vm489, %v1238, -inf
    %1240 = vmax.xlane.f32.xlu0 %v1239
    %v1241 = vpop.xlane.xlu0 %1240
    %v1242 = vsub.f32 %v1238, %v1241
    %v1243 = vmul.f32 %v1242, 1.442695
    %v1244 = vpow.pop %v1243
    %v1245 = vsel %vm489, %v1244, 0.0
    %1246 = vadd.xlane.f32.xlu0 %v1245
    %v1247 = vpop.xlane.xlu0 %1246
    %v1248 = vlog2.pop %v1247
    %v1249 = vmul.f32 %v1248, 0.6931472
    %v1250 = vadd.f32 %v1241, %v1249
    %v1251 = vadd.f32 %v1237, %v743
    %v1252 = vsel %vm489, %v1251, -inf
    %1253 = vmax.xlane.f32.xlu0 %v1252
    %v1254 = vpop.xlane.xlu0 %1253
    %v1255 = vsub.f32 %v1251, %v1254
    %v1256 = vmul.f32 %v1255, 1.442695
    %v1257 = vpow.pop %v1256
    %v1258 = vsel %vm489, %v1257, 0.0
    %1259 = vadd.xlane.f32.xlu0 %v1258
    %v1260 = vpop.xlane.xlu0 %1259
    %v1261 = vlog2.pop %v1260
    %v1262 = vmul.f32 %v1261, 0.6931472
    %v1263 = vadd.f32 %v1254, %v1262
    %v1264 = vadd.f32 %v1237, %v760
    %v1265 = vsel %vm489, %v1264, -inf
    %1266 = vmax.xlane.f32.xlu0 %v1265
    %v1267 = vpop.xlane.xlu0 %1266
    %v1268 = vsub.f32 %v1264, %v1267
    %v1269 = vmul.f32 %v1268, 1.442695
    %v1270 = vpow.pop %v1269
    %v1271 = vsel %vm489, %v1270, 0.0
    %1272 = vadd.xlane.f32.xlu0 %v1271
    %v1273 = vpop.xlane.xlu0 %1272
    %v1274 = vlog2.pop %v1273
    %v1275 = vmul.f32 %v1274, 0.6931472
    %v1276 = vadd.f32 %v1267, %v1275
    %v1277 = vadd.f32 %v1237, %v777
    %v1278 = vsel %vm489, %v1277, -inf
    %1279 = vmax.xlane.f32.xlu0 %v1278
    %v1280 = vpop.xlane.xlu0 %1279
    %v1281 = vsub.f32 %v1277, %v1280
    %v1282 = vmul.f32 %v1281, 1.442695
    %v1283 = vpow.pop %v1282
    %v1284 = vsel %vm489, %v1283, 0.0
    %1285 = vadd.xlane.f32.xlu0 %v1284
    %v1286 = vpop.xlane.xlu0 %1285
    %v1287 = vlog2.pop %v1286
    %v1288 = vmul.f32 %v1287, 0.6931472
    %v1289 = vadd.f32 %v1280, %v1288
    %v1290 = vadd.f32 %v1237, %v794
    %v1291 = vsel %vm489, %v1290, -inf
    %1292 = vmax.xlane.f32.xlu0 %v1291
    %v1293 = vpop.xlane.xlu0 %1292
    %v1294 = vsub.f32 %v1290, %v1293
    %v1295 = vmul.f32 %v1294, 1.442695
    %v1296 = vpow.pop %v1295
    %v1297 = vsel %vm489, %v1296, 0.0
    %1298 = vadd.xlane.f32.xlu0 %v1297
    %v1299 = vpop.xlane.xlu0 %1298
    %v1300 = vlog2.pop %v1299
    %v1301 = vmul.f32 %v1300, 0.6931472
    %v1302 = vadd.f32 %v1293, %v1301
    %v1303 = vadd.f32 %v1237, %v811
    %v1304 = vsel %vm489, %v1303, -inf
    %1305 = vmax.xlane.f32.xlu0 %v1304
    %v1306 = vpop.xlane.xlu0 %1305
    %v1307 = vsub.f32 %v1303, %v1306
    %v1308 = vmul.f32 %v1307, 1.442695
    %v1309 = vpow.pop %v1308
    %v1310 = vsel %vm489, %v1309, 0.0
    %1311 = vadd.xlane.f32.xlu0 %v1310
    %v1312 = vpop.xlane.xlu0 %1311
    %v1313 = vlog2.pop %v1312
    %v1314 = vmul.f32 %v1313, 0.6931472
    %v1315 = vadd.f32 %v1306, %v1314
    %v1316 = vadd.f32 %v1237, %v828
    %v1317 = vsel %vm489, %v1316, -inf
    %1318 = vmax.xlane.f32.xlu0 %v1317
    %v1319 = vpop.xlane.xlu0 %1318
    %v1320 = vsub.f32 %v1316, %v1319
    %v1321 = vmul.f32 %v1320, 1.442695
    %v1322 = vpow.pop %v1321
    %v1323 = vsel %vm489, %v1322, 0.0
    %1324 = vadd.xlane.f32.xlu0 %v1323
    %v1325 = vpop.xlane.xlu0 %1324
    %v1326 = vlog2.pop %v1325
    %v1327 = vmul.f32 %v1326, 0.6931472
    %v1328 = vadd.f32 %v1319, %v1327
    %v1329 = vadd.f32 %v1237, %v845
    %v1330 = vsel %vm489, %v1329, -inf
    %1331 = vmax.xlane.f32.xlu0 %v1330
    %v1332 = vpop.xlane.xlu0 %1331
    %v1333 = vsub.f32 %v1329, %v1332
    %v1334 = vmul.f32 %v1333, 1.442695
    %v1335 = vpow.pop %v1334
    %v1336 = vsel %vm489, %v1335, 0.0
    %1337 = vadd.xlane.f32.xlu0 %v1336
    %v1338 = vpop.xlane.xlu0 %1337
    %v1339 = vlog2.pop %v1338
    %v1340 = vmul.f32 %v1339, 0.6931472
    %v1341 = vadd.f32 %v1332, %v1340
    %v1342 = vsel %vm859, %v1250, %v1263
    %v1343 = vsel %vm861, %v1342, %v1276
    %v1344 = vsel %vm863, %v1343, %v1289
    %v1345 = vsel %vm865, %v1344, %v1302
    %v1346 = vsel %vm867, %v1345, %v1315
    %v1347 = vsel %vm869, %v1346, %v1328
    %v1348 = vsel %vm871, %v1347, %v1341
    %v1349 = vadd.f32 %v1348, %v309
    %vm1350 = vcmp.gt.f32.partialorder %v470, 0.0
    %v1351 = vsel %vm1350, 1, 0
    %1352 = vset.pattern.permute.xlu0 0
    %1353 = vperm.xlu0 %1352, %v1351
    %v1354 = vpop.permute.xlu0 %1353
    %vm1355 = vcmp.eq.s32.totalorder %v1354, 1
    %v1356 = vsel %vm1355, %v1349, %v1237
    %v1357 = vadd.f32 %v1356, %v726
    %v1358 = vsel %vm489, %v1357, -inf
    %1359 = vmax.xlane.f32.xlu0 %v1358
    %v1360 = vpop.xlane.xlu0 %1359
    %v1361 = vsub.f32 %v1357, %v1360
    %v1362 = vmul.f32 %v1361, 1.442695
    %v1363 = vpow.pop %v1362
    %v1364 = vsel %vm489, %v1363, 0.0
    %1365 = vadd.xlane.f32.xlu0 %v1364
    %v1366 = vpop.xlane.xlu0 %1365
    %v1367 = vlog2.pop %v1366
    %v1368 = vmul.f32 %v1367, 0.6931472
    %v1369 = vadd.f32 %v1360, %v1368
    %v1370 = vadd.f32 %v1356, %v743
    %v1371 = vsel %vm489, %v1370, -inf
    %1372 = vmax.xlane.f32.xlu0 %v1371
    %v1373 = vpop.xlane.xlu0 %1372
    %v1374 = vsub.f32 %v1370, %v1373
    %v1375 = vmul.f32 %v1374, 1.442695
    %v1376 = vpow.pop %v1375
    %v1377 = vsel %vm489, %v1376, 0.0
    %1378 = vadd.xlane.f32.xlu0 %v1377
    %v1379 = vpop.xlane.xlu0 %1378
    %v1380 = vlog2.pop %v1379
    %v1381 = vmul.f32 %v1380, 0.6931472
    %v1382 = vadd.f32 %v1373, %v1381
    %v1383 = vadd.f32 %v1356, %v760
    %v1384 = vsel %vm489, %v1383, -inf
    %1385 = vmax.xlane.f32.xlu0 %v1384
    %v1386 = vpop.xlane.xlu0 %1385
    %v1387 = vsub.f32 %v1383, %v1386
    %v1388 = vmul.f32 %v1387, 1.442695
    %v1389 = vpow.pop %v1388
    %v1390 = vsel %vm489, %v1389, 0.0
    %1391 = vadd.xlane.f32.xlu0 %v1390
    %v1392 = vpop.xlane.xlu0 %1391
    %v1393 = vlog2.pop %v1392
    %v1394 = vmul.f32 %v1393, 0.6931472
    %v1395 = vadd.f32 %v1386, %v1394
    %v1396 = vadd.f32 %v1356, %v777
    %v1397 = vsel %vm489, %v1396, -inf
    %1398 = vmax.xlane.f32.xlu0 %v1397
    %v1399 = vpop.xlane.xlu0 %1398
    %v1400 = vsub.f32 %v1396, %v1399
    %v1401 = vmul.f32 %v1400, 1.442695
    %v1402 = vpow.pop %v1401
    %v1403 = vsel %vm489, %v1402, 0.0
    %1404 = vadd.xlane.f32.xlu0 %v1403
    %v1405 = vpop.xlane.xlu0 %1404
    %v1406 = vlog2.pop %v1405
    %v1407 = vmul.f32 %v1406, 0.6931472
    %v1408 = vadd.f32 %v1399, %v1407
    %v1409 = vadd.f32 %v1356, %v794
    %v1410 = vsel %vm489, %v1409, -inf
    %1411 = vmax.xlane.f32.xlu0 %v1410
    %v1412 = vpop.xlane.xlu0 %1411
    %v1413 = vsub.f32 %v1409, %v1412
    %v1414 = vmul.f32 %v1413, 1.442695
    %v1415 = vpow.pop %v1414
    %v1416 = vsel %vm489, %v1415, 0.0
    %1417 = vadd.xlane.f32.xlu0 %v1416
    %v1418 = vpop.xlane.xlu0 %1417
    %v1419 = vlog2.pop %v1418
    %v1420 = vmul.f32 %v1419, 0.6931472
    %v1421 = vadd.f32 %v1412, %v1420
    %v1422 = vadd.f32 %v1356, %v811
    %v1423 = vsel %vm489, %v1422, -inf
    %1424 = vmax.xlane.f32.xlu0 %v1423
    %v1425 = vpop.xlane.xlu0 %1424
    %v1426 = vsub.f32 %v1422, %v1425
    %v1427 = vmul.f32 %v1426, 1.442695
    %v1428 = vpow.pop %v1427
    %v1429 = vsel %vm489, %v1428, 0.0
    %1430 = vadd.xlane.f32.xlu0 %v1429
    %v1431 = vpop.xlane.xlu0 %1430
    %v1432 = vlog2.pop %v1431
    %v1433 = vmul.f32 %v1432, 0.6931472
    %v1434 = vadd.f32 %v1425, %v1433
    %v1435 = vadd.f32 %v1356, %v828
    %v1436 = vsel %vm489, %v1435, -inf
    %1437 = vmax.xlane.f32.xlu0 %v1436
    %v1438 = vpop.xlane.xlu0 %1437
    %v1439 = vsub.f32 %v1435, %v1438
    %v1440 = vmul.f32 %v1439, 1.442695
    %v1441 = vpow.pop %v1440
    %v1442 = vsel %vm489, %v1441, 0.0
    %1443 = vadd.xlane.f32.xlu0 %v1442
    %v1444 = vpop.xlane.xlu0 %1443
    %v1445 = vlog2.pop %v1444
    %v1446 = vmul.f32 %v1445, 0.6931472
    %v1447 = vadd.f32 %v1438, %v1446
    %v1448 = vadd.f32 %v1356, %v845
    %v1449 = vsel %vm489, %v1448, -inf
    %1450 = vmax.xlane.f32.xlu0 %v1449
    %v1451 = vpop.xlane.xlu0 %1450
    %v1452 = vsub.f32 %v1448, %v1451
    %v1453 = vmul.f32 %v1452, 1.442695
    %v1454 = vpow.pop %v1453
    %v1455 = vsel %vm489, %v1454, 0.0
    %1456 = vadd.xlane.f32.xlu0 %v1455
    %v1457 = vpop.xlane.xlu0 %1456
    %v1458 = vlog2.pop %v1457
    %v1459 = vmul.f32 %v1458, 0.6931472
    %v1460 = vadd.f32 %v1451, %v1459
    %v1461 = vsel %vm859, %v1369, %v1382
    %v1462 = vsel %vm861, %v1461, %v1395
    %v1463 = vsel %vm863, %v1462, %v1408
    %v1464 = vsel %vm865, %v1463, %v1421
    %v1465 = vsel %vm867, %v1464, %v1434
    %v1466 = vsel %vm869, %v1465, %v1447
    %v1467 = vsel %vm871, %v1466, %v1460
    %v1468 = vadd.f32 %v1467, %v353
    %vm1469 = vcmp.gt.f32.partialorder %v472, 0.0
    %v1470 = vsel %vm1469, 1, 0
    %1471 = vset.pattern.permute.xlu0 0
    %1472 = vperm.xlu0 %1471, %v1470
    %v1473 = vpop.permute.xlu0 %1472
    %vm1474 = vcmp.eq.s32.totalorder %v1473, 1
    %v1475 = vsel %vm1474, %v1468, %v1356
    %v1476 = vadd.f32 %v1475, %v726
    %v1477 = vsel %vm489, %v1476, -inf
    %1478 = vmax.xlane.f32.xlu0 %v1477
    %v1479 = vpop.xlane.xlu0 %1478
    %v1480 = vsub.f32 %v1476, %v1479
    %v1481 = vmul.f32 %v1480, 1.442695
    %v1482 = vpow.pop %v1481
    %v1483 = vsel %vm489, %v1482, 0.0
    %1484 = vadd.xlane.f32.xlu0 %v1483
    %v1485 = vpop.xlane.xlu0 %1484
    %v1486 = vlog2.pop %v1485
    %v1487 = vmul.f32 %v1486, 0.6931472
    %v1488 = vadd.f32 %v1479, %v1487
    %v1489 = vadd.f32 %v1475, %v743
    %v1490 = vsel %vm489, %v1489, -inf
    %1491 = vmax.xlane.f32.xlu0 %v1490
    %v1492 = vpop.xlane.xlu0 %1491
    %v1493 = vsub.f32 %v1489, %v1492
    %v1494 = vmul.f32 %v1493, 1.442695
    %v1495 = vpow.pop %v1494
    %v1496 = vsel %vm489, %v1495, 0.0
    %1497 = vadd.xlane.f32.xlu0 %v1496
    %v1498 = vpop.xlane.xlu0 %1497
    %v1499 = vlog2.pop %v1498
    %v1500 = vmul.f32 %v1499, 0.6931472
    %v1501 = vadd.f32 %v1492, %v1500
    %v1502 = vadd.f32 %v1475, %v760
    %v1503 = vsel %vm489, %v1502, -inf
    %1504 = vmax.xlane.f32.xlu0 %v1503
    %v1505 = vpop.xlane.xlu0 %1504
    %v1506 = vsub.f32 %v1502, %v1505
    %v1507 = vmul.f32 %v1506, 1.442695
    %v1508 = vpow.pop %v1507
    %v1509 = vsel %vm489, %v1508, 0.0
    %1510 = vadd.xlane.f32.xlu0 %v1509
    %v1511 = vpop.xlane.xlu0 %1510
    %v1512 = vlog2.pop %v1511
    %v1513 = vmul.f32 %v1512, 0.6931472
    %v1514 = vadd.f32 %v1505, %v1513
    %v1515 = vadd.f32 %v1475, %v777
    %v1516 = vsel %vm489, %v1515, -inf
    %1517 = vmax.xlane.f32.xlu0 %v1516
    %v1518 = vpop.xlane.xlu0 %1517
    %v1519 = vsub.f32 %v1515, %v1518
    %v1520 = vmul.f32 %v1519, 1.442695
    %v1521 = vpow.pop %v1520
    %v1522 = vsel %vm489, %v1521, 0.0
    %1523 = vadd.xlane.f32.xlu0 %v1522
    %v1524 = vpop.xlane.xlu0 %1523
    %v1525 = vlog2.pop %v1524
    %v1526 = vmul.f32 %v1525, 0.6931472
    %v1527 = vadd.f32 %v1518, %v1526
    %v1528 = vadd.f32 %v1475, %v794
    %v1529 = vsel %vm489, %v1528, -inf
    %1530 = vmax.xlane.f32.xlu0 %v1529
    %v1531 = vpop.xlane.xlu0 %1530
    %v1532 = vsub.f32 %v1528, %v1531
    %v1533 = vmul.f32 %v1532, 1.442695
    %v1534 = vpow.pop %v1533
    %v1535 = vsel %vm489, %v1534, 0.0
    %1536 = vadd.xlane.f32.xlu0 %v1535
    %v1537 = vpop.xlane.xlu0 %1536
    %v1538 = vlog2.pop %v1537
    %v1539 = vmul.f32 %v1538, 0.6931472
    %v1540 = vadd.f32 %v1531, %v1539
    %v1541 = vadd.f32 %v1475, %v811
    %v1542 = vsel %vm489, %v1541, -inf
    %1543 = vmax.xlane.f32.xlu0 %v1542
    %v1544 = vpop.xlane.xlu0 %1543
    %v1545 = vsub.f32 %v1541, %v1544
    %v1546 = vmul.f32 %v1545, 1.442695
    %v1547 = vpow.pop %v1546
    %v1548 = vsel %vm489, %v1547, 0.0
    %1549 = vadd.xlane.f32.xlu0 %v1548
    %v1550 = vpop.xlane.xlu0 %1549
    %v1551 = vlog2.pop %v1550
    %v1552 = vmul.f32 %v1551, 0.6931472
    %v1553 = vadd.f32 %v1544, %v1552
    %v1554 = vadd.f32 %v1475, %v828
    %v1555 = vsel %vm489, %v1554, -inf
    %1556 = vmax.xlane.f32.xlu0 %v1555
    %v1557 = vpop.xlane.xlu0 %1556
    %v1558 = vsub.f32 %v1554, %v1557
    %v1559 = vmul.f32 %v1558, 1.442695
    %v1560 = vpow.pop %v1559
    %v1561 = vsel %vm489, %v1560, 0.0
    %1562 = vadd.xlane.f32.xlu0 %v1561
    %v1563 = vpop.xlane.xlu0 %1562
    %v1564 = vlog2.pop %v1563
    %v1565 = vmul.f32 %v1564, 0.6931472
    %v1566 = vadd.f32 %v1557, %v1565
    %v1567 = vadd.f32 %v1475, %v845
    %v1568 = vsel %vm489, %v1567, -inf
    %1569 = vmax.xlane.f32.xlu0 %v1568
    %v1570 = vpop.xlane.xlu0 %1569
    %v1571 = vsub.f32 %v1567, %v1570
    %v1572 = vmul.f32 %v1571, 1.442695
    %v1573 = vpow.pop %v1572
    %v1574 = vsel %vm489, %v1573, 0.0
    %1575 = vadd.xlane.f32.xlu0 %v1574
    %v1576 = vpop.xlane.xlu0 %1575
    %v1577 = vlog2.pop %v1576
    %v1578 = vmul.f32 %v1577, 0.6931472
    %v1579 = vadd.f32 %v1570, %v1578
    %v1580 = vsel %vm859, %v1488, %v1501
    %v1581 = vsel %vm861, %v1580, %v1514
    %v1582 = vsel %vm863, %v1581, %v1527
    %v1583 = vsel %vm865, %v1582, %v1540
    %v1584 = vsel %vm867, %v1583, %v1553
    %v1585 = vsel %vm869, %v1584, %v1566
    %v1586 = vsel %vm871, %v1585, %v1579
    %v1587 = vadd.f32 %v1586, %v397
    %vm1588 = vcmp.gt.f32.partialorder %v474, 0.0
    %v1589 = vsel %vm1588, 1, 0
    %1590 = vset.pattern.permute.xlu0 0
    %1591 = vperm.xlu0 %1590, %v1589
    %v1592 = vpop.permute.xlu0 %1591
    %vm1593 = vcmp.eq.s32.totalorder %v1592, 1
    %v1594 = vsel %vm1593, %v1587, %v1475
    %v1595 = vadd.f32 %v1594, %v502
    %v1596 = vsel %vm489, %v1595, -inf
    %1597 = vmax.xlane.f32.xlu0 %v1596
    %v1598 = vpop.xlane.xlu0 %1597
    %v1599 = vsub.f32 %v1595, %v1598
    %v1600 = vmul.f32 %v1599, 1.442695
    %v1601 = vpow.pop %v1600
    %v1602 = vsel %vm489, %v1601, 0.0
    %1603 = vadd.xlane.f32.xlu0 %v1602
    %v1604 = vpop.xlane.xlu0 %1603
    %v1605 = vlog2.pop %v1604
    %v1606 = vmul.f32 %v1605, 0.6931472
    %v1607 = vadd.f32 %v1598, %v1606
    %v1608 = vsub.f32 %v508, %v1607
    %v1609 = vmul.f32 %v1608, %v41
    %v1610 = vadd.f32 %v1609, 0.0
    %vm1611 = vcmask 1024
    %v1612 = vsel %vm1611, %v1610, 0.0
    %v1613 = vrot.slane %v1612, 4
    %v1614 = vadd.f32 %v1612, %v1613
    %v1615 = vrot.slane %v1614, 2
    %v1616 = vadd.f32 %v1614, %v1615
    %v1617 = vrot.slane %v1616, 1
    %v1618 = vadd.f32 %v1616, %v1617
    %v1619 = vadd.f32 %v550, 0.0
    %v1620 = vsel %vm1611, %v1619, 0.0
    %v1621 = vrot.slane %v1620, 4
    %v1622 = vadd.f32 %v1620, %v1621
    %v1623 = vrot.slane %v1622, 2
    %v1624 = vadd.f32 %v1622, %v1623
    %v1625 = vrot.slane %v1624, 1
    %v1626 = vadd.f32 %v1624, %v1625
    %v1627 = vadd.f32 %v1618, %v1626
    %v1628 = vadd.f32 %v1627, %v721
    %vm1629 = vcmask 0
    %1630 = vst.msk [vmem:[#allocation4] sm:$0x1] %vm1629, %v1628
    // Predicated region
    $region34: #{tpu_custom_call.1} parent=1 // pred_check
      _
    $region35: #{tpu_custom_call.1} parent=1 // pred_check_branch
      %1632 = sbr.rel (0) target = $region37
    $region36: #{tpu_custom_call.1} parent=1 // pred_region
      %s1634 = ssub.s32 16, 16
      %1635 = vsyncadd [#allocation5], %s1634
      %s1637 = sshll.u32 [#allocation4], 4
      %s1638 = int_to_ptr.vmem [resolvable:$true] %s1637
      %1640 = dma.vmem_to_hbm [thread:$0]  %s1638, 16, %s9, [#allocation5]
    $region37: #{tpu_custom_call.1} parent=1 // pred_fallthru
      _
    // Predicated region
    $region38: #{tpu_custom_call.1} parent=1 // pred_check
      _
    $region39: #{tpu_custom_call.1} parent=1 // pred_check_branch
      %1642 = sbr.rel (0) target = $region41
    $region40: #{tpu_custom_call.1} parent=1 // pred_region
      %1643 = dma.done [#allocation5], 16
    $region41: #{tpu_custom_call.1} parent=1 // pred_fallthru
      _
    %1644 = vsyncpa [#allocation5], 1

</llo_original>
